<compile_context>
chip_gen: v5e
topology: v5e:2x2
jax: 0.10.0
libtpu: 0.0.40
codegen_flags: <defaults>
</compile_context>

<pallas_src>
import jax
import jax.numpy as jnp
from jax.experimental import pallas as pl
from jax.experimental.pallas import tpu as pltpu


# ---------------------------------------------------------------------------
# Kernel 1: attention + embedding gather + LSTMCell step (one batch block)
# ---------------------------------------------------------------------------
def decoder_step_kernel(
    # scalar prefetch
    word_ref,     # (B,) int32 in SMEM (full batch)
    # inputs
    enc_ref,      # (Bblk, P, E) f32
    h_ref,        # (Bblk, D)    f32
    c_ref,        # (Bblk, D)    f32
    wea_ref,      # (E, A)  bf16
    bea_ref,      # (1, A)  f32
    wda_ref,      # (D, A)  bf16
    bda_ref,      # (1, A)  f32
    wfa_ref,      # (1, A)  f32   full_att weight as a row vector
    bfa_ref,      # (1, 1)  f32
    emb_hbm,      # (V, EMB) f32 embedding table, stays in HBM (pl.ANY)
    whh_ref,      # (D,   4D) bf16
    wawe_ref,     # (E,   4D) bf16
    wemb_ref,     # (EMB, 4D) bf16
    bg_ref,       # (1,   4D) f32  (b_ih + b_hh)
    # outputs
    h_out_ref,    # (Bblk, D)
    c_out_ref,    # (Bblk, D)
    alpha_ref,    # (Bblk, P)
    # scratch
    emb_buf,      # VMEM (Bblk, EMB) f32
    emb_sem,      # DMA semaphores (Bblk,)
):
    f32 = jnp.float32
    bf16 = jnp.bfloat16
    Bblk, P, E = enc_ref.shape
    D = h_ref.shape[1]
    base = pl.program_id(0) * Bblk

    # ---- embedding gather: Bblk small row DMAs, overlapped with the
    # attention compute and the first two gate matmuls below ----
    def _emb_copy(b):
        return pltpu.make_async_copy(
            emb_hbm.at[word_ref[base + b]], emb_buf.at[b], emb_sem.at[b])

    for b in range(Bblk):
        _emb_copy(b).start()

    enc = enc_ref[...]            # (Bblk, P, E) f32
    h = h_ref[...]                # (Bblk, D)    f32
    c = c_ref[...]                # (Bblk, D)    f32
    h_b = h.astype(bf16)

    # ---- Attention ----
    # Flatten to a single (Bblk*P, E) @ (E, A) bf16 matmul, f32 accumulate.
    att1 = (jnp.dot(enc.reshape(Bblk * P, E).astype(bf16), wea_ref[...],
                    preferred_element_type=f32)
            + bea_ref[...]).reshape(Bblk, P, -1)
    att2 = jnp.dot(h_b, wda_ref[...], preferred_element_type=f32) + bda_ref[...]
    e_act = jnp.maximum(att1 + att2[:, None, :], 0.0)            # ReLU, (Bblk,P,A)
    # full_att (output width 1): VPU multiply + lane reduce (no N=1 matmul).
    att = jnp.sum(e_act * wfa_ref[...][None, :, :], axis=-1) + bfa_ref[...]  # (Bblk,P)

    # softmax over the pixel axis (PyTorch dim=1); reciprocal on the EUP slot.
    att_max = jnp.max(att, axis=1, keepdims=True)
    att_exp = jnp.exp(att - att_max)
    denom = jnp.sum(att_exp, axis=1, keepdims=True)
    alpha = att_exp * pl.reciprocal(denom, approx=True)           # (Bblk, P)
    alpha_ref[...] = alpha

    # attention-weighted encoding (kept f32; at production P*E move this
    # reduction onto the MXU if the VALU becomes the binding slot).
    awe = jnp.sum(enc * alpha[:, :, None], axis=1)                # (Bblk, E)

    # ---- LSTMCell gates as three accumulating matmuls (order i,f,g,o) ----
    # h / awe partial products issue to the MXU while the embedding DMAs fly.
    gates = jnp.dot(h_b, whh_ref[...], preferred_element_type=f32) + bg_ref[...]
    gates = gates + jnp.dot(awe.astype(bf16), wawe_ref[...],
                            preferred_element_type=f32)

    # Only the last (emb) matmul waits on the gather.
    for b in range(Bblk):
        _emb_copy(b).wait()
    emb = emb_buf[...]                                            # (Bblk, EMB)
    gates = gates + jnp.dot(emb.astype(bf16), wemb_ref[...],
                            preferred_element_type=f32)

    i_g = jax.nn.sigmoid(gates[:, 0 * D:1 * D])
    f_g = jax.nn.sigmoid(gates[:, 1 * D:2 * D])
    g_g = jnp.tanh(gates[:, 2 * D:3 * D])
    o_g = jax.nn.sigmoid(gates[:, 3 * D:4 * D])
    c_new = f_g * c + i_g * g_g
    h_new = o_g * jnp.tanh(c_new)
    h_out_ref[...] = h_new
    c_out_ref[...] = c_new


# ---------------------------------------------------------------------------
# Kernel 2: vocab projection (fc head), lane-dense tiles, parallel over V
# ---------------------------------------------------------------------------
def fc_head_kernel(h_ref, wfc_ref, bfc_ref, scores_ref):
    # TODO(synk): nn.Dropout(p=0.5) is stochastic in training mode; eval-mode
    # (identity) semantics are implemented here.
    scores_ref[...] = (jnp.dot(h_ref[...].astype(wfc_ref.dtype), wfc_ref[...],
                               preferred_element_type=jnp.float32)
                       + bfc_ref[...])


# ---------------------------------------------------------------------------
# One-time parameter preparation (NOT per decode step)
# ---------------------------------------------------------------------------
def prepare_params(raw, *, tile_v=512, weight_dtype=jnp.bfloat16):
    """Cast streamed weights to bf16, pre-fuse the gate bias, pad wfc/bfc once."""
    assert tile_v % 128 == 0, "tile_v must be a multiple of 128 (lane width)"
    V = raw['wfc'].shape[1]
    v_pad = pl.cdiv(V, tile_v) * tile_v
    wfc, bfc = raw['wfc'], raw['bfc']
    if v_pad != V:                      # hoisted out of the per-step forward
        wfc = jnp.pad(wfc, ((0, 0), (0, v_pad - V)))
        bfc = jnp.pad(bfc, ((0, 0), (0, v_pad - V)))
    return {
        'wea': raw['wea'].astype(weight_dtype),
        'bea': raw['bea'],
        'wda': raw['wda'].astype(weight_dtype),
        'bda': raw['bda'],
        'wfa_row': raw['wfa'].T,        # (1, A), tiny -> keep f32
        'bfa': raw['bfa'],
        'emb': raw['emb'],              # f32: row-gathered via DMA (see header)
        'w_hh': raw['whh'].astype(weight_dtype),
        'w_awe': raw['wih_awe'].astype(weight_dtype),
        'w_emb': raw['wih_emb'].astype(weight_dtype),
        'b_gates': raw['bih'] + raw['bhh'],
        'wfc': wfc.astype(weight_dtype),
        'bfc': bfc,
        'vocab_size': V,
        'tile_v': tile_v,
    }


# ---------------------------------------------------------------------------
# Forward wrapper
# ---------------------------------------------------------------------------
def decoder_with_attention_forward(word, encoder_out, h, c, params, *,
                                   batch_block=8):
    B, P, E = encoder_out.shape
    D = h.shape[1]
    EMB = params['emb'].shape[1]
    A = params['wea'].shape[1]
    V = params['vocab_size']
    tile_v = params['tile_v']
    v_pad = params['wfc'].shape[1]

    if B % batch_block != 0 or (batch_block % 8 != 0 and batch_block != B):
        batch_block = B                 # fall back to one block
    n_b = B // batch_block

    word = word.astype(jnp.int32)

    # -------- kernel 1: attention + embedding gather + LSTM cell --------
    step_inputs = (
        encoder_out, h, c,
        params['wea'], params['bea'], params['wda'], params['bda'],
        params['wfa_row'], params['bfa'],
        params['emb'],
        params['w_hh'], params['w_awe'], params['w_emb'], params['b_gates'],
    )

    def const_spec(x):                  # weights: same block for every step
        nd = x.ndim
        return pl.BlockSpec(x.shape, lambda i, w, _nd=nd: (0,) * _nd)

    in_specs = (
        [pl.BlockSpec((batch_block, P, E), lambda i, w: (i, 0, 0)),   # enc
         pl.BlockSpec((batch_block, D), lambda i, w: (i, 0)),         # h
         pl.BlockSpec((batch_block, D), lambda i, w: (i, 0))]         # c
        + [const_spec(x) for x in step_inputs[3:9]]                   # attn params
        + [pl.BlockSpec(memory_space=pl.ANY)]                         # emb table (HBM)
        + [const_spec(x) for x in step_inputs[10:]]                   # gate params
    )

    out_specs = [
        pl.BlockSpec((batch_block, D), lambda i, w: (i, 0)),
        pl.BlockSpec((batch_block, D), lambda i, w: (i, 0)),
        pl.BlockSpec((batch_block, P), lambda i, w: (i, 0)),
    ]
    out_shape = (
        jax.ShapeDtypeStruct((B, D), jnp.float32),    # new hidden state
        jax.ShapeDtypeStruct((B, D), jnp.float32),    # new cell state
        jax.ShapeDtypeStruct((B, P), jnp.float32),    # alpha
    )

    step_fn = pl.pallas_call(
        decoder_step_kernel,
        out_shape=out_shape,
        grid_spec=pltpu.PrefetchScalarGridSpec(
            num_scalar_prefetch=1,
            grid=(n_b,),
            in_specs=in_specs,
            out_specs=out_specs,
            scratch_shapes=[
                pltpu.VMEM((batch_block, EMB), params['emb'].dtype),
                pltpu.SemaphoreType.DMA((batch_block,)),
            ],
        ),
        compiler_params=pltpu.CompilerParams(
            # Batch-block axis is embarrassingly parallel -> dual-TC on v7x.
            dimension_semantics=("parallel",),
            vmem_limit_bytes=32 * 1024 * 1024,
        ),
    )
    h_new, c_new, alpha = step_fn(word, *step_inputs)

    # -------- kernel 2: fc head streamed over V in lane-dense tiles --------
    n_v = v_pad // tile_v
    fc_fn = pl.pallas_call(
        fc_head_kernel,
        out_shape=jax.ShapeDtypeStruct((B, v_pad), jnp.float32),
        grid=(n_v,),
        in_specs=[
            pl.BlockSpec((B, D), lambda j: (0, 0)),
            pl.BlockSpec((D, tile_v), lambda j: (0, j)),
            pl.BlockSpec((1, tile_v), lambda j: (0, j)),
        ],
        out_specs=pl.BlockSpec((B, tile_v), lambda j: (0, j)),
        compiler_params=pltpu.CompilerParams(
            dimension_semantics=("parallel",),
            vmem_limit_bytes=48 * 1024 * 1024,
        ),
    )
    scores = fc_fn(h_new, params['wfc'], params['bfc'])
    if v_pad != V:
        scores = scores[:, :V]

    return scores, h_new, c_new, alpha


# ---------------------------------------------------------------------------
# Plain-JAX reference (mirrors the PyTorch forward, eval mode, f32 math with
# the same bf16-rounded weights)
# ---------------------------------------------------------------------------
def reference_forward(word, encoder_out, h, c, params):
    up = lambda x: x.astype(jnp.float32)
    V = params['vocab_size']
    D = h.shape[1]
    with jax.default_matmul_precision('float32'):
        emb = params['emb'][word]
        att1 = jnp.einsum('bpe,ea->bpa', encoder_out, up(params['wea'])) + params['bea']
        att2 = h @ up(params['wda']) + params['bda']
        e_act = jax.nn.relu(att1 + att2[:, None, :])
        att = jnp.sum(e_act * params['wfa_row'][None, :, :], axis=-1) + params['bfa']
        alpha = jax.nn.softmax(att, axis=1)
        awe = jnp.sum(encoder_out * alpha[:, :, None], axis=1)
        gates = (emb @ up(params['w_emb']) + awe @ up(params['w_awe'])
                 + h @ up(params['w_hh']) + params['b_gates'])
        i_g = jax.nn.sigmoid(gates[:, :D])
        f_g = jax.nn.sigmoid(gates[:, D:2 * D])
        g_g = jnp.tanh(gates[:, 2 * D:3 * D])
        o_g = jax.nn.sigmoid(gates[:, 3 * D:])
        c_new = f_g * c + i_g * g_g
        h_new = o_g * jnp.tanh(c_new)
        scores = h_new @ up(params['wfc'])[:, :V] + params['bfc'][:, :V]
    return scores, h_new, c_new, alpha


if __name__ == "__main__":
    # Small, hardware-tile-friendly sizes consistent with the module
    # (A/E/D 256-aligned for the v6e/v7x 256x256 MXU; batch 16 -> 2 parallel
    # batch blocks of 8; V deliberately not a tile multiple to exercise the
    # hoisted padding path).
    B, P = 16, 16               # batch, num_pixels
    E, D, A = 256, 256, 256     # encoder_dim, decoder_dim, attention_dim
    EMB, V = 128, 1000          # embed_dim, vocab_size
    TILE_V = 512

    key = jax.random.PRNGKey(0)
    ks = jax.random.split(key, 20)

    def u(k, shape, scale=0.1):
        return jax.random.uniform(k, shape, jnp.float32, -scale, scale)

    # Raw (already-transposed, x @ W + b convention) PyTorch-equivalent params.
    raw = dict(
        wea=u(ks[0], (E, A)),   bea=u(ks[1], (1, A)),
        wda=u(ks[2], (D, A)),   bda=u(ks[3], (1, A)),
        wfa=u(ks[4], (A, 1)),   bfa=u(ks[5], (1, 1)),
        emb=u(ks[6], (V, EMB), 0.5),
        wih_emb=u(ks[7], (EMB, 4 * D)),
        wih_awe=u(ks[8], (E, 4 * D)),
        bih=u(ks[9], (1, 4 * D)),
        whh=u(ks[10], (D, 4 * D)),
        bhh=u(ks[11], (1, 4 * D)),
        wfc=u(ks[12], (D, V)),
        bfc=jnp.zeros((1, V), jnp.float32),   # init_weights(): fc bias = 0
    )
    params = prepare_params(raw, tile_v=TILE_V)

    word = jax.random.randint(ks[13], (B,), 0, V)
    encoder_out = jax.random.normal(ks[14], (B, P, E), jnp.float32)
    h0 = 0.5 * jax.random.normal(ks[15], (B, D), jnp.float32)
    c0 = 0.5 * jax.random.normal(ks[16], (B, D), jnp.float32)

    outs = decoder_with_attention_forward(word, encoder_out, h0, c0, params)
    outs = jax.block_until_ready(outs)
    refs = reference_forward(word, encoder_out, h0, c0, params)

    # Tolerances account for bf16-cast activations at the MXU dots (weights are
    # bf16-rounded identically in kernel and reference; accumulation is f32).
    tols = {"scores": 6e-2, "h_new": 3e-2, "c_new": 3e-2, "alpha": 1e-2}
    for name, o, r in zip(("scores", "h_new", "c_new", "alpha"), outs, refs):
        assert o.shape == r.shape and o.dtype == r.dtype, f"{name} shape/dtype mismatch"
        max_err = float(jnp.max(jnp.abs(o - r)))
        assert jnp.allclose(o, r, atol=tols[name], rtol=3e-2), (
            f"{name} mismatch vs reference (max abs err {max_err:.3e})")

    print("KERNEL_OK")
</pallas_src>

<mosaic_0001>
module attributes {stable_mosaic.version = 11 : i64} {
  func.func @decoder_step_kernel(%arg0: i32, %arg1: memref<16xi32, #tpu.memory_space<smem>>, %arg2: memref<8x16x256xf32, #tpu.memory_space<vmem>>, %arg3: memref<8x256xf32, #tpu.memory_space<vmem>>, %arg4: memref<8x256xf32, #tpu.memory_space<vmem>>, %arg5: memref<256x256xbf16, #tpu.memory_space<vmem>>, %arg6: memref<1x256xf32, #tpu.memory_space<vmem>>, %arg7: memref<256x256xbf16, #tpu.memory_space<vmem>>, %arg8: memref<1x256xf32, #tpu.memory_space<vmem>>, %arg9: memref<1x256xf32, #tpu.memory_space<vmem>>, %arg10: memref<1x1xf32, #tpu.memory_space<vmem>>, %arg11: memref<1000x128xf32, #tpu.memory_space<any>>, %arg12: memref<256x1024xbf16, #tpu.memory_space<vmem>>, %arg13: memref<256x1024xbf16, #tpu.memory_space<vmem>>, %arg14: memref<128x1024xbf16, #tpu.memory_space<vmem>>, %arg15: memref<1x1024xf32, #tpu.memory_space<vmem>>, %arg16: memref<8x256xf32, #tpu.memory_space<vmem>>, %arg17: memref<8x256xf32, #tpu.memory_space<vmem>>, %arg18: memref<8x16xf32, #tpu.memory_space<vmem>>, %arg19: memref<8x128xf32, #tpu.memory_space<vmem>>, %arg20: memref<8x!tpu.dma_semaphore, #tpu.memory_space<semaphore_mem>>) attributes {dimension_semantics = [#tpu.dimension_semantics<parallel>], iteration_bounds = array<i64: 2>, scalar_prefetch = 1 : i64, scratch_operands = 2 : i64, tpu.core_type = #tpu.core_type<tc>, window_params = [{transform_indices = @transform_0, window_bounds = array<i64: 8, 16, 256>}, {transform_indices = @transform_1, window_bounds = array<i64: 8, 256>}, {transform_indices = @transform_2, window_bounds = array<i64: 8, 256>}, {pipeline_mode = #tpu.pipeline_mode<synchronous>, transform_indices = @transform_3, window_bounds = array<i64: 256, 256>}, {pipeline_mode = #tpu.pipeline_mode<synchronous>, transform_indices = @transform_4, window_bounds = array<i64: 1, 256>}, {pipeline_mode = #tpu.pipeline_mode<synchronous>, transform_indices = @transform_5, window_bounds = array<i64: 256, 256>}, {pipeline_mode = #tpu.pipeline_mode<synchronous>, transform_indices = @transform_6, window_bounds = array<i64: 1, 256>}, {pipeline_mode = #tpu.pipeline_mode<synchronous>, transform_indices = @transform_7, window_bounds = array<i64: 1, 256>}, {pipeline_mode = #tpu.pipeline_mode<synchronous>, transform_indices = @transform_8, window_bounds = array<i64: 1, 1>}, {}, {pipeline_mode = #tpu.pipeline_mode<synchronous>, transform_indices = @transform_10, window_bounds = array<i64: 256, 1024>}, {pipeline_mode = #tpu.pipeline_mode<synchronous>, transform_indices = @transform_11, window_bounds = array<i64: 256, 1024>}, {pipeline_mode = #tpu.pipeline_mode<synchronous>, transform_indices = @transform_12, window_bounds = array<i64: 128, 1024>}, {pipeline_mode = #tpu.pipeline_mode<synchronous>, transform_indices = @transform_13, window_bounds = array<i64: 1, 1024>}, {transform_indices = @transform_14, window_bounds = array<i64: 8, 256>}, {transform_indices = @transform_15, window_bounds = array<i64: 8, 256>}, {transform_indices = @transform_16, window_bounds = array<i64: 8, 16>}]} {
    %c8_i32 = arith.constant 8 : i32
    %0 = arith.muli %arg0, %c8_i32 : i32
    %c0_i32 = arith.constant 0 : i32
    %1 = arith.addi %0, %c0_i32 : i32
    %2 = arith.index_cast %1 : i32 to index
    %3 = memref.load %arg1[%2] : memref<16xi32, #tpu.memory_space<smem>>
    %c0_i32_0 = arith.constant 0 : i32
    %c0_i32_1 = arith.constant 0 : i32
    %c0_i32_2 = arith.constant 0 : i32
    %4 = tpu.memref_slice %arg11[%3, %c0_i32_2] : memref<1000x128xf32, #tpu.memory_space<any>> -> memref<1x128xf32, #tpu.memory_space<any>>
    %5 = tpu.memref_squeeze %4 : memref<1x128xf32, #tpu.memory_space<any>> -> memref<128xf32, #tpu.memory_space<any>>
    %c0_i32_3 = arith.constant 0 : i32
    %6 = tpu.memref_slice %arg19[%c0_i32_0, %c0_i32_3] : memref<8x128xf32, #tpu.memory_space<vmem>> -> memref<1x128xf32, #tpu.memory_space<vmem>>
    %7 = tpu.memref_squeeze %6 : memref<1x128xf32, #tpu.memory_space<vmem>> -> memref<128xf32, #tpu.memory_space<vmem>>
    %8 = tpu.memref_slice %arg20[%c0_i32_1] : memref<8x!tpu.dma_semaphore, #tpu.memory_space<semaphore_mem>> -> memref<1x!tpu.dma_semaphore, #tpu.memory_space<semaphore_mem>>
    %9 = tpu.memref_squeeze %8 : memref<1x!tpu.dma_semaphore, #tpu.memory_space<semaphore_mem>> -> memref<!tpu.dma_semaphore, #tpu.memory_space<semaphore_mem>>
    tpu.enqueue_dma source(%5 : memref<128xf32, #tpu.memory_space<any>>) target(%7 : memref<128xf32, #tpu.memory_space<vmem>>) target_semaphore(%9 : memref<!tpu.dma_semaphore, #tpu.memory_space<semaphore_mem>>)
    %c1_i32 = arith.constant 1 : i32
    %10 = arith.addi %0, %c1_i32 : i32
    %11 = arith.index_cast %10 : i32 to index
    %12 = memref.load %arg1[%11] : memref<16xi32, #tpu.memory_space<smem>>
    %c1_i32_4 = arith.constant 1 : i32
    %c1_i32_5 = arith.constant 1 : i32
    %c0_i32_6 = arith.constant 0 : i32
    %13 = tpu.memref_slice %arg11[%12, %c0_i32_6] : memref<1000x128xf32, #tpu.memory_space<any>> -> memref<1x128xf32, #tpu.memory_space<any>>
    %14 = tpu.memref_squeeze %13 : memref<1x128xf32, #tpu.memory_space<any>> -> memref<128xf32, #tpu.memory_space<any>>
    %c0_i32_7 = arith.constant 0 : i32
    %15 = tpu.memref_slice %arg19[%c1_i32_4, %c0_i32_7] : memref<8x128xf32, #tpu.memory_space<vmem>> -> memref<1x128xf32, #tpu.memory_space<vmem>>
    %16 = tpu.memref_squeeze %15 : memref<1x128xf32, #tpu.memory_space<vmem>> -> memref<128xf32, #tpu.memory_space<vmem>>
    %17 = tpu.memref_slice %arg20[%c1_i32_5] : memref<8x!tpu.dma_semaphore, #tpu.memory_space<semaphore_mem>> -> memref<1x!tpu.dma_semaphore, #tpu.memory_space<semaphore_mem>>
    %18 = tpu.memref_squeeze %17 : memref<1x!tpu.dma_semaphore, #tpu.memory_space<semaphore_mem>> -> memref<!tpu.dma_semaphore, #tpu.memory_space<semaphore_mem>>
    tpu.enqueue_dma source(%14 : memref<128xf32, #tpu.memory_space<any>>) target(%16 : memref<128xf32, #tpu.memory_space<vmem>>) target_semaphore(%18 : memref<!tpu.dma_semaphore, #tpu.memory_space<semaphore_mem>>)
    %c2_i32 = arith.constant 2 : i32
    %19 = arith.addi %0, %c2_i32 : i32
    %20 = arith.index_cast %19 : i32 to index
    %21 = memref.load %arg1[%20] : memref<16xi32, #tpu.memory_space<smem>>
    %c2_i32_8 = arith.constant 2 : i32
    %c2_i32_9 = arith.constant 2 : i32
    %c0_i32_10 = arith.constant 0 : i32
    %22 = tpu.memref_slice %arg11[%21, %c0_i32_10] : memref<1000x128xf32, #tpu.memory_space<any>> -> memref<1x128xf32, #tpu.memory_space<any>>
    %23 = tpu.memref_squeeze %22 : memref<1x128xf32, #tpu.memory_space<any>> -> memref<128xf32, #tpu.memory_space<any>>
    %c0_i32_11 = arith.constant 0 : i32
    %24 = tpu.memref_slice %arg19[%c2_i32_8, %c0_i32_11] : memref<8x128xf32, #tpu.memory_space<vmem>> -> memref<1x128xf32, #tpu.memory_space<vmem>>
    %25 = tpu.memref_squeeze %24 : memref<1x128xf32, #tpu.memory_space<vmem>> -> memref<128xf32, #tpu.memory_space<vmem>>
    %26 = tpu.memref_slice %arg20[%c2_i32_9] : memref<8x!tpu.dma_semaphore, #tpu.memory_space<semaphore_mem>> -> memref<1x!tpu.dma_semaphore, #tpu.memory_space<semaphore_mem>>
    %27 = tpu.memref_squeeze %26 : memref<1x!tpu.dma_semaphore, #tpu.memory_space<semaphore_mem>> -> memref<!tpu.dma_semaphore, #tpu.memory_space<semaphore_mem>>
    tpu.enqueue_dma source(%23 : memref<128xf32, #tpu.memory_space<any>>) target(%25 : memref<128xf32, #tpu.memory_space<vmem>>) target_semaphore(%27 : memref<!tpu.dma_semaphore, #tpu.memory_space<semaphore_mem>>)
    %c3_i32 = arith.constant 3 : i32
    %28 = arith.addi %0, %c3_i32 : i32
    %29 = arith.index_cast %28 : i32 to index
    %30 = memref.load %arg1[%29] : memref<16xi32, #tpu.memory_space<smem>>
    %c3_i32_12 = arith.constant 3 : i32
    %c3_i32_13 = arith.constant 3 : i32
    %c0_i32_14 = arith.constant 0 : i32
    %31 = tpu.memref_slice %arg11[%30, %c0_i32_14] : memref<1000x128xf32, #tpu.memory_space<any>> -> memref<1x128xf32, #tpu.memory_space<any>>
    %32 = tpu.memref_squeeze %31 : memref<1x128xf32, #tpu.memory_space<any>> -> memref<128xf32, #tpu.memory_space<any>>
    %c0_i32_15 = arith.constant 0 : i32
    %33 = tpu.memref_slice %arg19[%c3_i32_12, %c0_i32_15] : memref<8x128xf32, #tpu.memory_space<vmem>> -> memref<1x128xf32, #tpu.memory_space<vmem>>
    %34 = tpu.memref_squeeze %33 : memref<1x128xf32, #tpu.memory_space<vmem>> -> memref<128xf32, #tpu.memory_space<vmem>>
    %35 = tpu.memref_slice %arg20[%c3_i32_13] : memref<8x!tpu.dma_semaphore, #tpu.memory_space<semaphore_mem>> -> memref<1x!tpu.dma_semaphore, #tpu.memory_space<semaphore_mem>>
    %36 = tpu.memref_squeeze %35 : memref<1x!tpu.dma_semaphore, #tpu.memory_space<semaphore_mem>> -> memref<!tpu.dma_semaphore, #tpu.memory_space<semaphore_mem>>
    tpu.enqueue_dma source(%32 : memref<128xf32, #tpu.memory_space<any>>) target(%34 : memref<128xf32, #tpu.memory_space<vmem>>) target_semaphore(%36 : memref<!tpu.dma_semaphore, #tpu.memory_space<semaphore_mem>>)
    %c4_i32 = arith.constant 4 : i32
    %37 = arith.addi %0, %c4_i32 : i32
    %38 = arith.index_cast %37 : i32 to index
    %39 = memref.load %arg1[%38] : memref<16xi32, #tpu.memory_space<smem>>
    %c4_i32_16 = arith.constant 4 : i32
    %c4_i32_17 = arith.constant 4 : i32
    %c0_i32_18 = arith.constant 0 : i32
    %40 = tpu.memref_slice %arg11[%39, %c0_i32_18] : memref<1000x128xf32, #tpu.memory_space<any>> -> memref<1x128xf32, #tpu.memory_space<any>>
    %41 = tpu.memref_squeeze %40 : memref<1x128xf32, #tpu.memory_space<any>> -> memref<128xf32, #tpu.memory_space<any>>
    %c0_i32_19 = arith.constant 0 : i32
    %42 = tpu.memref_slice %arg19[%c4_i32_16, %c0_i32_19] : memref<8x128xf32, #tpu.memory_space<vmem>> -> memref<1x128xf32, #tpu.memory_space<vmem>>
    %43 = tpu.memref_squeeze %42 : memref<1x128xf32, #tpu.memory_space<vmem>> -> memref<128xf32, #tpu.memory_space<vmem>>
    %44 = tpu.memref_slice %arg20[%c4_i32_17] : memref<8x!tpu.dma_semaphore, #tpu.memory_space<semaphore_mem>> -> memref<1x!tpu.dma_semaphore, #tpu.memory_space<semaphore_mem>>
    %45 = tpu.memref_squeeze %44 : memref<1x!tpu.dma_semaphore, #tpu.memory_space<semaphore_mem>> -> memref<!tpu.dma_semaphore, #tpu.memory_space<semaphore_mem>>
    tpu.enqueue_dma source(%41 : memref<128xf32, #tpu.memory_space<any>>) target(%43 : memref<128xf32, #tpu.memory_space<vmem>>) target_semaphore(%45 : memref<!tpu.dma_semaphore, #tpu.memory_space<semaphore_mem>>)
    %c5_i32 = arith.constant 5 : i32
    %46 = arith.addi %0, %c5_i32 : i32
    %47 = arith.index_cast %46 : i32 to index
    %48 = memref.load %arg1[%47] : memref<16xi32, #tpu.memory_space<smem>>
    %c5_i32_20 = arith.constant 5 : i32
    %c5_i32_21 = arith.constant 5 : i32
    %c0_i32_22 = arith.constant 0 : i32
    %49 = tpu.memref_slice %arg11[%48, %c0_i32_22] : memref<1000x128xf32, #tpu.memory_space<any>> -> memref<1x128xf32, #tpu.memory_space<any>>
    %50 = tpu.memref_squeeze %49 : memref<1x128xf32, #tpu.memory_space<any>> -> memref<128xf32, #tpu.memory_space<any>>
    %c0_i32_23 = arith.constant 0 : i32
    %51 = tpu.memref_slice %arg19[%c5_i32_20, %c0_i32_23] : memref<8x128xf32, #tpu.memory_space<vmem>> -> memref<1x128xf32, #tpu.memory_space<vmem>>
    %52 = tpu.memref_squeeze %51 : memref<1x128xf32, #tpu.memory_space<vmem>> -> memref<128xf32, #tpu.memory_space<vmem>>
    %53 = tpu.memref_slice %arg20[%c5_i32_21] : memref<8x!tpu.dma_semaphore, #tpu.memory_space<semaphore_mem>> -> memref<1x!tpu.dma_semaphore, #tpu.memory_space<semaphore_mem>>
    %54 = tpu.memref_squeeze %53 : memref<1x!tpu.dma_semaphore, #tpu.memory_space<semaphore_mem>> -> memref<!tpu.dma_semaphore, #tpu.memory_space<semaphore_mem>>
    tpu.enqueue_dma source(%50 : memref<128xf32, #tpu.memory_space<any>>) target(%52 : memref<128xf32, #tpu.memory_space<vmem>>) target_semaphore(%54 : memref<!tpu.dma_semaphore, #tpu.memory_space<semaphore_mem>>)
    %c6_i32 = arith.constant 6 : i32
    %55 = arith.addi %0, %c6_i32 : i32
    %56 = arith.index_cast %55 : i32 to index
    %57 = memref.load %arg1[%56] : memref<16xi32, #tpu.memory_space<smem>>
    %c6_i32_24 = arith.constant 6 : i32
    %c6_i32_25 = arith.constant 6 : i32
    %c0_i32_26 = arith.constant 0 : i32
    %58 = tpu.memref_slice %arg11[%57, %c0_i32_26] : memref<1000x128xf32, #tpu.memory_space<any>> -> memref<1x128xf32, #tpu.memory_space<any>>
    %59 = tpu.memref_squeeze %58 : memref<1x128xf32, #tpu.memory_space<any>> -> memref<128xf32, #tpu.memory_space<any>>
    %c0_i32_27 = arith.constant 0 : i32
    %60 = tpu.memref_slice %arg19[%c6_i32_24, %c0_i32_27] : memref<8x128xf32, #tpu.memory_space<vmem>> -> memref<1x128xf32, #tpu.memory_space<vmem>>
    %61 = tpu.memref_squeeze %60 : memref<1x128xf32, #tpu.memory_space<vmem>> -> memref<128xf32, #tpu.memory_space<vmem>>
    %62 = tpu.memref_slice %arg20[%c6_i32_25] : memref<8x!tpu.dma_semaphore, #tpu.memory_space<semaphore_mem>> -> memref<1x!tpu.dma_semaphore, #tpu.memory_space<semaphore_mem>>
    %63 = tpu.memref_squeeze %62 : memref<1x!tpu.dma_semaphore, #tpu.memory_space<semaphore_mem>> -> memref<!tpu.dma_semaphore, #tpu.memory_space<semaphore_mem>>
    tpu.enqueue_dma source(%59 : memref<128xf32, #tpu.memory_space<any>>) target(%61 : memref<128xf32, #tpu.memory_space<vmem>>) target_semaphore(%63 : memref<!tpu.dma_semaphore, #tpu.memory_space<semaphore_mem>>)
    %c7_i32 = arith.constant 7 : i32
    %64 = arith.addi %0, %c7_i32 : i32
    %65 = arith.index_cast %64 : i32 to index
    %66 = memref.load %arg1[%65] : memref<16xi32, #tpu.memory_space<smem>>
    %c7_i32_28 = arith.constant 7 : i32
    %c7_i32_29 = arith.constant 7 : i32
    %c0_i32_30 = arith.constant 0 : i32
    %67 = tpu.memref_slice %arg11[%66, %c0_i32_30] : memref<1000x128xf32, #tpu.memory_space<any>> -> memref<1x128xf32, #tpu.memory_space<any>>
    %68 = tpu.memref_squeeze %67 : memref<1x128xf32, #tpu.memory_space<any>> -> memref<128xf32, #tpu.memory_space<any>>
    %c0_i32_31 = arith.constant 0 : i32
    %69 = tpu.memref_slice %arg19[%c7_i32_28, %c0_i32_31] : memref<8x128xf32, #tpu.memory_space<vmem>> -> memref<1x128xf32, #tpu.memory_space<vmem>>
    %70 = tpu.memref_squeeze %69 : memref<1x128xf32, #tpu.memory_space<vmem>> -> memref<128xf32, #tpu.memory_space<vmem>>
    %71 = tpu.memref_slice %arg20[%c7_i32_29] : memref<8x!tpu.dma_semaphore, #tpu.memory_space<semaphore_mem>> -> memref<1x!tpu.dma_semaphore, #tpu.memory_space<semaphore_mem>>
    %72 = tpu.memref_squeeze %71 : memref<1x!tpu.dma_semaphore, #tpu.memory_space<semaphore_mem>> -> memref<!tpu.dma_semaphore, #tpu.memory_space<semaphore_mem>>
    tpu.enqueue_dma source(%68 : memref<128xf32, #tpu.memory_space<any>>) target(%70 : memref<128xf32, #tpu.memory_space<vmem>>) target_semaphore(%72 : memref<!tpu.dma_semaphore, #tpu.memory_space<semaphore_mem>>)
    %c0 = arith.constant 0 : index
    %c0_32 = arith.constant 0 : index
    %c0_33 = arith.constant 0 : index
    %73 = vector.load %arg2[%c0, %c0_32, %c0_33] : memref<8x16x256xf32, #tpu.memory_space<vmem>>, vector<8x16x256xf32>
    %c0_34 = arith.constant 0 : index
    %c0_35 = arith.constant 0 : index
    %74 = vector.load %arg3[%c0_34, %c0_35] : memref<8x256xf32, #tpu.memory_space<vmem>>, vector<8x256xf32>
    %c0_36 = arith.constant 0 : index
    %c0_37 = arith.constant 0 : index
    %75 = vector.load %arg4[%c0_36, %c0_37] : memref<8x256xf32, #tpu.memory_space<vmem>>, vector<8x256xf32>
    %76 = arith.truncf %74 : vector<8x256xf32> to vector<8x256xbf16>
    %77 = vector.shape_cast %73 : vector<8x16x256xf32> to vector<128x256xf32>
    %78 = arith.truncf %77 : vector<128x256xf32> to vector<128x256xbf16>
    %c0_38 = arith.constant 0 : index
    %c0_39 = arith.constant 0 : index
    %79 = vector.load %arg5[%c0_38, %c0_39] : memref<256x256xbf16, #tpu.memory_space<vmem>>, vector<256x256xbf16>
    %cst = arith.constant dense<0.000000e+00> : vector<128x256xf32>
    %80 = tpu.matmul %78, %79, %cst {dimension_numbers = #tpu.dot_dimension_numbers<[1], [0], [0], [1], [0, 0, 1, 1], [], []>} : vector<128x256xbf16>, vector<256x256xbf16>, vector<128x256xf32> -> vector<128x256xf32>
    %c0_40 = arith.constant 0 : index
    %c0_41 = arith.constant 0 : index
    %81 = vector.load %arg6[%c0_40, %c0_41] : memref<1x256xf32, #tpu.memory_space<vmem>>, vector<1x256xf32>
    %82 = vector.broadcast %81 : vector<1x256xf32> to vector<128x256xf32>
    %83 = arith.addf %80, %82 : vector<128x256xf32>
    %84 = vector.shape_cast %83 : vector<128x256xf32> to vector<8x16x256xf32>
    %c0_42 = arith.constant 0 : index
    %c0_43 = arith.constant 0 : index
    %85 = vector.load %arg7[%c0_42, %c0_43] : memref<256x256xbf16, #tpu.memory_space<vmem>>, vector<256x256xbf16>
    %cst_44 = arith.constant dense<0.000000e+00> : vector<8x256xf32>
    %86 = tpu.matmul %76, %85, %cst_44 {dimension_numbers = #tpu.dot_dimension_numbers<[1], [0], [0], [1], [0, 0, 1, 1], [], []>} : vector<8x256xbf16>, vector<256x256xbf16>, vector<8x256xf32> -> vector<8x256xf32>
    %c0_45 = arith.constant 0 : index
    %c0_46 = arith.constant 0 : index
    %87 = vector.load %arg8[%c0_45, %c0_46] : memref<1x256xf32, #tpu.memory_space<vmem>>, vector<1x256xf32>
    %88 = vector.broadcast %87 : vector<1x256xf32> to vector<8x256xf32>
    %89 = arith.addf %86, %88 : vector<8x256xf32>
    %90 = vector.shape_cast %89 : vector<8x256xf32> to vector<8x1x256xf32>
    %91 = vector.broadcast %90 : vector<8x1x256xf32> to vector<8x16x256xf32>
    %92 = arith.addf %84, %91 : vector<8x16x256xf32>
    %cst_47 = arith.constant 0.000000e+00 : f32
    %93 = vector.broadcast %cst_47 : f32 to vector<8x16x256xf32>
    %94 = arith.maximumf %92, %93 : vector<8x16x256xf32>
    %c0_48 = arith.constant 0 : index
    %c0_49 = arith.constant 0 : index
    %95 = vector.load %arg9[%c0_48, %c0_49] : memref<1x256xf32, #tpu.memory_space<vmem>>, vector<1x256xf32>
    %96 = vector.shape_cast %95 : vector<1x256xf32> to vector<1x1x256xf32>
    %97 = vector.broadcast %96 : vector<1x1x256xf32> to vector<8x16x256xf32>
    %98 = arith.mulf %94, %97 : vector<8x16x256xf32>
    %cst_50 = arith.constant dense<0.000000e+00> : vector<8x16xf32>
    %99 = vector.multi_reduction <add>, %98, %cst_50 [2] : vector<8x16x256xf32> to vector<8x16xf32>
    %c0_51 = arith.constant 0 : index
    %c0_52 = arith.constant 0 : index
    %100 = vector.load %arg10[%c0_51, %c0_52] : memref<1x1xf32, #tpu.memory_space<vmem>>, vector<1x1xf32>
    %101 = vector.broadcast %100 : vector<1x1xf32> to vector<8x16xf32>
    %102 = arith.addf %99, %101 : vector<8x16xf32>
    %cst_53 = arith.constant dense<0xFF800000> : vector<8xf32>
    %103 = vector.multi_reduction <maximumf>, %102, %cst_53 [1] : vector<8x16xf32> to vector<8xf32>
    %104 = vector.shape_cast %103 : vector<8xf32> to vector<8x1xf32>
    %105 = vector.broadcast %104 : vector<8x1xf32> to vector<8x16xf32>
    %106 = arith.subf %102, %105 : vector<8x16xf32>
    %107 = math.exp %106 : vector<8x16xf32>
    %cst_54 = arith.constant dense<0.000000e+00> : vector<8xf32>
    %108 = vector.multi_reduction <add>, %107, %cst_54 [1] : vector<8x16xf32> to vector<8xf32>
    %109 = vector.shape_cast %108 : vector<8xf32> to vector<8x1xf32>
    %110 = tpu.reciprocal %109 {approx = true} : vector<8x1xf32> -> vector<8x1xf32>
    %111 = vector.broadcast %110 : vector<8x1xf32> to vector<8x16xf32>
    %112 = arith.mulf %107, %111 : vector<8x16xf32>
    %c0_55 = arith.constant 0 : index
    %c0_56 = arith.constant 0 : index
    %113 = vector.load %arg18[%c0_55, %c0_56] : memref<8x16xf32, #tpu.memory_space<vmem>>, vector<8x16xf32>
    tpu.vector_store %arg18[%c0_55, %c0_56], %112 {strides = array<i32>} : memref<8x16xf32, #tpu.memory_space<vmem>>, vector<8x16xf32>,
    %114 = vector.shape_cast %112 : vector<8x16xf32> to vector<8x16x1xf32>
    %115 = vector.broadcast %114 : vector<8x16x1xf32> to vector<8x16x256xf32>
    %116 = arith.mulf %73, %115 : vector<8x16x256xf32>
    %cst_57 = arith.constant dense<0.000000e+00> : vector<8x256xf32>
    %117 = vector.multi_reduction <add>, %116, %cst_57 [1] : vector<8x16x256xf32> to vector<8x256xf32>
    %c0_58 = arith.constant 0 : index
    %c0_59 = arith.constant 0 : index
    %118 = vector.load %arg12[%c0_58, %c0_59] : memref<256x1024xbf16, #tpu.memory_space<vmem>>, vector<256x1024xbf16>
    %cst_60 = arith.constant dense<0.000000e+00> : vector<8x1024xf32>
    %119 = tpu.matmul %76, %118, %cst_60 {dimension_numbers = #tpu.dot_dimension_numbers<[1], [0], [0], [1], [0, 0, 1, 1], [], []>} : vector<8x256xbf16>, vector<256x1024xbf16>, vector<8x1024xf32> -> vector<8x1024xf32>
    %c0_61 = arith.constant 0 : index
    %c0_62 = arith.constant 0 : index
    %120 = vector.load %arg15[%c0_61, %c0_62] : memref<1x1024xf32, #tpu.memory_space<vmem>>, vector<1x1024xf32>
    %121 = vector.broadcast %120 : vector<1x1024xf32> to vector<8x1024xf32>
    %122 = arith.addf %119, %121 : vector<8x1024xf32>
    %123 = arith.truncf %117 : vector<8x256xf32> to vector<8x256xbf16>
    %c0_63 = arith.constant 0 : index
    %c0_64 = arith.constant 0 : index
    %124 = vector.load %arg13[%c0_63, %c0_64] : memref<256x1024xbf16, #tpu.memory_space<vmem>>, vector<256x1024xbf16>
    %cst_65 = arith.constant dense<0.000000e+00> : vector<8x1024xf32>
    %125 = tpu.matmul %123, %124, %cst_65 {dimension_numbers = #tpu.dot_dimension_numbers<[1], [0], [0], [1], [0, 0, 1, 1], [], []>} : vector<8x256xbf16>, vector<256x1024xbf16>, vector<8x1024xf32> -> vector<8x1024xf32>
    %126 = arith.addf %122, %125 : vector<8x1024xf32>
    %c0_i32_66 = arith.constant 0 : i32
    %127 = arith.addi %0, %c0_i32_66 : i32
    %128 = arith.index_cast %127 : i32 to index
    %129 = memref.load %arg1[%128] : memref<16xi32, #tpu.memory_space<smem>>
    %c0_i32_67 = arith.constant 0 : i32
    %c0_i32_68 = arith.constant 0 : i32
    %c0_i32_69 = arith.constant 0 : i32
    %130 = tpu.memref_slice %arg11[%129, %c0_i32_69] : memref<1000x128xf32, #tpu.memory_space<any>> -> memref<1x128xf32, #tpu.memory_space<any>>
    %131 = tpu.memref_squeeze %130 : memref<1x128xf32, #tpu.memory_space<any>> -> memref<128xf32, #tpu.memory_space<any>>
    %c0_i32_70 = arith.constant 0 : i32
    %132 = tpu.memref_slice %arg19[%c0_i32_67, %c0_i32_70] : memref<8x128xf32, #tpu.memory_space<vmem>> -> memref<1x128xf32, #tpu.memory_space<vmem>>
    %133 = tpu.memref_squeeze %132 : memref<1x128xf32, #tpu.memory_space<vmem>> -> memref<128xf32, #tpu.memory_space<vmem>>
    %134 = tpu.memref_slice %arg20[%c0_i32_68] : memref<8x!tpu.dma_semaphore, #tpu.memory_space<semaphore_mem>> -> memref<1x!tpu.dma_semaphore, #tpu.memory_space<semaphore_mem>>
    %135 = tpu.memref_squeeze %134 : memref<1x!tpu.dma_semaphore, #tpu.memory_space<semaphore_mem>> -> memref<!tpu.dma_semaphore, #tpu.memory_space<semaphore_mem>>
    tpu.wait_dma2 semaphore(%135 : memref<!tpu.dma_semaphore, #tpu.memory_space<semaphore_mem>>) src(%131 : memref<128xf32, #tpu.memory_space<any>>) dst(%133 : memref<128xf32, #tpu.memory_space<vmem>>)
    %c1_i32_71 = arith.constant 1 : i32
    %136 = arith.addi %0, %c1_i32_71 : i32
    %137 = arith.index_cast %136 : i32 to index
    %138 = memref.load %arg1[%137] : memref<16xi32, #tpu.memory_space<smem>>
    %c1_i32_72 = arith.constant 1 : i32
    %c1_i32_73 = arith.constant 1 : i32
    %c0_i32_74 = arith.constant 0 : i32
    %139 = tpu.memref_slice %arg11[%138, %c0_i32_74] : memref<1000x128xf32, #tpu.memory_space<any>> -> memref<1x128xf32, #tpu.memory_space<any>>
    %140 = tpu.memref_squeeze %139 : memref<1x128xf32, #tpu.memory_space<any>> -> memref<128xf32, #tpu.memory_space<any>>
    %c0_i32_75 = arith.constant 0 : i32
    %141 = tpu.memref_slice %arg19[%c1_i32_72, %c0_i32_75] : memref<8x128xf32, #tpu.memory_space<vmem>> -> memref<1x128xf32, #tpu.memory_space<vmem>>
    %142 = tpu.memref_squeeze %141 : memref<1x128xf32, #tpu.memory_space<vmem>> -> memref<128xf32, #tpu.memory_space<vmem>>
    %143 = tpu.memref_slice %arg20[%c1_i32_73] : memref<8x!tpu.dma_semaphore, #tpu.memory_space<semaphore_mem>> -> memref<1x!tpu.dma_semaphore, #tpu.memory_space<semaphore_mem>>
    %144 = tpu.memref_squeeze %143 : memref<1x!tpu.dma_semaphore, #tpu.memory_space<semaphore_mem>> -> memref<!tpu.dma_semaphore, #tpu.memory_space<semaphore_mem>>
    tpu.wait_dma2 semaphore(%144 : memref<!tpu.dma_semaphore, #tpu.memory_space<semaphore_mem>>) src(%140 : memref<128xf32, #tpu.memory_space<any>>) dst(%142 : memref<128xf32, #tpu.memory_space<vmem>>)
    %c2_i32_76 = arith.constant 2 : i32
    %145 = arith.addi %0, %c2_i32_76 : i32
    %146 = arith.index_cast %145 : i32 to index
    %147 = memref.load %arg1[%146] : memref<16xi32, #tpu.memory_space<smem>>
    %c2_i32_77 = arith.constant 2 : i32
    %c2_i32_78 = arith.constant 2 : i32
    %c0_i32_79 = arith.constant 0 : i32
    %148 = tpu.memref_slice %arg11[%147, %c0_i32_79] : memref<1000x128xf32, #tpu.memory_space<any>> -> memref<1x128xf32, #tpu.memory_space<any>>
    %149 = tpu.memref_squeeze %148 : memref<1x128xf32, #tpu.memory_space<any>> -> memref<128xf32, #tpu.memory_space<any>>
    %c0_i32_80 = arith.constant 0 : i32
    %150 = tpu.memref_slice %arg19[%c2_i32_77, %c0_i32_80] : memref<8x128xf32, #tpu.memory_space<vmem>> -> memref<1x128xf32, #tpu.memory_space<vmem>>
    %151 = tpu.memref_squeeze %150 : memref<1x128xf32, #tpu.memory_space<vmem>> -> memref<128xf32, #tpu.memory_space<vmem>>
    %152 = tpu.memref_slice %arg20[%c2_i32_78] : memref<8x!tpu.dma_semaphore, #tpu.memory_space<semaphore_mem>> -> memref<1x!tpu.dma_semaphore, #tpu.memory_space<semaphore_mem>>
    %153 = tpu.memref_squeeze %152 : memref<1x!tpu.dma_semaphore, #tpu.memory_space<semaphore_mem>> -> memref<!tpu.dma_semaphore, #tpu.memory_space<semaphore_mem>>
    tpu.wait_dma2 semaphore(%153 : memref<!tpu.dma_semaphore, #tpu.memory_space<semaphore_mem>>) src(%149 : memref<128xf32, #tpu.memory_space<any>>) dst(%151 : memref<128xf32, #tpu.memory_space<vmem>>)
    %c3_i32_81 = arith.constant 3 : i32
    %154 = arith.addi %0, %c3_i32_81 : i32
    %155 = arith.index_cast %154 : i32 to index
    %156 = memref.load %arg1[%155] : memref<16xi32, #tpu.memory_space<smem>>
    %c3_i32_82 = arith.constant 3 : i32
    %c3_i32_83 = arith.constant 3 : i32
    %c0_i32_84 = arith.constant 0 : i32
    %157 = tpu.memref_slice %arg11[%156, %c0_i32_84] : memref<1000x128xf32, #tpu.memory_space<any>> -> memref<1x128xf32, #tpu.memory_space<any>>
    %158 = tpu.memref_squeeze %157 : memref<1x128xf32, #tpu.memory_space<any>> -> memref<128xf32, #tpu.memory_space<any>>
    %c0_i32_85 = arith.constant 0 : i32
    %159 = tpu.memref_slice %arg19[%c3_i32_82, %c0_i32_85] : memref<8x128xf32, #tpu.memory_space<vmem>> -> memref<1x128xf32, #tpu.memory_space<vmem>>
    %160 = tpu.memref_squeeze %159 : memref<1x128xf32, #tpu.memory_space<vmem>> -> memref<128xf32, #tpu.memory_space<vmem>>
    %161 = tpu.memref_slice %arg20[%c3_i32_83] : memref<8x!tpu.dma_semaphore, #tpu.memory_space<semaphore_mem>> -> memref<1x!tpu.dma_semaphore, #tpu.memory_space<semaphore_mem>>
    %162 = tpu.memref_squeeze %161 : memref<1x!tpu.dma_semaphore, #tpu.memory_space<semaphore_mem>> -> memref<!tpu.dma_semaphore, #tpu.memory_space<semaphore_mem>>
    tpu.wait_dma2 semaphore(%162 : memref<!tpu.dma_semaphore, #tpu.memory_space<semaphore_mem>>) src(%158 : memref<128xf32, #tpu.memory_space<any>>) dst(%160 : memref<128xf32, #tpu.memory_space<vmem>>)
    %c4_i32_86 = arith.constant 4 : i32
    %163 = arith.addi %0, %c4_i32_86 : i32
    %164 = arith.index_cast %163 : i32 to index
    %165 = memref.load %arg1[%164] : memref<16xi32, #tpu.memory_space<smem>>
    %c4_i32_87 = arith.constant 4 : i32
    %c4_i32_88 = arith.constant 4 : i32
    %c0_i32_89 = arith.constant 0 : i32
    %166 = tpu.memref_slice %arg11[%165, %c0_i32_89] : memref<1000x128xf32, #tpu.memory_space<any>> -> memref<1x128xf32, #tpu.memory_space<any>>
    %167 = tpu.memref_squeeze %166 : memref<1x128xf32, #tpu.memory_space<any>> -> memref<128xf32, #tpu.memory_space<any>>
    %c0_i32_90 = arith.constant 0 : i32
    %168 = tpu.memref_slice %arg19[%c4_i32_87, %c0_i32_90] : memref<8x128xf32, #tpu.memory_space<vmem>> -> memref<1x128xf32, #tpu.memory_space<vmem>>
    %169 = tpu.memref_squeeze %168 : memref<1x128xf32, #tpu.memory_space<vmem>> -> memref<128xf32, #tpu.memory_space<vmem>>
    %170 = tpu.memref_slice %arg20[%c4_i32_88] : memref<8x!tpu.dma_semaphore, #tpu.memory_space<semaphore_mem>> -> memref<1x!tpu.dma_semaphore, #tpu.memory_space<semaphore_mem>>
    %171 = tpu.memref_squeeze %170 : memref<1x!tpu.dma_semaphore, #tpu.memory_space<semaphore_mem>> -> memref<!tpu.dma_semaphore, #tpu.memory_space<semaphore_mem>>
    tpu.wait_dma2 semaphore(%171 : memref<!tpu.dma_semaphore, #tpu.memory_space<semaphore_mem>>) src(%167 : memref<128xf32, #tpu.memory_space<any>>) dst(%169 : memref<128xf32, #tpu.memory_space<vmem>>)
    %c5_i32_91 = arith.constant 5 : i32
    %172 = arith.addi %0, %c5_i32_91 : i32
    %173 = arith.index_cast %172 : i32 to index
    %174 = memref.load %arg1[%173] : memref<16xi32, #tpu.memory_space<smem>>
    %c5_i32_92 = arith.constant 5 : i32
    %c5_i32_93 = arith.constant 5 : i32
    %c0_i32_94 = arith.constant 0 : i32
    %175 = tpu.memref_slice %arg11[%174, %c0_i32_94] : memref<1000x128xf32, #tpu.memory_space<any>> -> memref<1x128xf32, #tpu.memory_space<any>>
    %176 = tpu.memref_squeeze %175 : memref<1x128xf32, #tpu.memory_space<any>> -> memref<128xf32, #tpu.memory_space<any>>
    %c0_i32_95 = arith.constant 0 : i32
    %177 = tpu.memref_slice %arg19[%c5_i32_92, %c0_i32_95] : memref<8x128xf32, #tpu.memory_space<vmem>> -> memref<1x128xf32, #tpu.memory_space<vmem>>
    %178 = tpu.memref_squeeze %177 : memref<1x128xf32, #tpu.memory_space<vmem>> -> memref<128xf32, #tpu.memory_space<vmem>>
    %179 = tpu.memref_slice %arg20[%c5_i32_93] : memref<8x!tpu.dma_semaphore, #tpu.memory_space<semaphore_mem>> -> memref<1x!tpu.dma_semaphore, #tpu.memory_space<semaphore_mem>>
    %180 = tpu.memref_squeeze %179 : memref<1x!tpu.dma_semaphore, #tpu.memory_space<semaphore_mem>> -> memref<!tpu.dma_semaphore, #tpu.memory_space<semaphore_mem>>
    tpu.wait_dma2 semaphore(%180 : memref<!tpu.dma_semaphore, #tpu.memory_space<semaphore_mem>>) src(%176 : memref<128xf32, #tpu.memory_space<any>>) dst(%178 : memref<128xf32, #tpu.memory_space<vmem>>)
    %c6_i32_96 = arith.constant 6 : i32
    %181 = arith.addi %0, %c6_i32_96 : i32
    %182 = arith.index_cast %181 : i32 to index
    %183 = memref.load %arg1[%182] : memref<16xi32, #tpu.memory_space<smem>>
    %c6_i32_97 = arith.constant 6 : i32
    %c6_i32_98 = arith.constant 6 : i32
    %c0_i32_99 = arith.constant 0 : i32
    %184 = tpu.memref_slice %arg11[%183, %c0_i32_99] : memref<1000x128xf32, #tpu.memory_space<any>> -> memref<1x128xf32, #tpu.memory_space<any>>
    %185 = tpu.memref_squeeze %184 : memref<1x128xf32, #tpu.memory_space<any>> -> memref<128xf32, #tpu.memory_space<any>>
    %c0_i32_100 = arith.constant 0 : i32
    %186 = tpu.memref_slice %arg19[%c6_i32_97, %c0_i32_100] : memref<8x128xf32, #tpu.memory_space<vmem>> -> memref<1x128xf32, #tpu.memory_space<vmem>>
    %187 = tpu.memref_squeeze %186 : memref<1x128xf32, #tpu.memory_space<vmem>> -> memref<128xf32, #tpu.memory_space<vmem>>
    %188 = tpu.memref_slice %arg20[%c6_i32_98] : memref<8x!tpu.dma_semaphore, #tpu.memory_space<semaphore_mem>> -> memref<1x!tpu.dma_semaphore, #tpu.memory_space<semaphore_mem>>
    %189 = tpu.memref_squeeze %188 : memref<1x!tpu.dma_semaphore, #tpu.memory_space<semaphore_mem>> -> memref<!tpu.dma_semaphore, #tpu.memory_space<semaphore_mem>>
    tpu.wait_dma2 semaphore(%189 : memref<!tpu.dma_semaphore, #tpu.memory_space<semaphore_mem>>) src(%185 : memref<128xf32, #tpu.memory_space<any>>) dst(%187 : memref<128xf32, #tpu.memory_space<vmem>>)
    %c7_i32_101 = arith.constant 7 : i32
    %190 = arith.addi %0, %c7_i32_101 : i32
    %191 = arith.index_cast %190 : i32 to index
    %192 = memref.load %arg1[%191] : memref<16xi32, #tpu.memory_space<smem>>
    %c7_i32_102 = arith.constant 7 : i32
    %c7_i32_103 = arith.constant 7 : i32
    %c0_i32_104 = arith.constant 0 : i32
    %193 = tpu.memref_slice %arg11[%192, %c0_i32_104] : memref<1000x128xf32, #tpu.memory_space<any>> -> memref<1x128xf32, #tpu.memory_space<any>>
    %194 = tpu.memref_squeeze %193 : memref<1x128xf32, #tpu.memory_space<any>> -> memref<128xf32, #tpu.memory_space<any>>
    %c0_i32_105 = arith.constant 0 : i32
    %195 = tpu.memref_slice %arg19[%c7_i32_102, %c0_i32_105] : memref<8x128xf32, #tpu.memory_space<vmem>> -> memref<1x128xf32, #tpu.memory_space<vmem>>
    %196 = tpu.memref_squeeze %195 : memref<1x128xf32, #tpu.memory_space<vmem>> -> memref<128xf32, #tpu.memory_space<vmem>>
    %197 = tpu.memref_slice %arg20[%c7_i32_103] : memref<8x!tpu.dma_semaphore, #tpu.memory_space<semaphore_mem>> -> memref<1x!tpu.dma_semaphore, #tpu.memory_space<semaphore_mem>>
    %198 = tpu.memref_squeeze %197 : memref<1x!tpu.dma_semaphore, #tpu.memory_space<semaphore_mem>> -> memref<!tpu.dma_semaphore, #tpu.memory_space<semaphore_mem>>
    tpu.wait_dma2 semaphore(%198 : memref<!tpu.dma_semaphore, #tpu.memory_space<semaphore_mem>>) src(%194 : memref<128xf32, #tpu.memory_space<any>>) dst(%196 : memref<128xf32, #tpu.memory_space<vmem>>)
    %c0_106 = arith.constant 0 : index
    %c0_107 = arith.constant 0 : index
    %199 = vector.load %arg19[%c0_106, %c0_107] : memref<8x128xf32, #tpu.memory_space<vmem>>, vector<8x128xf32>
    %200 = arith.truncf %199 : vector<8x128xf32> to vector<8x128xbf16>
    %c0_108 = arith.constant 0 : index
    %c0_109 = arith.constant 0 : index
    %201 = vector.load %arg14[%c0_108, %c0_109] : memref<128x1024xbf16, #tpu.memory_space<vmem>>, vector<128x1024xbf16>
    %cst_110 = arith.constant dense<0.000000e+00> : vector<8x1024xf32>
    %202 = tpu.matmul %200, %201, %cst_110 {dimension_numbers = #tpu.dot_dimension_numbers<[1], [0], [0], [1], [0, 0, 1, 1], [], []>} : vector<8x128xbf16>, vector<128x1024xbf16>, vector<8x1024xf32> -> vector<8x1024xf32>
    %203 = arith.addf %126, %202 : vector<8x1024xf32>
    %204 = vector.extract_strided_slice %203 {offsets = [0, 0], sizes = [8, 256], strides = [1, 1]} : vector<8x1024xf32> to vector<8x256xf32>
    %205 = arith.negf %204 : vector<8x256xf32>
    %206 = math.exp %205 : vector<8x256xf32>
    %cst_111 = arith.constant 1.000000e+00 : f32
    %207 = vector.broadcast %cst_111 : f32 to vector<8x256xf32>
    %208 = arith.addf %207, %206 : vector<8x256xf32>
    %209 = arith.divf %207, %208 : vector<8x256xf32>
    %210 = vector.extract_strided_slice %203 {offsets = [0, 256], sizes = [8, 256], strides = [1, 1]} : vector<8x1024xf32> to vector<8x256xf32>
    %211 = arith.negf %210 : vector<8x256xf32>
    %212 = math.exp %211 : vector<8x256xf32>
    %cst_112 = arith.constant 1.000000e+00 : f32
    %213 = vector.broadcast %cst_112 : f32 to vector<8x256xf32>
    %214 = arith.addf %213, %212 : vector<8x256xf32>
    %215 = arith.divf %213, %214 : vector<8x256xf32>
    %216 = vector.extract_strided_slice %203 {offsets = [0, 512], sizes = [8, 256], strides = [1, 1]} : vector<8x1024xf32> to vector<8x256xf32>
    %217 = math.tanh %216 : vector<8x256xf32>
    %218 = vector.extract_strided_slice %203 {offsets = [0, 768], sizes = [8, 256], strides = [1, 1]} : vector<8x1024xf32> to vector<8x256xf32>
    %219 = arith.negf %218 : vector<8x256xf32>
    %220 = math.exp %219 : vector<8x256xf32>
    %cst_113 = arith.constant 1.000000e+00 : f32
    %221 = vector.broadcast %cst_113 : f32 to vector<8x256xf32>
    %222 = arith.addf %221, %220 : vector<8x256xf32>
    %223 = arith.divf %221, %222 : vector<8x256xf32>
    %224 = arith.mulf %215, %75 : vector<8x256xf32>
    %225 = arith.mulf %209, %217 : vector<8x256xf32>
    %226 = arith.addf %224, %225 : vector<8x256xf32>
    %227 = math.tanh %226 : vector<8x256xf32>
    %228 = arith.mulf %223, %227 : vector<8x256xf32>
    %c0_114 = arith.constant 0 : index
    %c0_115 = arith.constant 0 : index
    %229 = vector.load %arg16[%c0_114, %c0_115] : memref<8x256xf32, #tpu.memory_space<vmem>>, vector<8x256xf32>
    tpu.vector_store %arg16[%c0_114, %c0_115], %228 {strides = array<i32>} : memref<8x256xf32, #tpu.memory_space<vmem>>, vector<8x256xf32>,
    %c0_116 = arith.constant 0 : index
    %c0_117 = arith.constant 0 : index
    %230 = vector.load %arg17[%c0_116, %c0_117] : memref<8x256xf32, #tpu.memory_space<vmem>>, vector<8x256xf32>
    tpu.vector_store %arg17[%c0_116, %c0_117], %226 {strides = array<i32>} : memref<8x256xf32, #tpu.memory_space<vmem>>, vector<8x256xf32>,
    return
  }
  func.func @transform_0(%arg0: i32, %arg1: memref<16xi32, #tpu.memory_space<smem>>) -> (i32, i32, i32) {
    %c0_i32 = arith.constant 0 : i32
    %c0_i32_0 = arith.constant 0 : i32
    %c0_i32_1 = arith.constant 0 : i32
    return %arg0, %c0_i32, %c0_i32_0 : i32, i32, i32
  }
  func.func @transform_1(%arg0: i32, %arg1: memref<16xi32, #tpu.memory_space<smem>>) -> (i32, i32) {
    %c0_i32 = arith.constant 0 : i32
    %c0_i32_0 = arith.constant 0 : i32
    return %arg0, %c0_i32 : i32, i32
  }
  func.func @transform_2(%arg0: i32, %arg1: memref<16xi32, #tpu.memory_space<smem>>) -> (i32, i32) {
    %c0_i32 = arith.constant 0 : i32
    %c0_i32_0 = arith.constant 0 : i32
    return %arg0, %c0_i32 : i32, i32
  }
  func.func @transform_3(%arg0: i32, %arg1: memref<16xi32, #tpu.memory_space<smem>>) -> (i32, i32) {
    %c0_i32 = arith.constant 0 : i32
    %c0_i32_0 = arith.constant 0 : i32
    %c0_i32_1 = arith.constant 0 : i32
    return %c0_i32, %c0_i32_0 : i32, i32
  }
  func.func @transform_4(%arg0: i32, %arg1: memref<16xi32, #tpu.memory_space<smem>>) -> (i32, i32) {
    %c0_i32 = arith.constant 0 : i32
    %c0_i32_0 = arith.constant 0 : i32
    %c0_i32_1 = arith.constant 0 : i32
    return %c0_i32, %c0_i32_0 : i32, i32
  }
  func.func @transform_5(%arg0: i32, %arg1: memref<16xi32, #tpu.memory_space<smem>>) -> (i32, i32) {
    %c0_i32 = arith.constant 0 : i32
    %c0_i32_0 = arith.constant 0 : i32
    %c0_i32_1 = arith.constant 0 : i32
    return %c0_i32, %c0_i32_0 : i32, i32
  }
  func.func @transform_6(%arg0: i32, %arg1: memref<16xi32, #tpu.memory_space<smem>>) -> (i32, i32) {
    %c0_i32 = arith.constant 0 : i32
    %c0_i32_0 = arith.constant 0 : i32
    %c0_i32_1 = arith.constant 0 : i32
    return %c0_i32, %c0_i32_0 : i32, i32
  }
  func.func @transform_7(%arg0: i32, %arg1: memref<16xi32, #tpu.memory_space<smem>>) -> (i32, i32) {
    %c0_i32 = arith.constant 0 : i32
    %c0_i32_0 = arith.constant 0 : i32
    %c0_i32_1 = arith.constant 0 : i32
    return %c0_i32, %c0_i32_0 : i32, i32
  }
  func.func @transform_8(%arg0: i32, %arg1: memref<16xi32, #tpu.memory_space<smem>>) -> (i32, i32) {
    %c0_i32 = arith.constant 0 : i32
    %c0_i32_0 = arith.constant 0 : i32
    %c0_i32_1 = arith.constant 0 : i32
    return %c0_i32, %c0_i32_0 : i32, i32
  }
  func.func @transform_10(%arg0: i32, %arg1: memref<16xi32, #tpu.memory_space<smem>>) -> (i32, i32) {
    %c0_i32 = arith.constant 0 : i32
    %c0_i32_0 = arith.constant 0 : i32
    %c0_i32_1 = arith.constant 0 : i32
    return %c0_i32, %c0_i32_0 : i32, i32
  }
  func.func @transform_11(%arg0: i32, %arg1: memref<16xi32, #tpu.memory_space<smem>>) -> (i32, i32) {
    %c0_i32 = arith.constant 0 : i32
    %c0_i32_0 = arith.constant 0 : i32
    %c0_i32_1 = arith.constant 0 : i32
    return %c0_i32, %c0_i32_0 : i32, i32
  }
  func.func @transform_12(%arg0: i32, %arg1: memref<16xi32, #tpu.memory_space<smem>>) -> (i32, i32) {
    %c0_i32 = arith.constant 0 : i32
    %c0_i32_0 = arith.constant 0 : i32
    %c0_i32_1 = arith.constant 0 : i32
    return %c0_i32, %c0_i32_0 : i32, i32
  }
  func.func @transform_13(%arg0: i32, %arg1: memref<16xi32, #tpu.memory_space<smem>>) -> (i32, i32) {
    %c0_i32 = arith.constant 0 : i32
    %c0_i32_0 = arith.constant 0 : i32
    %c0_i32_1 = arith.constant 0 : i32
    return %c0_i32, %c0_i32_0 : i32, i32
  }
  func.func @transform_14(%arg0: i32, %arg1: memref<16xi32, #tpu.memory_space<smem>>) -> (i32, i32) {
    %c0_i32 = arith.constant 0 : i32
    %c0_i32_0 = arith.constant 0 : i32
    return %arg0, %c0_i32 : i32, i32
  }
  func.func @transform_15(%arg0: i32, %arg1: memref<16xi32, #tpu.memory_space<smem>>) -> (i32, i32) {
    %c0_i32 = arith.constant 0 : i32
    %c0_i32_0 = arith.constant 0 : i32
    return %arg0, %c0_i32 : i32, i32
  }
  func.func @transform_16(%arg0: i32, %arg1: memref<16xi32, #tpu.memory_space<smem>>) -> (i32, i32) {
    %c0_i32 = arith.constant 0 : i32
    %c0_i32_0 = arith.constant 0 : i32
    return %arg0, %c0_i32 : i32, i32
  }
}

</mosaic_0001>

<llo_original>
// kernel: tpu_custom_call.1
$region0: #{tpu_custom_call.1}
  #allocation0 [shape = 'u32[]', space=smem, size = 0x4, offset = 0x4, fixed_abs, tag = 'smem constant byte address 0x4 - core index']
  #allocation1 [shape = 'u32[72,128]{1,0:T(1,128)}', space=vmem, size = 0x9000, scoped, tag = 'internal scratch']
  #allocation2 [shape = 'f32[8,128]{1,0:T(8,128)}', space=vmem, size = 0x1000, scoped, tag = 'scratch operand']
  #allocation3 [shape = 's32[8]{0}', space=sflag, size = 0x20, scoped, tag = 'scratch operand']
  #allocation4 [shape = 's32[1]{0}', space=sflag, size = 0x4, scoped, tag = 'scoped memory for tpu_custom_call.1']
  #allocation5 [shape = 'u8[512]{0}', space=smem, size = 0x200, scoped, tag = 'prefetched SMEM operand 0']
  #allocation6 [shape = 'f32[1,1]{1,0:T(1,128)S(1)}', space=vmem, size = 0x200, scoped, tag = 'scoped memory for tpu_custom_call.1']
  #allocation25 [shape = 's32[]', space=sflag, size = 0x4, offset = 0, fixed_abs, tag = 'sflag constant byte address 0x0 - dummy sync flag']
  #allocation26 [shape = 's32[]', space=sflag, size = 0x4, offset = 0, fixed_abs, tag = 'sflag constant byte address 0x0 - dummy sync flag']
  #allocation27 [shape = 'u32[]', space=smem, size = 0x4, offset = 0x44, fixed_abs, tag = 'smem constant byte address 0x44 - assertion arg 0']
  #allocation28 [shape = 'u32[]', space=smem, size = 0x4, offset = 0x48, fixed_abs, tag = 'smem constant byte address 0x48 - assertion arg 1']
  #allocation29 [shape = 's32[]', space=sflag, size = 0x4, offset = 0, fixed_abs, tag = 'sflag constant byte address 0x0 - dummy sync flag']
  #allocation30 [shape = 's32[]', space=sflag, size = 0x4, offset = 0, fixed_abs, tag = 'sflag constant byte address 0x0 - dummy sync flag']
  #allocation31 [shape = 's32[]', space=sflag, size = 0x4, offset = 0, fixed_abs, tag = 'sflag constant byte address 0x0 - dummy sync flag']
  #allocation32 [shape = 's32[]', space=sflag, size = 0x4, offset = 0, fixed_abs, tag = 'sflag constant byte address 0x0 - dummy sync flag']
  #allocation33 [shape = 's32[]', space=sflag, size = 0x4, offset = 0, fixed_abs, tag = 'sflag constant byte address 0x0 - dummy sync flag']
  #allocation34 [shape = 's32[]', space=sflag, size = 0x4, offset = 0, fixed_abs, tag = 'sflag constant byte address 0x0 - dummy sync flag']
  #allocation35 [shape = 's32[]', space=sflag, size = 0x4, offset = 0, fixed_abs, tag = 'sflag constant byte address 0x0 - dummy sync flag']
  #allocation36 [shape = 's32[]', space=sflag, size = 0x4, offset = 0, fixed_abs, tag = 'sflag constant byte address 0x0 - dummy sync flag']
  #allocation37 [shape = 's32[]', space=sflag, size = 0x4, offset = 0, fixed_abs, tag = 'sflag constant byte address 0x0 - dummy sync flag']
  #allocation38 [shape = 's32[]', space=sflag, size = 0x4, offset = 0, fixed_abs, tag = 'sflag constant byte address 0x0 - dummy sync flag']
  #allocation39 [shape = 's32[]', space=sflag, size = 0x4, offset = 0, fixed_abs, tag = 'sflag constant byte address 0x0 - dummy sync flag']
  #allocation40 [shape = 's32[]', space=sflag, size = 0x4, offset = 0, fixed_abs, tag = 'sflag constant byte address 0x0 - dummy sync flag']
  #allocation41 [shape = 's32[]', space=sflag, size = 0x4, offset = 0, fixed_abs, tag = 'sflag constant byte address 0x0 - dummy sync flag']
  #allocation42 [shape = 's32[]', space=sflag, size = 0x4, offset = 0, fixed_abs, tag = 'sflag constant byte address 0x0 - dummy sync flag']
  %s0 = inlined_call_operand.hbm [shape: s32[16], index: 0, kind: input, shape index: {}]
  %s1 = inlined_call_operand.hbm [shape: f32[16,16,256], index: 1, kind: input, shape index: {}]
  %s2 = inlined_call_operand.hbm [shape: f32[16,256], index: 2, kind: input, shape index: {}]
  %s3 = inlined_call_operand.hbm [shape: f32[16,256], index: 3, kind: input, shape index: {}]
  %s4 = inlined_call_operand.hbm [shape: bf16[256,256], index: 4, kind: input, shape index: {}]
  %s5 = inlined_call_operand.vmem [shape: f32[1,256], index: 5, kind: input, shape index: {}]
  %s6 = inlined_call_operand.hbm [shape: bf16[256,256], index: 6, kind: input, shape index: {}]
  %s7 = inlined_call_operand.vmem [shape: f32[1,256], index: 7, kind: input, shape index: {}]
  %s8 = inlined_call_operand.vmem [shape: f32[1,256], index: 8, kind: input, shape index: {}]
  %s9 = inlined_call_operand.<no memory space> [shape: f32[1,1], index: 9, kind: input, shape index: {}]
  %s10 = inlined_call_operand.hbm [shape: f32[1000,128], index: 10, kind: input, shape index: {}]
  %s11 = inlined_call_operand.hbm [shape: bf16[256,1024], index: 11, kind: input, shape index: {}]
  %s12 = inlined_call_operand.hbm [shape: bf16[256,1024], index: 12, kind: input, shape index: {}]
  %s13 = inlined_call_operand.hbm [shape: bf16[128,1024], index: 13, kind: input, shape index: {}]
  %s14 = inlined_call_operand.vmem [shape: f32[1,1024], index: 14, kind: input, shape index: {}]
  %s15 = inlined_call_operand.hbm [shape: f32[16,256], index: 15, kind: output, shape index: {0}]
  %s16 = inlined_call_operand.hbm [shape: f32[16,256], index: 16, kind: output, shape index: {1}]
  %s17 = inlined_call_operand.hbm [shape: f32[16,16], index: 17, kind: output, shape index: {2}]
  %18 = xla_tuple %s15, %s16, %s17
  %s19 = sld [smem:[#allocation0]]
  $region165: #{tpu_custom_call.1} parent=0
    _
  %s21 = ssub.s32 1, %s19
  %s22 = scalar_select 0, %s21, %s19
  %s24 = sshll.u32 %s0, 4
  %s25 = int_to_ptr.hbm [resolvable:$true] %s24
  %27 = dma.hbm_to_smem %s25, 16, [#allocation5], [#allocation4]
  %v28 = vstv %s9
  %29 = vst [vmem:[#allocation6] sm:$0x1] %v28
  %31 = dma.done [#allocation4], 16
  %32 = sfence
  $region1: #{tpu_custom_call.1} parent=0
    #allocation7 [shape = 'u8[262144]{0}', space=vmem, size = 0x40000, scoped, tag = 'input window, operand 1']
    #allocation8 [shape = 's32[2]{0}', space=sflag, size = 0x8, scoped, tag = 'scoped memory for tpu_custom_call.1']
    #allocation9 [shape = 's32[2]{0}', space=sflag, size = 0x8, scoped, tag = 'scoped memory for tpu_custom_call.1']
    #allocation10 [shape = 'u8[16384]{0}', space=vmem, size = 0x4000, scoped, tag = 'input window, operand 2']
    #allocation11 [shape = 's32[2]{0}', space=sflag, size = 0x8, scoped, tag = 'scoped memory for tpu_custom_call.1']
    #allocation12 [shape = 'u8[16384]{0}', space=vmem, size = 0x4000, scoped, tag = 'input window, operand 3']
    #allocation13 [shape = 'u8[131072]{0}', space=vmem, size = 0x20000, scoped, tag = 'input window, operand 4, single buffered']
    #allocation14 [shape = 's32[1]{0}', space=sflag, size = 0x4, scoped, tag = 'scoped memory for tpu_custom_call.1']
    #allocation15 [shape = 'u8[131072]{0}', space=vmem, size = 0x20000, scoped, tag = 'input window, operand 6, single buffered']
    #allocation16 [shape = 'u8[524288]{0}', space=vmem, size = 0x80000, scoped, tag = 'input window, operand 11, single buffered']
    #allocation17 [shape = 's32[1]{0}', space=sflag, size = 0x4, scoped, tag = 'scoped memory for tpu_custom_call.1']
    #allocation18 [shape = 'u8[524288]{0}', space=vmem, size = 0x80000, scoped, tag = 'input window, operand 12, single buffered']
    #allocation19 [shape = 'u8[262144]{0}', space=vmem, size = 0x40000, scoped, tag = 'input window, operand 13, single buffered']
    #allocation20 [shape = 's32[1]{0}', space=sflag, size = 0x4, scoped, tag = 'scoped memory for tpu_custom_call.1']
    #allocation21 [shape = 'u8[16384]{0}', space=vmem, size = 0x4000, scoped, tag = 'output window, operand 0']
    #allocation22 [shape = 'u8[16384]{0}', space=vmem, size = 0x4000, scoped, tag = 'output window, operand 1']
    #allocation23 [shape = 's32[2]{0}', space=sflag, size = 0x8, scoped, tag = 'scoped memory for tpu_custom_call.1']
    #allocation24 [shape = 'u8[8192]{0}', space=vmem, size = 0x2000, scoped, tag = 'output window, operand 2']
    %33 = vsyncpa [#allocation8], 0
    %s34 = scalar_lea.sflag [#allocation8], 1
    %35 = vsyncpa %s34, 0
    %36 = vsyncpa [#allocation11], 0
    %s37 = scalar_lea.sflag [#allocation11], 1
    %38 = vsyncpa %s37, 0
    %39 = vsyncpa [#allocation14], 0
    %40 = vsyncpa [#allocation17], 0
    %41 = vsyncpa [#allocation20], 0
    %42 = vsyncpa [#allocation9], 0
    %s43 = scalar_lea.sflag [#allocation9], 1
    %44 = vsyncpa %s43, 0
    %45 = vsyncpa [#allocation23], 0
    %s46 = scalar_lea.sflag [#allocation23], 1
    %47 = vsyncpa %s46, 0
    loop: start=0, step=1, limit=4
    $region2: #{tpu_custom_call.1} parent=1 // loop_pre_header
      _
    $region3: #{tpu_custom_call.1} parent=1 // loop_header
      %s49 = sphi 0, %s53
      %p50 = scmp.ge.s32.totalorder %s49, 4
      %s59 = sphi 0, %s61
      %s62 = sphi 0, %s59
      %s63 = sphi 0, %s62
      %s79 = sphi 0, %s63
      %s85 = sphi 0, %s87
      %s88 = sphi 0, %s85
      %s89 = sphi 0, %s88
      %s105 = sphi 0, %s89
      %s111 = sphi 0, %s113
      %s114 = sphi 0, %s111
      %s115 = sphi 0, %s114
      %s131 = sphi 0, %s115
      %s135 = sphi 0, %s135
      %s137 = sphi 0, %s135
      %s138 = sphi 0, %s137
      %s152 = sphi 0, %s138
      %s156 = sphi 0, %s156
      %s158 = sphi 0, %s156
      %s159 = sphi 0, %s158
      %s173 = sphi 0, %s159
      %s177 = sphi 0, %s177
      %s179 = sphi 0, %s177
      %s180 = sphi 0, %s179
      %s194 = sphi 0, %s180
      %s198 = sphi 0, %s198
      %s200 = sphi 0, %s198
      %s201 = sphi 0, %s200
      %s215 = sphi 0, %s201
      %s219 = sphi 0, %s219
      %s221 = sphi 0, %s219
      %s222 = sphi 0, %s221
      %s236 = sphi 0, %s222
      %s240 = sphi 0, %s240
      %s242 = sphi 0, %s240
      %s243 = sphi 0, %s242
      %s257 = sphi 0, %s243
      %s261 = sphi 0, %s261
      %s263 = sphi 0, %s261
      %s264 = sphi 0, %s263
      %s278 = sphi 0, %s264
      %s282 = sphi 0, %s282
      %s284 = sphi 0, %s282
      %s285 = sphi 0, %s284
      %s299 = sphi 0, %s285
      %s303 = sphi 0, %s303
      %s305 = sphi 0, %s303
      %s306 = sphi 0, %s305
      %s320 = sphi 0, %s306
      %s324 = sphi 0, %s324
      %s326 = sphi 0, %s324
      %s327 = sphi 0, %s326
      %s341 = sphi 0, %s327
      %s347 = sphi 0, %s349
      %s350 = sphi 0, %s347
      %s351 = sphi 0, %s350
      %s367 = sphi 0, %s351
      %s373 = sphi 0, %s375
      %s376 = sphi 0, %s373
      %s377 = sphi 0, %s376
      %s393 = sphi 0, %s377
      %s399 = sphi 0, %s401
      %s402 = sphi 0, %s399
      %s403 = sphi 0, %s402
      %s419 = sphi 0, %s403
    $region4: #{tpu_custom_call.1} parent=1 // loop_header_branch
      %52 = sbr.rel (%p50) target = $region8
    $region5: #{tpu_custom_call.1} parent=1 // loop_body
      %s54 = ssub.s32 %s49, 1
      %s55 = ssub.s32 %s49, 2
      %s56 = sadd.s32 %s49, 1
      %s57 = ssub.s32 %s49, %s56
      %p58 = scmp.eq.s32.totalorder %s57, 0
      %s60 = sadd.s32 %s59, 1
      %s61 = scalar_select %p58, %s59, %s60
      %p64 = pneg %p58
      %p65 = scmp.eq.s32.totalorder %s49, 1
      %p66 = por %p64, %p65
      %p67 = scmp.ne.s32.totalorder %s59, %s62
      %p68 = scmp.eq.s32.totalorder %s49, 0
      %p69 = por %p67, %p68
      %p70 = scmp.ne.s32.totalorder %s59, %s62
      %p71 = scmp.eq.s32.totalorder %s54, 1
      %p72 = por %p70, %p71
      %p73 = scmp.ne.s32.totalorder %s62, %s63
      %p74 = scmp.eq.s32.totalorder %s54, 0
      %p75 = por %p73, %p74
      %p76 = scmp.ne.s32.totalorder %s62, %s63
      %p77 = scmp.eq.s32.totalorder %s55, 1
      %p78 = por %p76, %p77
      %p80 = scmp.ne.s32.totalorder %s63, %s79
      %p81 = scmp.eq.s32.totalorder %s55, 0
      %p82 = por %p80, %p81
      %s83 = ssub.s32 %s49, %s56
      %p84 = scmp.eq.s32.totalorder %s83, 0
      %s86 = sadd.s32 %s85, 1
      %s87 = scalar_select %p84, %s85, %s86
      %p90 = pneg %p84
      %p91 = scmp.eq.s32.totalorder %s49, 1
      %p92 = por %p90, %p91
      %p93 = scmp.ne.s32.totalorder %s85, %s88
      %p94 = scmp.eq.s32.totalorder %s49, 0
      %p95 = por %p93, %p94
      %p96 = scmp.ne.s32.totalorder %s85, %s88
      %p97 = scmp.eq.s32.totalorder %s54, 1
      %p98 = por %p96, %p97
      %p99 = scmp.ne.s32.totalorder %s88, %s89
      %p100 = scmp.eq.s32.totalorder %s54, 0
      %p101 = por %p99, %p100
      %p102 = scmp.ne.s32.totalorder %s88, %s89
      %p103 = scmp.eq.s32.totalorder %s55, 1
      %p104 = por %p102, %p103
      %p106 = scmp.ne.s32.totalorder %s89, %s105
      %p107 = scmp.eq.s32.totalorder %s55, 0
      %p108 = por %p106, %p107
      %s109 = ssub.s32 %s49, %s56
      %p110 = scmp.eq.s32.totalorder %s109, 0
      %s112 = sadd.s32 %s111, 1
      %s113 = scalar_select %p110, %s111, %s112
      %p116 = pneg %p110
      %p117 = scmp.eq.s32.totalorder %s49, 1
      %p118 = por %p116, %p117
      %p119 = scmp.ne.s32.totalorder %s111, %s114
      %p120 = scmp.eq.s32.totalorder %s49, 0
      %p121 = por %p119, %p120
      %p122 = scmp.ne.s32.totalorder %s111, %s114
      %p123 = scmp.eq.s32.totalorder %s54, 1
      %p124 = por %p122, %p123
      %p125 = scmp.ne.s32.totalorder %s114, %s115
      %p126 = scmp.eq.s32.totalorder %s54, 0
      %p127 = por %p125, %p126
      %p128 = scmp.ne.s32.totalorder %s114, %s115
      %p129 = scmp.eq.s32.totalorder %s55, 1
      %p130 = por %p128, %p129
      %p132 = scmp.ne.s32.totalorder %s115, %s131
      %p133 = scmp.eq.s32.totalorder %s55, 0
      %p134 = por %p132, %p133
      %s136 = sadd.s32 %s135, 1
      %p139 = scmp.eq.s32.totalorder %s49, 1
      %p140 = scmp.ne.s32.totalorder %s135, %s137
      %p141 = scmp.eq.s32.totalorder %s49, 0
      %p142 = por %p140, %p141
      %p143 = scmp.ne.s32.totalorder %s135, %s137
      %p144 = scmp.eq.s32.totalorder %s54, 1
      %p145 = por %p143, %p144
      %p146 = scmp.ne.s32.totalorder %s137, %s138
      %p147 = scmp.eq.s32.totalorder %s54, 0
      %p148 = por %p146, %p147
      %p149 = scmp.ne.s32.totalorder %s137, %s138
      %p150 = scmp.eq.s32.totalorder %s55, 1
      %p151 = por %p149, %p150
      %p153 = scmp.ne.s32.totalorder %s138, %s152
      %p154 = scmp.eq.s32.totalorder %s55, 0
      %p155 = por %p153, %p154
      %s157 = sadd.s32 %s156, 1
      %p160 = scmp.eq.s32.totalorder %s49, 1
      %p161 = scmp.ne.s32.totalorder %s156, %s158
      %p162 = scmp.eq.s32.totalorder %s49, 0
      %p163 = por %p161, %p162
      %p164 = scmp.ne.s32.totalorder %s156, %s158
      %p165 = scmp.eq.s32.totalorder %s54, 1
      %p166 = por %p164, %p165
      %p167 = scmp.ne.s32.totalorder %s158, %s159
      %p168 = scmp.eq.s32.totalorder %s54, 0
      %p169 = por %p167, %p168
      %p170 = scmp.ne.s32.totalorder %s158, %s159
      %p171 = scmp.eq.s32.totalorder %s55, 1
      %p172 = por %p170, %p171
      %p174 = scmp.ne.s32.totalorder %s159, %s173
      %p175 = scmp.eq.s32.totalorder %s55, 0
      %p176 = por %p174, %p175
      %s178 = sadd.s32 %s177, 1
      %p181 = scmp.eq.s32.totalorder %s49, 1
      %p182 = scmp.ne.s32.totalorder %s177, %s179
      %p183 = scmp.eq.s32.totalorder %s49, 0
      %p184 = por %p182, %p183
      %p185 = scmp.ne.s32.totalorder %s177, %s179
      %p186 = scmp.eq.s32.totalorder %s54, 1
      %p187 = por %p185, %p186
      %p188 = scmp.ne.s32.totalorder %s179, %s180
      %p189 = scmp.eq.s32.totalorder %s54, 0
      %p190 = por %p188, %p189
      %p191 = scmp.ne.s32.totalorder %s179, %s180
      %p192 = scmp.eq.s32.totalorder %s55, 1
      %p193 = por %p191, %p192
      %p195 = scmp.ne.s32.totalorder %s180, %s194
      %p196 = scmp.eq.s32.totalorder %s55, 0
      %p197 = por %p195, %p196
      %s199 = sadd.s32 %s198, 1
      %p202 = scmp.eq.s32.totalorder %s49, 1
      %p203 = scmp.ne.s32.totalorder %s198, %s200
      %p204 = scmp.eq.s32.totalorder %s49, 0
      %p205 = por %p203, %p204
      %p206 = scmp.ne.s32.totalorder %s198, %s200
      %p207 = scmp.eq.s32.totalorder %s54, 1
      %p208 = por %p206, %p207
      %p209 = scmp.ne.s32.totalorder %s200, %s201
      %p210 = scmp.eq.s32.totalorder %s54, 0
      %p211 = por %p209, %p210
      %p212 = scmp.ne.s32.totalorder %s200, %s201
      %p213 = scmp.eq.s32.totalorder %s55, 1
      %p214 = por %p212, %p213
      %p216 = scmp.ne.s32.totalorder %s201, %s215
      %p217 = scmp.eq.s32.totalorder %s55, 0
      %p218 = por %p216, %p217
      %s220 = sadd.s32 %s219, 1
      %p223 = scmp.eq.s32.totalorder %s49, 1
      %p224 = scmp.ne.s32.totalorder %s219, %s221
      %p225 = scmp.eq.s32.totalorder %s49, 0
      %p226 = por %p224, %p225
      %p227 = scmp.ne.s32.totalorder %s219, %s221
      %p228 = scmp.eq.s32.totalorder %s54, 1
      %p229 = por %p227, %p228
      %p230 = scmp.ne.s32.totalorder %s221, %s222
      %p231 = scmp.eq.s32.totalorder %s54, 0
      %p232 = por %p230, %p231
      %p233 = scmp.ne.s32.totalorder %s221, %s222
      %p234 = scmp.eq.s32.totalorder %s55, 1
      %p235 = por %p233, %p234
      %p237 = scmp.ne.s32.totalorder %s222, %s236
      %p238 = scmp.eq.s32.totalorder %s55, 0
      %p239 = por %p237, %p238
      %s241 = sadd.s32 %s240, 1
      %p244 = scmp.eq.s32.totalorder %s49, 1
      %p245 = scmp.ne.s32.totalorder %s240, %s242
      %p246 = scmp.eq.s32.totalorder %s49, 0
      %p247 = por %p245, %p246
      %p248 = scmp.ne.s32.totalorder %s240, %s242
      %p249 = scmp.eq.s32.totalorder %s54, 1
      %p250 = por %p248, %p249
      %p251 = scmp.ne.s32.totalorder %s242, %s243
      %p252 = scmp.eq.s32.totalorder %s54, 0
      %p253 = por %p251, %p252
      %p254 = scmp.ne.s32.totalorder %s242, %s243
      %p255 = scmp.eq.s32.totalorder %s55, 1
      %p256 = por %p254, %p255
      %p258 = scmp.ne.s32.totalorder %s243, %s257
      %p259 = scmp.eq.s32.totalorder %s55, 0
      %p260 = por %p258, %p259
      %s262 = sadd.s32 %s261, 1
      %p265 = scmp.eq.s32.totalorder %s49, 1
      %p266 = scmp.ne.s32.totalorder %s261, %s263
      %p267 = scmp.eq.s32.totalorder %s49, 0
      %p268 = por %p266, %p267
      %p269 = scmp.ne.s32.totalorder %s261, %s263
      %p270 = scmp.eq.s32.totalorder %s54, 1
      %p271 = por %p269, %p270
      %p272 = scmp.ne.s32.totalorder %s263, %s264
      %p273 = scmp.eq.s32.totalorder %s54, 0
      %p274 = por %p272, %p273
      %p275 = scmp.ne.s32.totalorder %s263, %s264
      %p276 = scmp.eq.s32.totalorder %s55, 1
      %p277 = por %p275, %p276
      %p279 = scmp.ne.s32.totalorder %s264, %s278
      %p280 = scmp.eq.s32.totalorder %s55, 0
      %p281 = por %p279, %p280
      %s283 = sadd.s32 %s282, 1
      %p286 = scmp.eq.s32.totalorder %s49, 1
      %p287 = scmp.ne.s32.totalorder %s282, %s284
      %p288 = scmp.eq.s32.totalorder %s49, 0
      %p289 = por %p287, %p288
      %p290 = scmp.ne.s32.totalorder %s282, %s284
      %p291 = scmp.eq.s32.totalorder %s54, 1
      %p292 = por %p290, %p291
      %p293 = scmp.ne.s32.totalorder %s284, %s285
      %p294 = scmp.eq.s32.totalorder %s54, 0
      %p295 = por %p293, %p294
      %p296 = scmp.ne.s32.totalorder %s284, %s285
      %p297 = scmp.eq.s32.totalorder %s55, 1
      %p298 = por %p296, %p297
      %p300 = scmp.ne.s32.totalorder %s285, %s299
      %p301 = scmp.eq.s32.totalorder %s55, 0
      %p302 = por %p300, %p301
      %s304 = sadd.s32 %s303, 1
      %p307 = scmp.eq.s32.totalorder %s49, 1
      %p308 = scmp.ne.s32.totalorder %s303, %s305
      %p309 = scmp.eq.s32.totalorder %s49, 0
      %p310 = por %p308, %p309
      %p311 = scmp.ne.s32.totalorder %s303, %s305
      %p312 = scmp.eq.s32.totalorder %s54, 1
      %p313 = por %p311, %p312
      %p314 = scmp.ne.s32.totalorder %s305, %s306
      %p315 = scmp.eq.s32.totalorder %s54, 0
      %p316 = por %p314, %p315
      %p317 = scmp.ne.s32.totalorder %s305, %s306
      %p318 = scmp.eq.s32.totalorder %s55, 1
      %p319 = por %p317, %p318
      %p321 = scmp.ne.s32.totalorder %s306, %s320
      %p322 = scmp.eq.s32.totalorder %s55, 0
      %p323 = por %p321, %p322
      %s325 = sadd.s32 %s324, 1
      %p328 = scmp.eq.s32.totalorder %s49, 1
      %p329 = scmp.ne.s32.totalorder %s324, %s326
      %p330 = scmp.eq.s32.totalorder %s49, 0
      %p331 = por %p329, %p330
      %p332 = scmp.ne.s32.totalorder %s324, %s326
      %p333 = scmp.eq.s32.totalorder %s54, 1
      %p334 = por %p332, %p333
      %p335 = scmp.ne.s32.totalorder %s326, %s327
      %p336 = scmp.eq.s32.totalorder %s54, 0
      %p337 = por %p335, %p336
      %p338 = scmp.ne.s32.totalorder %s326, %s327
      %p339 = scmp.eq.s32.totalorder %s55, 1
      %p340 = por %p338, %p339
      %p342 = scmp.ne.s32.totalorder %s327, %s341
      %p343 = scmp.eq.s32.totalorder %s55, 0
      %p344 = por %p342, %p343
      %s345 = ssub.s32 %s49, %s56
      %p346 = scmp.eq.s32.totalorder %s345, 0
      %s348 = sadd.s32 %s347, 1
      %s349 = scalar_select %p346, %s347, %s348
      %p352 = pneg %p346
      %p353 = scmp.eq.s32.totalorder %s49, 1
      %p354 = por %p352, %p353
      %p355 = scmp.ne.s32.totalorder %s347, %s350
      %p356 = scmp.eq.s32.totalorder %s49, 0
      %p357 = por %p355, %p356
      %p358 = scmp.ne.s32.totalorder %s347, %s350
      %p359 = scmp.eq.s32.totalorder %s54, 1
      %p360 = por %p358, %p359
      %p361 = scmp.ne.s32.totalorder %s350, %s351
      %p362 = scmp.eq.s32.totalorder %s54, 0
      %p363 = por %p361, %p362
      %p364 = scmp.ne.s32.totalorder %s350, %s351
      %p365 = scmp.eq.s32.totalorder %s55, 1
      %p366 = por %p364, %p365
      %p368 = scmp.ne.s32.totalorder %s351, %s367
      %p369 = scmp.eq.s32.totalorder %s55, 0
      %p370 = por %p368, %p369
      %s371 = ssub.s32 %s49, %s56
      %p372 = scmp.eq.s32.totalorder %s371, 0
      %s374 = sadd.s32 %s373, 1
      %s375 = scalar_select %p372, %s373, %s374
      %p378 = pneg %p372
      %p379 = scmp.eq.s32.totalorder %s49, 1
      %p380 = por %p378, %p379
      %p381 = scmp.ne.s32.totalorder %s373, %s376
      %p382 = scmp.eq.s32.totalorder %s49, 0
      %p383 = por %p381, %p382
      %p384 = scmp.ne.s32.totalorder %s373, %s376
      %p385 = scmp.eq.s32.totalorder %s54, 1
      %p386 = por %p384, %p385
      %p387 = scmp.ne.s32.totalorder %s376, %s377
      %p388 = scmp.eq.s32.totalorder %s54, 0
      %p389 = por %p387, %p388
      %p390 = scmp.ne.s32.totalorder %s376, %s377
      %p391 = scmp.eq.s32.totalorder %s55, 1
      %p392 = por %p390, %p391
      %p394 = scmp.ne.s32.totalorder %s377, %s393
      %p395 = scmp.eq.s32.totalorder %s55, 0
      %p396 = por %p394, %p395
      %s397 = ssub.s32 %s49, %s56
      %p398 = scmp.eq.s32.totalorder %s397, 0
      %s400 = sadd.s32 %s399, 1
      %s401 = scalar_select %p398, %s399, %s400
      %p404 = pneg %p398
      %p405 = scmp.eq.s32.totalorder %s49, 1
      %p406 = por %p404, %p405
      %p407 = scmp.ne.s32.totalorder %s399, %s402
      %p408 = scmp.eq.s32.totalorder %s49, 0
      %p409 = por %p407, %p408
      %p410 = scmp.ne.s32.totalorder %s399, %s402
      %p411 = scmp.eq.s32.totalorder %s54, 1
      %p412 = por %p410, %p411
      %p413 = scmp.ne.s32.totalorder %s402, %s403
      %p414 = scmp.eq.s32.totalorder %s54, 0
      %p415 = por %p413, %p414
      %p416 = scmp.ne.s32.totalorder %s402, %s403
      %p417 = scmp.eq.s32.totalorder %s55, 1
      %p418 = por %p416, %p417
      %p420 = scmp.ne.s32.totalorder %s403, %s419
      %p421 = scmp.eq.s32.totalorder %s55, 0
      %p422 = por %p420, %p421
      %p423 = scmp.le.s32.totalorder 1, %s49
      %p424 = scmp.lt.s32.totalorder %s49, 3
      %p425 = pnand %p423, %p424
      %p426 = pneg %p425
      // Predicated region
      $region9: #{tpu_custom_call.1} parent=5 // pred_check
        _
      $region10: #{tpu_custom_call.1} parent=5 // pred_check_branch
        %428 = sbr.rel (%p425) target = $region12
      $region11: #{tpu_custom_call.1} parent=5 // pred_region
        %s429 = ssub.s32 %s49, 1
        // Predicated region
        $region13: #{tpu_custom_call.1} parent=11 // pred_check
          %p430 = pneg %p148
        $region14: #{tpu_custom_call.1} parent=11 // pred_check_branch
          %432 = sbr.rel (%p430) target = $region16
        $region15: #{tpu_custom_call.1} parent=11 // pred_region
          %434 = vsyncadd [#allocation14], 0
          %s435 = sshll.u32 %s4, 4
          %s436 = int_to_ptr.hbm [resolvable:$true] %s435
          %s437 = sshll.u32 [#allocation13], 4
          %s438 = int_to_ptr.vmem [resolvable:$true] %s437
          %443 = dma.hbm_to_vmem [thread:$0]  %s436, 4096, %s438, [#allocation14], 128, 128, 8
        $region16: #{tpu_custom_call.1} parent=11 // pred_fallthru
          _
        // Predicated region
        $region17: #{tpu_custom_call.1} parent=11 // pred_check
          %p444 = pneg %p169
        $region18: #{tpu_custom_call.1} parent=11 // pred_check_branch
          %446 = sbr.rel (%p444) target = $region20
        $region19: #{tpu_custom_call.1} parent=11 // pred_region
          _
        $region20: #{tpu_custom_call.1} parent=11 // pred_fallthru
          _
        // Predicated region
        $region21: #{tpu_custom_call.1} parent=11 // pred_check
          %p447 = pneg %p190
        $region22: #{tpu_custom_call.1} parent=11 // pred_check_branch
          %449 = sbr.rel (%p447) target = $region24
        $region23: #{tpu_custom_call.1} parent=11 // pred_region
          %451 = vsyncadd [#allocation14], 0
          %s452 = sshll.u32 %s6, 4
          %s453 = int_to_ptr.hbm [resolvable:$true] %s452
          %s454 = sshll.u32 [#allocation15], 4
          %s455 = int_to_ptr.vmem [resolvable:$true] %s454
          %460 = dma.hbm_to_vmem [thread:$0]  %s453, 4096, %s455, [#allocation14], 128, 128, 8
        $region24: #{tpu_custom_call.1} parent=11 // pred_fallthru
          _
        // Predicated region
        $region25: #{tpu_custom_call.1} parent=11 // pred_check
          %p461 = pneg %p211
        $region26: #{tpu_custom_call.1} parent=11 // pred_check_branch
          %463 = sbr.rel (%p461) target = $region28
        $region27: #{tpu_custom_call.1} parent=11 // pred_region
          _
        $region28: #{tpu_custom_call.1} parent=11 // pred_fallthru
          _
        // Predicated region
        $region29: #{tpu_custom_call.1} parent=11 // pred_check
          %p464 = pneg %p232
        $region30: #{tpu_custom_call.1} parent=11 // pred_check_branch
          %466 = sbr.rel (%p464) target = $region32
        $region31: #{tpu_custom_call.1} parent=11 // pred_region
          _
        $region32: #{tpu_custom_call.1} parent=11 // pred_fallthru
          _
        // Predicated region
        $region33: #{tpu_custom_call.1} parent=11 // pred_check
          %p467 = pneg %p253
        $region34: #{tpu_custom_call.1} parent=11 // pred_check_branch
          %469 = sbr.rel (%p467) target = $region36
        $region35: #{tpu_custom_call.1} parent=11 // pred_region
          _
        $region36: #{tpu_custom_call.1} parent=11 // pred_fallthru
          _
        // Predicated region
        $region37: #{tpu_custom_call.1} parent=11 // pred_check
          %p470 = pneg %p274
        $region38: #{tpu_custom_call.1} parent=11 // pred_check_branch
          %472 = sbr.rel (%p470) target = $region40
        $region39: #{tpu_custom_call.1} parent=11 // pred_region
          %474 = vsyncadd [#allocation17], 0
          %s475 = sshll.u32 %s11, 4
          %s476 = int_to_ptr.hbm [resolvable:$true] %s475
          %s477 = sshll.u32 [#allocation16], 4
          %s478 = int_to_ptr.vmem [resolvable:$true] %s477
          %483 = dma.hbm_to_vmem [thread:$0]  %s476, 16384, %s478, [#allocation17], 512, 512, 32
        $region40: #{tpu_custom_call.1} parent=11 // pred_fallthru
          _
        // Predicated region
        $region41: #{tpu_custom_call.1} parent=11 // pred_check
          %p484 = pneg %p295
        $region42: #{tpu_custom_call.1} parent=11 // pred_check_branch
          %486 = sbr.rel (%p484) target = $region44
        $region43: #{tpu_custom_call.1} parent=11 // pred_region
          %488 = vsyncadd [#allocation17], 0
          %s489 = sshll.u32 %s12, 4
          %s490 = int_to_ptr.hbm [resolvable:$true] %s489
          %s491 = sshll.u32 [#allocation18], 4
          %s492 = int_to_ptr.vmem [resolvable:$true] %s491
          %497 = dma.hbm_to_vmem [thread:$0]  %s490, 16384, %s492, [#allocation17], 512, 512, 32
        $region44: #{tpu_custom_call.1} parent=11 // pred_fallthru
          _
        // Predicated region
        $region45: #{tpu_custom_call.1} parent=11 // pred_check
          %p498 = pneg %p316
        $region46: #{tpu_custom_call.1} parent=11 // pred_check_branch
          %500 = sbr.rel (%p498) target = $region48
        $region47: #{tpu_custom_call.1} parent=11 // pred_region
          %502 = vsyncadd [#allocation20], 0
          %s503 = sshll.u32 %s13, 4
          %s504 = int_to_ptr.hbm [resolvable:$true] %s503
          %s505 = sshll.u32 [#allocation19], 4
          %s506 = int_to_ptr.vmem [resolvable:$true] %s505
          %511 = dma.hbm_to_vmem [thread:$0]  %s504, 8192, %s506, [#allocation20], 512, 512, 32
        $region48: #{tpu_custom_call.1} parent=11 // pred_fallthru
          _
        // Predicated region
        $region49: #{tpu_custom_call.1} parent=11 // pred_check
          %p512 = pneg %p337
        $region50: #{tpu_custom_call.1} parent=11 // pred_check_branch
          %514 = sbr.rel (%p512) target = $region52
        $region51: #{tpu_custom_call.1} parent=11 // pred_region
          _
        $region52: #{tpu_custom_call.1} parent=11 // pred_fallthru
          _
      $region12: #{tpu_custom_call.1} parent=5 // pred_fallthru
        _
      %p515 = scmp.lt.s32.totalorder %s49, 2
      // Predicated region
      $region53: #{tpu_custom_call.1} parent=5 // pred_check
        %p516 = pneg %p515
      $region54: #{tpu_custom_call.1} parent=5 // pred_check_branch
        %518 = sbr.rel (%p516) target = $region56
      $region55: #{tpu_custom_call.1} parent=5 // pred_region
        // Predicated region
        $region57: #{tpu_custom_call.1} parent=55 // pred_check
          %p519 = pneg %p69
        $region58: #{tpu_custom_call.1} parent=55 // pred_check_branch
          %521 = sbr.rel (%p519) target = $region60
        $region59: #{tpu_custom_call.1} parent=55 // pred_region
          %s522 = sand.u32 %s59, 1
          %s523 = scalar_lea.sflag [#allocation8], %s522
          %s524 = sand.u32 %s59, 1
          %s525 = smul.addr %s524, 256
          %s526 = scalar_lea.vmem [#allocation7], %s525
          %s527 = smul.u32 8, %s49
          %529 = vsyncadd %s523, 0
          %s530 = smul.addr %s527, 4
          %s531 = smul.addr %s530, 8
          %s532 = scalar_lea.hbm %s1, %s531
          %s533 = sshll.u32 %s532, 4
          %s534 = int_to_ptr.hbm [resolvable:$true] %s533
          %s535 = sshll.u32 %s526, 4
          %s536 = int_to_ptr.vmem [resolvable:$true] %s535
          %541 = dma.hbm_to_vmem [thread:$0]  %s534, 4096, %s536, %s523, 256, 256, 16
        $region60: #{tpu_custom_call.1} parent=55 // pred_fallthru
          _
        // Predicated region
        $region61: #{tpu_custom_call.1} parent=55 // pred_check
          %p542 = pneg %p95
        $region62: #{tpu_custom_call.1} parent=55 // pred_check_branch
          %544 = sbr.rel (%p542) target = $region64
        $region63: #{tpu_custom_call.1} parent=55 // pred_region
          %s545 = sand.u32 %s49, 1
          %s546 = scalar_lea.sflag [#allocation11], %s545
          %s547 = sand.u32 %s85, 1
          %s548 = smul.addr %s547, 16
          %s549 = scalar_lea.vmem [#allocation10], %s548
          %551 = vsyncadd %s546, 0
          %s552 = smul.addr %s49, 2
          %s553 = smul.addr %s552, 8
          %s554 = scalar_lea.hbm %s2, %s553
          %s556 = sshll.u32 %s554, 4
          %s557 = int_to_ptr.hbm [resolvable:$true] %s556
          %s558 = sshll.u32 %s549, 4
          %s559 = int_to_ptr.vmem [resolvable:$true] %s558
          %561 = dma.hbm_to_vmem [thread:$0]  %s557, 256, %s559, %s546
        $region64: #{tpu_custom_call.1} parent=55 // pred_fallthru
          _
        // Predicated region
        $region65: #{tpu_custom_call.1} parent=55 // pred_check
          %p562 = pneg %p121
        $region66: #{tpu_custom_call.1} parent=55 // pred_check_branch
          %564 = sbr.rel (%p562) target = $region68
        $region67: #{tpu_custom_call.1} parent=55 // pred_region
          %s565 = sand.u32 %s49, 1
          %s566 = scalar_lea.sflag [#allocation11], %s565
          %s567 = sand.u32 %s111, 1
          %s568 = smul.addr %s567, 16
          %s569 = scalar_lea.vmem [#allocation12], %s568
          %571 = vsyncadd %s566, 0
          %s572 = smul.addr %s49, 2
          %s573 = smul.addr %s572, 8
          %s574 = scalar_lea.hbm %s3, %s573
          %s576 = sshll.u32 %s574, 4
          %s577 = int_to_ptr.hbm [resolvable:$true] %s576
          %s578 = sshll.u32 %s569, 4
          %s579 = int_to_ptr.vmem [resolvable:$true] %s578
          %581 = dma.hbm_to_vmem [thread:$0]  %s577, 256, %s579, %s566
        $region68: #{tpu_custom_call.1} parent=55 // pred_fallthru
          _
      $region56: #{tpu_custom_call.1} parent=5 // pred_fallthru
        _
      %p582 = scmp.le.s32.totalorder 1, %s49
      %p583 = scmp.lt.s32.totalorder %s49, 3
      %p584 = pnand %p582, %p583
      %p585 = pneg %p584
      // Predicated region
      $region69: #{tpu_custom_call.1} parent=5 // pred_check
        _
      $region70: #{tpu_custom_call.1} parent=5 // pred_check_branch
        %587 = sbr.rel (%p584) target = $region72
      $region71: #{tpu_custom_call.1} parent=5 // pred_region
        %s588 = ssub.s32 %s49, 1
        %s589 = sand.u32 %s62, 1
        %s590 = scalar_lea.sflag [#allocation8], %s589
        %s591 = sand.u32 %s62, 1
        %s592 = smul.addr %s591, 256
        %s593 = scalar_lea.vmem [#allocation7], %s592
        // Predicated region
        $region73: #{tpu_custom_call.1} parent=71 // pred_check
          %p594 = pneg %p75
        $region74: #{tpu_custom_call.1} parent=71 // pred_check_branch
          %596 = sbr.rel (%p594) target = $region76
        $region75: #{tpu_custom_call.1} parent=71 // pred_region
          %598 = dma.done %s590, 4096
        $region76: #{tpu_custom_call.1} parent=71 // pred_fallthru
          _
        %s599 = sand.u32 %s54, 1
        %s600 = scalar_lea.sflag [#allocation11], %s599
        %s601 = sand.u32 %s88, 1
        %s602 = smul.addr %s601, 16
        %s603 = scalar_lea.vmem [#allocation10], %s602
        // Predicated region
        $region77: #{tpu_custom_call.1} parent=71 // pred_check
          %p604 = pneg %p101
        $region78: #{tpu_custom_call.1} parent=71 // pred_check_branch
          %606 = sbr.rel (%p604) target = $region80
        $region79: #{tpu_custom_call.1} parent=71 // pred_region
          %608 = dma.done %s600, 256
        $region80: #{tpu_custom_call.1} parent=71 // pred_fallthru
          _
        %s609 = sand.u32 %s54, 1
        %s610 = scalar_lea.sflag [#allocation11], %s609
        %s611 = sand.u32 %s114, 1
        %s612 = smul.addr %s611, 16
        %s613 = scalar_lea.vmem [#allocation12], %s612
        // Predicated region
        $region81: #{tpu_custom_call.1} parent=71 // pred_check
          %p614 = pneg %p127
        $region82: #{tpu_custom_call.1} parent=71 // pred_check_branch
          %616 = sbr.rel (%p614) target = $region84
        $region83: #{tpu_custom_call.1} parent=71 // pred_region
          %618 = dma.done %s610, 256
        $region84: #{tpu_custom_call.1} parent=71 // pred_fallthru
          _
        // Predicated region
        $region85: #{tpu_custom_call.1} parent=71 // pred_check
          %p619 = pneg %p148
        $region86: #{tpu_custom_call.1} parent=71 // pred_check_branch
          %621 = sbr.rel (%p619) target = $region88
        $region87: #{tpu_custom_call.1} parent=71 // pred_region
          %623 = dma.done [#allocation14], 4096
        $region88: #{tpu_custom_call.1} parent=71 // pred_fallthru
          _
        // Predicated region
        $region89: #{tpu_custom_call.1} parent=71 // pred_check
          %p624 = pneg %p190
        $region90: #{tpu_custom_call.1} parent=71 // pred_check_branch
          %626 = sbr.rel (%p624) target = $region92
        $region91: #{tpu_custom_call.1} parent=71 // pred_region
          %628 = dma.done [#allocation14], 4096
        $region92: #{tpu_custom_call.1} parent=71 // pred_fallthru
          _
        // Predicated region
        $region93: #{tpu_custom_call.1} parent=71 // pred_check
          %p629 = pneg %p274
        $region94: #{tpu_custom_call.1} parent=71 // pred_check_branch
          %631 = sbr.rel (%p629) target = $region96
        $region95: #{tpu_custom_call.1} parent=71 // pred_region
          %633 = dma.done [#allocation17], 16384
        $region96: #{tpu_custom_call.1} parent=71 // pred_fallthru
          _
        // Predicated region
        $region97: #{tpu_custom_call.1} parent=71 // pred_check
          %p634 = pneg %p295
        $region98: #{tpu_custom_call.1} parent=71 // pred_check_branch
          %636 = sbr.rel (%p634) target = $region100
        $region99: #{tpu_custom_call.1} parent=71 // pred_region
          %638 = dma.done [#allocation17], 16384
        $region100: #{tpu_custom_call.1} parent=71 // pred_fallthru
          _
        // Predicated region
        $region101: #{tpu_custom_call.1} parent=71 // pred_check
          %p639 = pneg %p316
        $region102: #{tpu_custom_call.1} parent=71 // pred_check_branch
          %641 = sbr.rel (%p639) target = $region104
        $region103: #{tpu_custom_call.1} parent=71 // pred_region
          %643 = dma.done [#allocation20], 8192
        $region104: #{tpu_custom_call.1} parent=71 // pred_fallthru
          _
        %s644 = sand.u32 %s62, 1
        %s645 = scalar_lea.sflag [#allocation8], %s644
        %s646 = sand.u32 %s62, 1
        %s647 = smul.addr %s646, 256
        %s648 = scalar_lea.vmem [#allocation7], %s647
        %p649 = pneg %p75
        %p650 = pneg %p72
        %s651 = sand.u32 %s54, 1
        %s652 = scalar_lea.sflag [#allocation11], %s651
        %s653 = sand.u32 %s88, 1
        %s654 = smul.addr %s653, 16
        %s655 = scalar_lea.vmem [#allocation10], %s654
        %p656 = pneg %p101
        %p657 = pneg %p98
        %s658 = sand.u32 %s54, 1
        %s659 = scalar_lea.sflag [#allocation11], %s658
        %s660 = sand.u32 %s114, 1
        %s661 = smul.addr %s660, 16
        %s662 = scalar_lea.vmem [#allocation12], %s661
        %p663 = pneg %p127
        %p664 = pneg %p124
        %p665 = pneg %p148
        %p666 = pneg %p145
        %p667 = pneg %p169
        %p668 = pneg %p166
        %p669 = pneg %p190
        %p670 = pneg %p187
        %p671 = pneg %p211
        %p672 = pneg %p208
        %p673 = pneg %p232
        %p674 = pneg %p229
        %p675 = pneg %p253
        %p676 = pneg %p250
        %p677 = pneg %p274
        %p678 = pneg %p271
        %p679 = pneg %p295
        %p680 = pneg %p292
        %p681 = pneg %p316
        %p682 = pneg %p313
        %p683 = pneg %p337
        %p684 = pneg %p334
        %p685 = pneg %p363
        %p686 = pneg %p360
        %s687 = sand.u32 %s350, 1
        %s688 = scalar_lea.sflag [#allocation9], %s687
        %s689 = sand.u32 %s350, 1
        %s690 = smul.addr %s689, 16
        %s691 = scalar_lea.vmem [#allocation21], %s690
        %p692 = pneg %p389
        %p693 = pneg %p386
        %s694 = sand.u32 %s54, 1
        %s695 = scalar_lea.sflag [#allocation23], %s694
        %s696 = sand.u32 %s376, 1
        %s697 = smul.addr %s696, 16
        %s698 = scalar_lea.vmem [#allocation22], %s697
        %p699 = pneg %p415
        %p700 = pneg %p412
        %s701 = sand.u32 %s54, 1
        %s702 = scalar_lea.sflag [#allocation23], %s701
        %s703 = sand.u32 %s402, 1
        %s704 = smul.addr %s703, 8
        %s705 = scalar_lea.vmem [#allocation24], %s704
        %s706 = smul.u32 8, %s54
        %s707 = smul.u32 %s54, 8
        %s708 = sld [smem:[#allocation5 + %s707]]
        %s709 = scalar_lea.hbm %s10, %s708
        // Predicated region
        $region105: #{tpu_custom_call.1} parent=71 // pred_check
          _
        $region106: #{tpu_custom_call.1} parent=71 // pred_check_branch
          %711 = sbr.rel target = $region108
        $region107: #{tpu_custom_call.1} parent=71 // pred_region
          %712 = sst [smem:[#allocation27]] [#allocation26]
          %713 = sst [smem:[#allocation28]] [#allocation25]
        $region108: #{tpu_custom_call.1} parent=71 // pred_fallthru
          _
        %715 = shalt.err (0)
        %s717 = sshll.u32 %s709, 4
        %s718 = int_to_ptr.hbm [resolvable:$true] %s717
        %s719 = sshll.u32 [#allocation2], 4
        %s720 = int_to_ptr.vmem [resolvable:$true] %s719
        %722 = dma.hbm_to_vmem [thread:$0]  %s718, 16, %s720, [#allocation3]
        %s723 = sadd.s32 %s707, 1
        %s724 = sld [smem:[#allocation5 + %s723]]
        %s725 = scalar_lea.hbm %s10, %s724
        %s726 = scalar_lea.vmem [#allocation2], 1
        %s727 = scalar_lea.sflag [#allocation3], 1
        // Predicated region
        $region109: #{tpu_custom_call.1} parent=71 // pred_check
          _
        $region110: #{tpu_custom_call.1} parent=71 // pred_check_branch
          %729 = sbr.rel target = $region112
        $region111: #{tpu_custom_call.1} parent=71 // pred_region
          %730 = sst [smem:[#allocation27]] [#allocation30]
          %731 = sst [smem:[#allocation28]] [#allocation29]
        $region112: #{tpu_custom_call.1} parent=71 // pred_fallthru
          _
        %733 = shalt.err (0)
        %s735 = sshll.u32 %s725, 4
        %s736 = int_to_ptr.hbm [resolvable:$true] %s735
        %s737 = sshll.u32 %s726, 4
        %s738 = int_to_ptr.vmem [resolvable:$true] %s737
        %740 = dma.hbm_to_vmem [thread:$0]  %s736, 16, %s738, %s727
        %s741 = sadd.s32 %s707, 2
        %s742 = sld [smem:[#allocation5 + %s741]]
        %s743 = scalar_lea.hbm %s10, %s742
        %s744 = scalar_lea.vmem [#allocation2], 2
        %s745 = scalar_lea.sflag [#allocation3], 2
        // Predicated region
        $region113: #{tpu_custom_call.1} parent=71 // pred_check
          _
        $region114: #{tpu_custom_call.1} parent=71 // pred_check_branch
          %747 = sbr.rel target = $region116
        $region115: #{tpu_custom_call.1} parent=71 // pred_region
          %748 = sst [smem:[#allocation27]] [#allocation32]
          %749 = sst [smem:[#allocation28]] [#allocation31]
        $region116: #{tpu_custom_call.1} parent=71 // pred_fallthru
          _
        %751 = shalt.err (0)
        %s753 = sshll.u32 %s743, 4
        %s754 = int_to_ptr.hbm [resolvable:$true] %s753
        %s755 = sshll.u32 %s744, 4
        %s756 = int_to_ptr.vmem [resolvable:$true] %s755
        %758 = dma.hbm_to_vmem [thread:$0]  %s754, 16, %s756, %s745
        %s759 = sadd.s32 %s707, 3
        %s760 = sld [smem:[#allocation5 + %s759]]
        %s761 = scalar_lea.hbm %s10, %s760
        %s762 = scalar_lea.vmem [#allocation2], 3
        %s763 = scalar_lea.sflag [#allocation3], 3
        // Predicated region
        $region117: #{tpu_custom_call.1} parent=71 // pred_check
          _
        $region118: #{tpu_custom_call.1} parent=71 // pred_check_branch
          %765 = sbr.rel target = $region120
        $region119: #{tpu_custom_call.1} parent=71 // pred_region
          %766 = sst [smem:[#allocation27]] [#allocation34]
          %767 = sst [smem:[#allocation28]] [#allocation33]
        $region120: #{tpu_custom_call.1} parent=71 // pred_fallthru
          _
        %769 = shalt.err (0)
        %s771 = sshll.u32 %s761, 4
        %s772 = int_to_ptr.hbm [resolvable:$true] %s771
        %s773 = sshll.u32 %s762, 4
        %s774 = int_to_ptr.vmem [resolvable:$true] %s773
        %776 = dma.hbm_to_vmem [thread:$0]  %s772, 16, %s774, %s763
        %s777 = sadd.s32 %s707, 4
        %s778 = sld [smem:[#allocation5 + %s777]]
        %s779 = scalar_lea.hbm %s10, %s778
        %s780 = scalar_lea.vmem [#allocation2], 4
        %s781 = scalar_lea.sflag [#allocation3], 4
        // Predicated region
        $region121: #{tpu_custom_call.1} parent=71 // pred_check
          _
        $region122: #{tpu_custom_call.1} parent=71 // pred_check_branch
          %783 = sbr.rel target = $region124
        $region123: #{tpu_custom_call.1} parent=71 // pred_region
          %784 = sst [smem:[#allocation27]] [#allocation36]
          %785 = sst [smem:[#allocation28]] [#allocation35]
        $region124: #{tpu_custom_call.1} parent=71 // pred_fallthru
          _
        %787 = shalt.err (0)
        %s789 = sshll.u32 %s779, 4
        %s790 = int_to_ptr.hbm [resolvable:$true] %s789
        %s791 = sshll.u32 %s780, 4
        %s792 = int_to_ptr.vmem [resolvable:$true] %s791
        %794 = dma.hbm_to_vmem [thread:$0]  %s790, 16, %s792, %s781
        %s795 = sadd.s32 %s707, 5
        %s796 = sld [smem:[#allocation5 + %s795]]
        %s797 = scalar_lea.hbm %s10, %s796
        %s798 = scalar_lea.vmem [#allocation2], 5
        %s799 = scalar_lea.sflag [#allocation3], 5
        // Predicated region
        $region125: #{tpu_custom_call.1} parent=71 // pred_check
          _
        $region126: #{tpu_custom_call.1} parent=71 // pred_check_branch
          %801 = sbr.rel target = $region128
        $region127: #{tpu_custom_call.1} parent=71 // pred_region
          %802 = sst [smem:[#allocation27]] [#allocation38]
          %803 = sst [smem:[#allocation28]] [#allocation37]
        $region128: #{tpu_custom_call.1} parent=71 // pred_fallthru
          _
        %805 = shalt.err (0)
        %s807 = sshll.u32 %s797, 4
        %s808 = int_to_ptr.hbm [resolvable:$true] %s807
        %s809 = sshll.u32 %s798, 4
        %s810 = int_to_ptr.vmem [resolvable:$true] %s809
        %812 = dma.hbm_to_vmem [thread:$0]  %s808, 16, %s810, %s799
        %s813 = sadd.s32 %s707, 6
        %s814 = sld [smem:[#allocation5 + %s813]]
        %s815 = scalar_lea.hbm %s10, %s814
        %s816 = scalar_lea.vmem [#allocation2], 6
        %s817 = scalar_lea.sflag [#allocation3], 6
        // Predicated region
        $region129: #{tpu_custom_call.1} parent=71 // pred_check
          _
        $region130: #{tpu_custom_call.1} parent=71 // pred_check_branch
          %819 = sbr.rel target = $region132
        $region131: #{tpu_custom_call.1} parent=71 // pred_region
          %820 = sst [smem:[#allocation27]] [#allocation40]
          %821 = sst [smem:[#allocation28]] [#allocation39]
        $region132: #{tpu_custom_call.1} parent=71 // pred_fallthru
          _
        %823 = shalt.err (0)
        %s825 = sshll.u32 %s815, 4
        %s826 = int_to_ptr.hbm [resolvable:$true] %s825
        %s827 = sshll.u32 %s816, 4
        %s828 = int_to_ptr.vmem [resolvable:$true] %s827
        %830 = dma.hbm_to_vmem [thread:$0]  %s826, 16, %s828, %s817
        %s831 = sadd.s32 %s707, 7
        %s832 = sld [smem:[#allocation5 + %s831]]
        %s833 = scalar_lea.hbm %s10, %s832
        %s834 = scalar_lea.vmem [#allocation2], 7
        %s835 = scalar_lea.sflag [#allocation3], 7
        // Predicated region
        $region133: #{tpu_custom_call.1} parent=71 // pred_check
          _
        $region134: #{tpu_custom_call.1} parent=71 // pred_check_branch
          %837 = sbr.rel target = $region136
        $region135: #{tpu_custom_call.1} parent=71 // pred_region
          %838 = sst [smem:[#allocation27]] [#allocation42]
          %839 = sst [smem:[#allocation28]] [#allocation41]
        $region136: #{tpu_custom_call.1} parent=71 // pred_fallthru
          _
        %841 = shalt.err (0)
        %s843 = sshll.u32 %s833, 4
        %s844 = int_to_ptr.hbm [resolvable:$true] %s843
        %s845 = sshll.u32 %s834, 4
        %s846 = int_to_ptr.vmem [resolvable:$true] %s845
        %848 = dma.hbm_to_vmem [thread:$0]  %s844, 16, %s846, %s835
        %v849 = vld [vmem:[%s593] sm:$0xff]
        %v850 = vld [vmem:[%s593 + $0x8] sm:$0xff]
        %v851 = vld [vmem:[%s593 + $0x10] sm:$0xff]
        %v852 = vld [vmem:[%s593 + $0x18] sm:$0xff]
        %v853 = vld [vmem:[%s593 + $0x20] sm:$0xff]
        %v854 = vld [vmem:[%s593 + $0x28] sm:$0xff]
        %v855 = vld [vmem:[%s593 + $0x30] sm:$0xff]
        %v856 = vld [vmem:[%s593 + $0x38] sm:$0xff]
        %v857 = vld [vmem:[%s593 + $0x40] sm:$0xff]
        %v858 = vld [vmem:[%s593 + $0x48] sm:$0xff]
        %v859 = vld [vmem:[%s593 + $0x50] sm:$0xff]
        %v860 = vld [vmem:[%s593 + $0x58] sm:$0xff]
        %v861 = vld [vmem:[%s593 + $0x60] sm:$0xff]
        %v862 = vld [vmem:[%s593 + $0x68] sm:$0xff]
        %v863 = vld [vmem:[%s593 + $0x70] sm:$0xff]
        %v864 = vld [vmem:[%s593 + $0x78] sm:$0xff]
        %v865 = vld [vmem:[%s593 + $0x80] sm:$0xff]
        %v866 = vld [vmem:[%s593 + $0x88] sm:$0xff]
        %v867 = vld [vmem:[%s593 + $0x90] sm:$0xff]
        %v868 = vld [vmem:[%s593 + $0x98] sm:$0xff]
        %v869 = vld [vmem:[%s593 + $0xa0] sm:$0xff]
        %v870 = vld [vmem:[%s593 + $0xa8] sm:$0xff]
        %v871 = vld [vmem:[%s593 + $0xb0] sm:$0xff]
        %v872 = vld [vmem:[%s593 + $0xb8] sm:$0xff]
        %v873 = vld [vmem:[%s593 + $0xc0] sm:$0xff]
        %v874 = vld [vmem:[%s593 + $0xc8] sm:$0xff]
        %v875 = vld [vmem:[%s593 + $0xd0] sm:$0xff]
        %v876 = vld [vmem:[%s593 + $0xd8] sm:$0xff]
        %v877 = vld [vmem:[%s593 + $0xe0] sm:$0xff]
        %v878 = vld [vmem:[%s593 + $0xe8] sm:$0xff]
        %v879 = vld [vmem:[%s593 + $0xf0] sm:$0xff]
        %v880 = vld [vmem:[%s593 + $0xf8] sm:$0xff]
        %v881 = vld [vmem:[%s603] sm:$0xff]
        %v882 = vld [vmem:[%s603 + $0x8] sm:$0xff]
        %v883 = vld [vmem:[%s613] sm:$0xff]
        %v884 = vld [vmem:[%s613 + $0x8] sm:$0xff]
        %v885 = vpack.c.bf16 %v881, %v881
        %v886 = vpack.c.bf16 %v882, %v882
        %v887 = vpack.c.bf16 %v851, %v849
        %v888 = vpack.c.bf16 %v852, %v850
        %v889 = vpack.c.bf16 %v855, %v853
        %v890 = vpack.c.bf16 %v856, %v854
        %v891 = vpack.c.bf16 %v859, %v857
        %v892 = vpack.c.bf16 %v860, %v858
        %v893 = vpack.c.bf16 %v863, %v861
        %v894 = vpack.c.bf16 %v864, %v862
        %v895 = vpack.c.bf16 %v867, %v865
        %v896 = vpack.c.bf16 %v868, %v866
        %v897 = vpack.c.bf16 %v871, %v869
        %v898 = vpack.c.bf16 %v872, %v870
        %v899 = vpack.c.bf16 %v875, %v873
        %v900 = vpack.c.bf16 %v876, %v874
        %v901 = vpack.c.bf16 %v879, %v877
        %v902 = vpack.c.bf16 %v880, %v878
        %v903 = vld [vmem:[#allocation13] sm:$0xff]
        %v904 = vld [vmem:[#allocation13 + $0x8] sm:$0xff]
        %v905 = vld [vmem:[#allocation13 + $0x10] sm:$0xff]
        %v906 = vld [vmem:[#allocation13 + $0x18] sm:$0xff]
        %v907 = vld [vmem:[#allocation13 + $0x20] sm:$0xff]
        %v908 = vld [vmem:[#allocation13 + $0x28] sm:$0xff]
        %v909 = vld [vmem:[#allocation13 + $0x30] sm:$0xff]
        %v910 = vld [vmem:[#allocation13 + $0x38] sm:$0xff]
        %v911 = vld [vmem:[#allocation13 + $0x40] sm:$0xff]
        %v912 = vld [vmem:[#allocation13 + $0x48] sm:$0xff]
        %v913 = vld [vmem:[#allocation13 + $0x50] sm:$0xff]
        %v914 = vld [vmem:[#allocation13 + $0x58] sm:$0xff]
        %v915 = vld [vmem:[#allocation13 + $0x60] sm:$0xff]
        %v916 = vld [vmem:[#allocation13 + $0x68] sm:$0xff]
        %v917 = vld [vmem:[#allocation13 + $0x70] sm:$0xff]
        %v918 = vld [vmem:[#allocation13 + $0x78] sm:$0xff]
        %v919 = vld [vmem:[#allocation13 + $0x80] sm:$0xff]
        %v920 = vld [vmem:[#allocation13 + $0x88] sm:$0xff]
        %v921 = vld [vmem:[#allocation13 + $0x90] sm:$0xff]
        %v922 = vld [vmem:[#allocation13 + $0x98] sm:$0xff]
        %v923 = vld [vmem:[#allocation13 + $0xa0] sm:$0xff]
        %v924 = vld [vmem:[#allocation13 + $0xa8] sm:$0xff]
        %v925 = vld [vmem:[#allocation13 + $0xb0] sm:$0xff]
        %v926 = vld [vmem:[#allocation13 + $0xb8] sm:$0xff]
        %v927 = vld [vmem:[#allocation13 + $0xc0] sm:$0xff]
        %v928 = vld [vmem:[#allocation13 + $0xc8] sm:$0xff]
        %v929 = vld [vmem:[#allocation13 + $0xd0] sm:$0xff]
        %v930 = vld [vmem:[#allocation13 + $0xd8] sm:$0xff]
        %v931 = vld [vmem:[#allocation13 + $0xe0] sm:$0xff]
        %v932 = vld [vmem:[#allocation13 + $0xe8] sm:$0xff]
        %v933 = vld [vmem:[#allocation13 + $0xf0] sm:$0xff]
        %v934 = vld [vmem:[#allocation13 + $0xf8] sm:$0xff]
        %v935 = vld [vmem:[%s5] sm:$0x3]
        %v937 = vperm.slane %v935, 0
        %v938 = vperm.slane %v935, 1
        %v973 = vunpack.c.l.b16 %v903
        %v974 = vunpack.c.h.b16 %v903
        %v975 = vunpack.c.l.b16 %v904
        %v976 = vunpack.c.h.b16 %v904
        %v977 = vunpack.c.l.b16 %v905
        %v978 = vunpack.c.h.b16 %v905
        %v979 = vunpack.c.l.b16 %v906
        %v980 = vunpack.c.h.b16 %v906
        %v981 = vunpack.c.l.b16 %v907
        %v982 = vunpack.c.h.b16 %v907
        %v983 = vunpack.c.l.b16 %v908
        %v984 = vunpack.c.h.b16 %v908
        %v985 = vunpack.c.l.b16 %v909
        %v986 = vunpack.c.h.b16 %v909
        %v987 = vunpack.c.l.b16 %v910
        %v988 = vunpack.c.h.b16 %v910
        %v989 = vunpack.c.l.b16 %v911
        %v990 = vunpack.c.h.b16 %v911
        %v991 = vunpack.c.l.b16 %v912
        %v992 = vunpack.c.h.b16 %v912
        %v993 = vunpack.c.l.b16 %v913
        %v994 = vunpack.c.h.b16 %v913
        %v995 = vunpack.c.l.b16 %v914
        %v996 = vunpack.c.h.b16 %v914
        %v997 = vunpack.c.l.b16 %v915
        %v998 = vunpack.c.h.b16 %v915
        %v999 = vunpack.c.l.b16 %v916
        %v1000 = vunpack.c.h.b16 %v916
        %v1001 = vunpack.c.l.b16 %v917
        %v1002 = vunpack.c.h.b16 %v917
        %v1003 = vunpack.c.l.b16 %v918
        %v1004 = vunpack.c.h.b16 %v918
        %v1005 = vunpack.c.l.b16 %v919
        %v1006 = vunpack.c.h.b16 %v919
        %v1007 = vunpack.c.l.b16 %v920
        %v1008 = vunpack.c.h.b16 %v920
        %v1009 = vunpack.c.l.b16 %v921
        %v1010 = vunpack.c.h.b16 %v921
        %v1011 = vunpack.c.l.b16 %v922
        %v1012 = vunpack.c.h.b16 %v922
        %v1013 = vunpack.c.l.b16 %v923
        %v1014 = vunpack.c.h.b16 %v923
        %v1015 = vunpack.c.l.b16 %v924
        %v1016 = vunpack.c.h.b16 %v924
        %v1017 = vunpack.c.l.b16 %v925
        %v1018 = vunpack.c.h.b16 %v925
        %v1019 = vunpack.c.l.b16 %v926
        %v1020 = vunpack.c.h.b16 %v926
        %v1021 = vunpack.c.l.b16 %v927
        %v1022 = vunpack.c.h.b16 %v927
        %v1023 = vunpack.c.l.b16 %v928
        %v1024 = vunpack.c.h.b16 %v928
        %v1025 = vunpack.c.l.b16 %v929
        %v1026 = vunpack.c.h.b16 %v929
        %v1027 = vunpack.c.l.b16 %v930
        %v1028 = vunpack.c.h.b16 %v930
        %v1029 = vunpack.c.l.b16 %v931
        %v1030 = vunpack.c.h.b16 %v931
        %v1031 = vunpack.c.l.b16 %v932
        %v1032 = vunpack.c.h.b16 %v932
        %v1033 = vunpack.c.l.b16 %v933
        %v1034 = vunpack.c.h.b16 %v933
        %v1035 = vunpack.c.l.b16 %v934
        %v1036 = vunpack.c.h.b16 %v934
        %v1037 = vpack.c.b16 %v975, %v973
        %v1038 = vpack.c.b16 %v976, %v974
        %v1039 = vpack.c.b16 %v979, %v977
        %v1040 = vpack.c.b16 %v980, %v978
        %v1041 = vpack.c.b16 %v983, %v981
        %v1042 = vpack.c.b16 %v984, %v982
        %v1043 = vpack.c.b16 %v987, %v985
        %v1044 = vpack.c.b16 %v988, %v986
        %v1045 = vpack.c.b16 %v991, %v989
        %v1046 = vpack.c.b16 %v992, %v990
        %v1047 = vpack.c.b16 %v995, %v993
        %v1048 = vpack.c.b16 %v996, %v994
        %v1049 = vpack.c.b16 %v999, %v997
        %v1050 = vpack.c.b16 %v1000, %v998
        %v1051 = vpack.c.b16 %v1003, %v1001
        %v1052 = vpack.c.b16 %v1004, %v1002
        %v1053 = vpack.c.b16 %v1007, %v1005
        %v1054 = vpack.c.b16 %v1008, %v1006
        %v1055 = vpack.c.b16 %v1011, %v1009
        %v1056 = vpack.c.b16 %v1012, %v1010
        %v1057 = vpack.c.b16 %v1015, %v1013
        %v1058 = vpack.c.b16 %v1016, %v1014
        %v1059 = vpack.c.b16 %v1019, %v1017
        %v1060 = vpack.c.b16 %v1020, %v1018
        %v1061 = vpack.c.b16 %v1023, %v1021
        %v1062 = vpack.c.b16 %v1024, %v1022
        %v1063 = vpack.c.b16 %v1027, %v1025
        %v1064 = vpack.c.b16 %v1028, %v1026
        %v1065 = vpack.c.b16 %v1031, %v1029
        %v1066 = vpack.c.b16 %v1032, %v1030
        %v1067 = vpack.c.b16 %v1035, %v1033
        %v1068 = vpack.c.b16 %v1036, %v1034
        %1101 = vmatpush.bf16.msra.mxu0 %v1051
        %1102 = vmatpush.bf16.msra.mxu0 %v1049
        %1103 = vmatpush.bf16.msra.mxu0 %v1047
        %1104 = vmatpush.bf16.msra.mxu0 %v1045
        %1105 = vmatpush.bf16.msra.mxu0 %v1043
        %1106 = vmatpush.bf16.msra.mxu0 %v1041
        %1107 = vmatpush.bf16.msra.mxu0 %v1039
        %1108 = vmatpush.bf16.msra.mxu0 %v1037
        %1109 = vmatmul.bf16.gmra.mxu0 %v887
        %v1110 = vpop.f32.mrf.mxu0
        %v1111 = vadd.f32 %v937, %v1110
        %v1112 = vpop.f32.mrf.mxu0
        %v1113 = vadd.f32 %v937, %v1112
        %1114 = vmatmul.bf16.gmra.mxu0 %v889
        %v1115 = vpop.f32.mrf.mxu0
        %v1116 = vadd.f32 %v937, %v1115
        %v1117 = vpop.f32.mrf.mxu0
        %v1118 = vadd.f32 %v937, %v1117
        %1119 = vmatmul.bf16.gmra.mxu0 %v891
        %v1120 = vpop.f32.mrf.mxu0
        %v1121 = vadd.f32 %v937, %v1120
        %v1122 = vpop.f32.mrf.mxu0
        %v1123 = vadd.f32 %v937, %v1122
        %1124 = vmatmul.bf16.gmra.mxu0 %v893
        %v1125 = vpop.f32.mrf.mxu0
        %v1126 = vadd.f32 %v937, %v1125
        %v1127 = vpop.f32.mrf.mxu0
        %v1128 = vadd.f32 %v937, %v1127
        %1129 = vmatmul.bf16.gmra.mxu0 %v895
        %v1130 = vpop.f32.mrf.mxu0
        %v1131 = vadd.f32 %v937, %v1130
        %v1132 = vpop.f32.mrf.mxu0
        %v1133 = vadd.f32 %v937, %v1132
        %1134 = vmatmul.bf16.gmra.mxu0 %v897
        %v1135 = vpop.f32.mrf.mxu0
        %v1136 = vadd.f32 %v937, %v1135
        %v1137 = vpop.f32.mrf.mxu0
        %v1138 = vadd.f32 %v937, %v1137
        %1139 = vmatmul.bf16.gmra.mxu0 %v899
        %v1140 = vpop.f32.mrf.mxu0
        %v1141 = vadd.f32 %v937, %v1140
        %v1142 = vpop.f32.mrf.mxu0
        %v1143 = vadd.f32 %v937, %v1142
        %1144 = vmatmul.bf16.gmra.mxu0 %v901
        %v1145 = vpop.f32.mrf.mxu0
        %v1146 = vadd.f32 %v937, %v1145
        %v1147 = vpop.f32.mrf.mxu0
        %v1148 = vadd.f32 %v937, %v1147
        %1149 = vdwg.mxu0
        %1150 = vmatpush.bf16.msra.mxu0 %v1067
        %1151 = vmatpush.bf16.msra.mxu0 %v1065
        %1152 = vmatpush.bf16.msra.mxu0 %v1063
        %1153 = vmatpush.bf16.msra.mxu0 %v1061
        %1154 = vmatpush.bf16.msra.mxu0 %v1059
        %1155 = vmatpush.bf16.msra.mxu0 %v1057
        %1156 = vmatpush.bf16.msra.mxu0 %v1055
        %1157 = vmatpush.bf16.msra.mxu0 %v1053
        %1158 = vmatmul.bf16.gmra.mxu0 %v888
        %v1159 = vpop.f32.mrf.mxu0
        %v1160 = vadd.f32 %v1111, %v1159
        %v1161 = vpop.f32.mrf.mxu0
        %v1162 = vadd.f32 %v1113, %v1161
        %1163 = vmatmul.bf16.gmra.mxu0 %v890
        %v1164 = vpop.f32.mrf.mxu0
        %v1165 = vadd.f32 %v1116, %v1164
        %v1166 = vpop.f32.mrf.mxu0
        %v1167 = vadd.f32 %v1118, %v1166
        %1168 = vmatmul.bf16.gmra.mxu0 %v892
        %v1169 = vpop.f32.mrf.mxu0
        %v1170 = vadd.f32 %v1121, %v1169
        %v1171 = vpop.f32.mrf.mxu0
        %v1172 = vadd.f32 %v1123, %v1171
        %1173 = vmatmul.bf16.gmra.mxu0 %v894
        %v1174 = vpop.f32.mrf.mxu0
        %v1175 = vadd.f32 %v1126, %v1174
        %v1176 = vpop.f32.mrf.mxu0
        %v1177 = vadd.f32 %v1128, %v1176
        %1178 = vmatmul.bf16.gmra.mxu0 %v896
        %v1179 = vpop.f32.mrf.mxu0
        %v1180 = vadd.f32 %v1131, %v1179
        %v1181 = vpop.f32.mrf.mxu0
        %v1182 = vadd.f32 %v1133, %v1181
        %1183 = vmatmul.bf16.gmra.mxu0 %v898
        %v1184 = vpop.f32.mrf.mxu0
        %v1185 = vadd.f32 %v1136, %v1184
        %v1186 = vpop.f32.mrf.mxu0
        %v1187 = vadd.f32 %v1138, %v1186
        %1188 = vmatmul.bf16.gmra.mxu0 %v900
        %v1189 = vpop.f32.mrf.mxu0
        %v1190 = vadd.f32 %v1141, %v1189
        %v1191 = vpop.f32.mrf.mxu0
        %v1192 = vadd.f32 %v1143, %v1191
        %1193 = vmatmul.bf16.gmra.mxu0 %v902
        %v1194 = vpop.f32.mrf.mxu0
        %v1195 = vadd.f32 %v1146, %v1194
        %v1196 = vpop.f32.mrf.mxu0
        %v1197 = vadd.f32 %v1148, %v1196
        %1198 = vdwg.mxu0
        %1199 = vmatpush.bf16.msra.mxu0 %v1052
        %1200 = vmatpush.bf16.msra.mxu0 %v1050
        %1201 = vmatpush.bf16.msra.mxu0 %v1048
        %1202 = vmatpush.bf16.msra.mxu0 %v1046
        %1203 = vmatpush.bf16.msra.mxu0 %v1044
        %1204 = vmatpush.bf16.msra.mxu0 %v1042
        %1205 = vmatpush.bf16.msra.mxu0 %v1040
        %1206 = vmatpush.bf16.msra.mxu0 %v1038
        %1207 = vmatmul.bf16.gmra.mxu0 %v887
        %v1208 = vpop.f32.mrf.mxu0
        %v1209 = vadd.f32 %v938, %v1208
        %v1210 = vpop.f32.mrf.mxu0
        %v1211 = vadd.f32 %v938, %v1210
        %1212 = vmatmul.bf16.gmra.mxu0 %v889
        %v1213 = vpop.f32.mrf.mxu0
        %v1214 = vadd.f32 %v938, %v1213
        %v1215 = vpop.f32.mrf.mxu0
        %v1216 = vadd.f32 %v938, %v1215
        %1217 = vmatmul.bf16.gmra.mxu0 %v891
        %v1218 = vpop.f32.mrf.mxu0
        %v1219 = vadd.f32 %v938, %v1218
        %v1220 = vpop.f32.mrf.mxu0
        %v1221 = vadd.f32 %v938, %v1220
        %1222 = vmatmul.bf16.gmra.mxu0 %v893
        %v1223 = vpop.f32.mrf.mxu0
        %v1224 = vadd.f32 %v938, %v1223
        %v1225 = vpop.f32.mrf.mxu0
        %v1226 = vadd.f32 %v938, %v1225
        %1227 = vmatmul.bf16.gmra.mxu0 %v895
        %v1228 = vpop.f32.mrf.mxu0
        %v1229 = vadd.f32 %v938, %v1228
        %v1230 = vpop.f32.mrf.mxu0
        %v1231 = vadd.f32 %v938, %v1230
        %1232 = vmatmul.bf16.gmra.mxu0 %v897
        %v1233 = vpop.f32.mrf.mxu0
        %v1234 = vadd.f32 %v938, %v1233
        %v1235 = vpop.f32.mrf.mxu0
        %v1236 = vadd.f32 %v938, %v1235
        %1237 = vmatmul.bf16.gmra.mxu0 %v899
        %v1238 = vpop.f32.mrf.mxu0
        %v1239 = vadd.f32 %v938, %v1238
        %v1240 = vpop.f32.mrf.mxu0
        %v1241 = vadd.f32 %v938, %v1240
        %1242 = vmatmul.bf16.gmra.mxu0 %v901
        %v1243 = vpop.f32.mrf.mxu0
        %v1244 = vadd.f32 %v938, %v1243
        %v1245 = vpop.f32.mrf.mxu0
        %v1246 = vadd.f32 %v938, %v1245
        %1247 = vdwg.mxu0
        %1248 = vmatpush.bf16.msra.mxu0 %v1068
        %1249 = vmatpush.bf16.msra.mxu0 %v1066
        %1250 = vmatpush.bf16.msra.mxu0 %v1064
        %1251 = vmatpush.bf16.msra.mxu0 %v1062
        %1252 = vmatpush.bf16.msra.mxu0 %v1060
        %1253 = vmatpush.bf16.msra.mxu0 %v1058
        %1254 = vmatpush.bf16.msra.mxu0 %v1056
        %1255 = vmatpush.bf16.msra.mxu0 %v1054
        %1256 = vmatmul.bf16.gmra.mxu0 %v888
        %v1257 = vpop.f32.mrf.mxu0
        %v1258 = vadd.f32 %v1209, %v1257
        %v1259 = vpop.f32.mrf.mxu0
        %v1260 = vadd.f32 %v1211, %v1259
        %1261 = vmatmul.bf16.gmra.mxu0 %v890
        %v1262 = vpop.f32.mrf.mxu0
        %v1263 = vadd.f32 %v1214, %v1262
        %v1264 = vpop.f32.mrf.mxu0
        %v1265 = vadd.f32 %v1216, %v1264
        %1266 = vmatmul.bf16.gmra.mxu0 %v892
        %v1267 = vpop.f32.mrf.mxu0
        %v1268 = vadd.f32 %v1219, %v1267
        %v1269 = vpop.f32.mrf.mxu0
        %v1270 = vadd.f32 %v1221, %v1269
        %1271 = vmatmul.bf16.gmra.mxu0 %v894
        %v1272 = vpop.f32.mrf.mxu0
        %v1273 = vadd.f32 %v1224, %v1272
        %v1274 = vpop.f32.mrf.mxu0
        %v1275 = vadd.f32 %v1226, %v1274
        %1276 = vmatmul.bf16.gmra.mxu0 %v896
        %v1277 = vpop.f32.mrf.mxu0
        %v1278 = vadd.f32 %v1229, %v1277
        %v1279 = vpop.f32.mrf.mxu0
        %v1280 = vadd.f32 %v1231, %v1279
        %1281 = vmatmul.bf16.gmra.mxu0 %v898
        %v1282 = vpop.f32.mrf.mxu0
        %v1283 = vadd.f32 %v1234, %v1282
        %v1284 = vpop.f32.mrf.mxu0
        %v1285 = vadd.f32 %v1236, %v1284
        %1286 = vmatmul.bf16.gmra.mxu0 %v900
        %v1287 = vpop.f32.mrf.mxu0
        %v1288 = vadd.f32 %v1239, %v1287
        %v1289 = vpop.f32.mrf.mxu0
        %v1290 = vadd.f32 %v1241, %v1289
        %1291 = vmatmul.bf16.gmra.mxu0 %v902
        %v1292 = vpop.f32.mrf.mxu0
        %v1293 = vadd.f32 %v1244, %v1292
        %v1294 = vpop.f32.mrf.mxu0
        %v1295 = vadd.f32 %v1246, %v1294
        %1296 = vdwg.mxu0
        %v1297 = vld [vmem:[#allocation15] sm:$0xff]
        %v1298 = vld [vmem:[#allocation15 + $0x8] sm:$0xff]
        %v1299 = vld [vmem:[#allocation15 + $0x10] sm:$0xff]
        %v1300 = vld [vmem:[#allocation15 + $0x18] sm:$0xff]
        %v1301 = vld [vmem:[#allocation15 + $0x20] sm:$0xff]
        %v1302 = vld [vmem:[#allocation15 + $0x28] sm:$0xff]
        %v1303 = vld [vmem:[#allocation15 + $0x30] sm:$0xff]
        %v1304 = vld [vmem:[#allocation15 + $0x38] sm:$0xff]
        %v1305 = vld [vmem:[#allocation15 + $0x40] sm:$0xff]
        %v1306 = vld [vmem:[#allocation15 + $0x48] sm:$0xff]
        %v1307 = vld [vmem:[#allocation15 + $0x50] sm:$0xff]
        %v1308 = vld [vmem:[#allocation15 + $0x58] sm:$0xff]
        %v1309 = vld [vmem:[#allocation15 + $0x60] sm:$0xff]
        %v1310 = vld [vmem:[#allocation15 + $0x68] sm:$0xff]
        %v1311 = vld [vmem:[#allocation15 + $0x70] sm:$0xff]
        %v1312 = vld [vmem:[#allocation15 + $0x78] sm:$0xff]
        %v1313 = vld [vmem:[#allocation15 + $0x80] sm:$0xff]
        %v1314 = vld [vmem:[#allocation15 + $0x88] sm:$0xff]
        %v1315 = vld [vmem:[#allocation15 + $0x90] sm:$0xff]
        %v1316 = vld [vmem:[#allocation15 + $0x98] sm:$0xff]
        %v1317 = vld [vmem:[#allocation15 + $0xa0] sm:$0xff]
        %v1318 = vld [vmem:[#allocation15 + $0xa8] sm:$0xff]
        %v1319 = vld [vmem:[#allocation15 + $0xb0] sm:$0xff]
        %v1320 = vld [vmem:[#allocation15 + $0xb8] sm:$0xff]
        %v1321 = vld [vmem:[#allocation15 + $0xc0] sm:$0xff]
        %v1322 = vld [vmem:[#allocation15 + $0xc8] sm:$0xff]
        %v1323 = vld [vmem:[#allocation15 + $0xd0] sm:$0xff]
        %v1324 = vld [vmem:[#allocation15 + $0xd8] sm:$0xff]
        %v1325 = vld [vmem:[#allocation15 + $0xe0] sm:$0xff]
        %v1326 = vld [vmem:[#allocation15 + $0xe8] sm:$0xff]
        %v1327 = vld [vmem:[#allocation15 + $0xf0] sm:$0xff]
        %v1328 = vld [vmem:[#allocation15 + $0xf8] sm:$0xff]
        %v1329 = vld [vmem:[%s7] sm:$0x3]
        %v1331 = vperm.slane %v1329, 0
        %v1332 = vperm.slane %v1329, 1
        %v1367 = vunpack.c.l.b16 %v1297
        %v1368 = vunpack.c.h.b16 %v1297
        %v1369 = vunpack.c.l.b16 %v1298
        %v1370 = vunpack.c.h.b16 %v1298
        %v1371 = vunpack.c.l.b16 %v1299
        %v1372 = vunpack.c.h.b16 %v1299
        %v1373 = vunpack.c.l.b16 %v1300
        %v1374 = vunpack.c.h.b16 %v1300
        %v1375 = vunpack.c.l.b16 %v1301
        %v1376 = vunpack.c.h.b16 %v1301
        %v1377 = vunpack.c.l.b16 %v1302
        %v1378 = vunpack.c.h.b16 %v1302
        %v1379 = vunpack.c.l.b16 %v1303
        %v1380 = vunpack.c.h.b16 %v1303
        %v1381 = vunpack.c.l.b16 %v1304
        %v1382 = vunpack.c.h.b16 %v1304
        %v1383 = vunpack.c.l.b16 %v1305
        %v1384 = vunpack.c.h.b16 %v1305
        %v1385 = vunpack.c.l.b16 %v1306
        %v1386 = vunpack.c.h.b16 %v1306
        %v1387 = vunpack.c.l.b16 %v1307
        %v1388 = vunpack.c.h.b16 %v1307
        %v1389 = vunpack.c.l.b16 %v1308
        %v1390 = vunpack.c.h.b16 %v1308
        %v1391 = vunpack.c.l.b16 %v1309
        %v1392 = vunpack.c.h.b16 %v1309
        %v1393 = vunpack.c.l.b16 %v1310
        %v1394 = vunpack.c.h.b16 %v1310
        %v1395 = vunpack.c.l.b16 %v1311
        %v1396 = vunpack.c.h.b16 %v1311
        %v1397 = vunpack.c.l.b16 %v1312
        %v1398 = vunpack.c.h.b16 %v1312
        %v1399 = vunpack.c.l.b16 %v1313
        %v1400 = vunpack.c.h.b16 %v1313
        %v1401 = vunpack.c.l.b16 %v1314
        %v1402 = vunpack.c.h.b16 %v1314
        %v1403 = vunpack.c.l.b16 %v1315
        %v1404 = vunpack.c.h.b16 %v1315
        %v1405 = vunpack.c.l.b16 %v1316
        %v1406 = vunpack.c.h.b16 %v1316
        %v1407 = vunpack.c.l.b16 %v1317
        %v1408 = vunpack.c.h.b16 %v1317
        %v1409 = vunpack.c.l.b16 %v1318
        %v1410 = vunpack.c.h.b16 %v1318
        %v1411 = vunpack.c.l.b16 %v1319
        %v1412 = vunpack.c.h.b16 %v1319
        %v1413 = vunpack.c.l.b16 %v1320
        %v1414 = vunpack.c.h.b16 %v1320
        %v1415 = vunpack.c.l.b16 %v1321
        %v1416 = vunpack.c.h.b16 %v1321
        %v1417 = vunpack.c.l.b16 %v1322
        %v1418 = vunpack.c.h.b16 %v1322
        %v1419 = vunpack.c.l.b16 %v1323
        %v1420 = vunpack.c.h.b16 %v1323
        %v1421 = vunpack.c.l.b16 %v1324
        %v1422 = vunpack.c.h.b16 %v1324
        %v1423 = vunpack.c.l.b16 %v1325
        %v1424 = vunpack.c.h.b16 %v1325
        %v1425 = vunpack.c.l.b16 %v1326
        %v1426 = vunpack.c.h.b16 %v1326
        %v1427 = vunpack.c.l.b16 %v1327
        %v1428 = vunpack.c.h.b16 %v1327
        %v1429 = vunpack.c.l.b16 %v1328
        %v1430 = vunpack.c.h.b16 %v1328
        %v1431 = vpack.c.b16 %v1369, %v1367
        %v1432 = vpack.c.b16 %v1370, %v1368
        %v1433 = vpack.c.b16 %v1373, %v1371
        %v1434 = vpack.c.b16 %v1374, %v1372
        %v1435 = vpack.c.b16 %v1377, %v1375
        %v1436 = vpack.c.b16 %v1378, %v1376
        %v1437 = vpack.c.b16 %v1381, %v1379
        %v1438 = vpack.c.b16 %v1382, %v1380
        %v1439 = vpack.c.b16 %v1385, %v1383
        %v1440 = vpack.c.b16 %v1386, %v1384
        %v1441 = vpack.c.b16 %v1389, %v1387
        %v1442 = vpack.c.b16 %v1390, %v1388
        %v1443 = vpack.c.b16 %v1393, %v1391
        %v1444 = vpack.c.b16 %v1394, %v1392
        %v1445 = vpack.c.b16 %v1397, %v1395
        %v1446 = vpack.c.b16 %v1398, %v1396
        %v1447 = vpack.c.b16 %v1401, %v1399
        %v1448 = vpack.c.b16 %v1402, %v1400
        %v1449 = vpack.c.b16 %v1405, %v1403
        %v1450 = vpack.c.b16 %v1406, %v1404
        %v1451 = vpack.c.b16 %v1409, %v1407
        %v1452 = vpack.c.b16 %v1410, %v1408
        %v1453 = vpack.c.b16 %v1413, %v1411
        %v1454 = vpack.c.b16 %v1414, %v1412
        %v1455 = vpack.c.b16 %v1417, %v1415
        %v1456 = vpack.c.b16 %v1418, %v1416
        %v1457 = vpack.c.b16 %v1421, %v1419
        %v1458 = vpack.c.b16 %v1422, %v1420
        %v1459 = vpack.c.b16 %v1425, %v1423
        %v1460 = vpack.c.b16 %v1426, %v1424
        %v1461 = vpack.c.b16 %v1429, %v1427
        %v1462 = vpack.c.b16 %v1430, %v1428
        %1495 = vmatpush.bf16.msra.mxu0 %v1445
        %1496 = vmatpush.bf16.msra.mxu0 %v1443
        %1497 = vmatpush.bf16.msra.mxu0 %v1441
        %1498 = vmatpush.bf16.msra.mxu0 %v1439
        %1499 = vmatpush.bf16.msra.mxu0 %v1437
        %1500 = vmatpush.bf16.msra.mxu0 %v1435
        %1501 = vmatpush.bf16.msra.mxu0 %v1433
        %1502 = vmatpush.bf16.msra.mxu0 %v1431
        %1503 = vmatmul.bf16.gmra.mxu0 %v885
        %v1504 = vpop.f32.mrf.mxu0
        %v1505 = vadd.f32 %v1331, %v1504
        %v1506 = vpop.f32.mrf.mxu0
        %1507 = vdwg.mxu0
        %1508 = vmatpush.bf16.msra.mxu0 %v1461
        %1509 = vmatpush.bf16.msra.mxu0 %v1459
        %1510 = vmatpush.bf16.msra.mxu0 %v1457
        %1511 = vmatpush.bf16.msra.mxu0 %v1455
        %1512 = vmatpush.bf16.msra.mxu0 %v1453
        %1513 = vmatpush.bf16.msra.mxu0 %v1451
        %1514 = vmatpush.bf16.msra.mxu0 %v1449
        %1515 = vmatpush.bf16.msra.mxu0 %v1447
        %1516 = vmatmul.bf16.gmra.mxu0 %v886
        %v1517 = vpop.f32.mrf.mxu0
        %v1518 = vadd.f32 %v1505, %v1517
        %v1519 = vpop.f32.mrf.mxu0
        %1520 = vdwg.mxu0
        %1521 = vmatpush.bf16.msra.mxu0 %v1446
        %1522 = vmatpush.bf16.msra.mxu0 %v1444
        %1523 = vmatpush.bf16.msra.mxu0 %v1442
        %1524 = vmatpush.bf16.msra.mxu0 %v1440
        %1525 = vmatpush.bf16.msra.mxu0 %v1438
        %1526 = vmatpush.bf16.msra.mxu0 %v1436
        %1527 = vmatpush.bf16.msra.mxu0 %v1434
        %1528 = vmatpush.bf16.msra.mxu0 %v1432
        %1529 = vmatmul.bf16.gmra.mxu0 %v885
        %v1530 = vpop.f32.mrf.mxu0
        %v1531 = vadd.f32 %v1332, %v1530
        %v1532 = vpop.f32.mrf.mxu0
        %1533 = vdwg.mxu0
        %1534 = vmatpush.bf16.msra.mxu0 %v1462
        %1535 = vmatpush.bf16.msra.mxu0 %v1460
        %1536 = vmatpush.bf16.msra.mxu0 %v1458
        %1537 = vmatpush.bf16.msra.mxu0 %v1456
        %1538 = vmatpush.bf16.msra.mxu0 %v1454
        %1539 = vmatpush.bf16.msra.mxu0 %v1452
        %1540 = vmatpush.bf16.msra.mxu0 %v1450
        %1541 = vmatpush.bf16.msra.mxu0 %v1448
        %1542 = vmatmul.bf16.gmra.mxu0 %v886
        %v1543 = vpop.f32.mrf.mxu0
        %v1544 = vadd.f32 %v1531, %v1543
        %v1545 = vpop.f32.mrf.mxu0
        %1546 = vdwg.mxu0
        %v1549 = vrot.slane %v1544, 7
        %vm1550 = vcmask 1040384
        %v1551 = vsel %vm1550, %v1518, %v1549
        %vm1552 = vcmask 1041409
        %v1553 = vsel %vm1552, %v1518, %v1549
        %v1554 = vrot.slane %v1553, 1
        %vm1555 = vcmask 1042434
        %v1556 = vsel %vm1555, %v1518, %v1549
        %v1557 = vrot.slane %v1556, 2
        %vm1558 = vcmask 1043459
        %v1559 = vsel %vm1558, %v1518, %v1549
        %v1560 = vrot.slane %v1559, 3
        %vm1561 = vcmask 1044484
        %v1562 = vsel %vm1561, %v1518, %v1549
        %v1563 = vrot.slane %v1562, 4
        %vm1564 = vcmask 1045509
        %v1565 = vsel %vm1564, %v1518, %v1549
        %v1566 = vrot.slane %v1565, 5
        %vm1567 = vcmask 1046534
        %v1568 = vsel %vm1567, %v1518, %v1549
        %v1569 = vrot.slane %v1568, 6
        %vm1570 = vcmask 1046528
        %v1571 = vsel %vm1570, %v1549, %v1518
        %v1572 = vrot.slane %v1571, 7
        %v1573 = vperm.slane %v1551, 0
        %v1574 = vperm.slane %v1551, 1
        %v1575 = vperm.slane %v1554, 0
        %v1576 = vperm.slane %v1554, 1
        %v1577 = vperm.slane %v1557, 0
        %v1578 = vperm.slane %v1557, 1
        %v1579 = vperm.slane %v1560, 0
        %v1580 = vperm.slane %v1560, 1
        %v1581 = vperm.slane %v1563, 0
        %v1582 = vperm.slane %v1563, 1
        %v1583 = vperm.slane %v1566, 0
        %v1584 = vperm.slane %v1566, 1
        %v1585 = vperm.slane %v1569, 0
        %v1586 = vperm.slane %v1569, 1
        %v1587 = vperm.slane %v1572, 0
        %v1588 = vperm.slane %v1572, 1
        %v1605 = vadd.f32 %v1160, %v1573
        %v1606 = vadd.f32 %v1258, %v1574
        %v1607 = vadd.f32 %v1162, %v1573
        %v1608 = vadd.f32 %v1260, %v1574
        %v1609 = vadd.f32 %v1165, %v1575
        %v1610 = vadd.f32 %v1263, %v1576
        %v1611 = vadd.f32 %v1167, %v1575
        %v1612 = vadd.f32 %v1265, %v1576
        %v1613 = vadd.f32 %v1170, %v1577
        %v1614 = vadd.f32 %v1268, %v1578
        %v1615 = vadd.f32 %v1172, %v1577
        %v1616 = vadd.f32 %v1270, %v1578
        %v1617 = vadd.f32 %v1175, %v1579
        %v1618 = vadd.f32 %v1273, %v1580
        %v1619 = vadd.f32 %v1177, %v1579
        %v1620 = vadd.f32 %v1275, %v1580
        %v1621 = vadd.f32 %v1180, %v1581
        %v1622 = vadd.f32 %v1278, %v1582
        %v1623 = vadd.f32 %v1182, %v1581
        %v1624 = vadd.f32 %v1280, %v1582
        %v1625 = vadd.f32 %v1185, %v1583
        %v1626 = vadd.f32 %v1283, %v1584
        %v1627 = vadd.f32 %v1187, %v1583
        %v1628 = vadd.f32 %v1285, %v1584
        %v1629 = vadd.f32 %v1190, %v1585
        %v1630 = vadd.f32 %v1288, %v1586
        %v1631 = vadd.f32 %v1192, %v1585
        %v1632 = vadd.f32 %v1290, %v1586
        %v1633 = vadd.f32 %v1195, %v1587
        %v1634 = vadd.f32 %v1293, %v1588
        %v1635 = vadd.f32 %v1197, %v1587
        %v1636 = vadd.f32 %v1295, %v1588
        %v1637 = vmax.f32 %v1605, 0.0
        %v1638 = vmax.f32 %v1606, 0.0
        %v1639 = vmax.f32 %v1607, 0.0
        %v1640 = vmax.f32 %v1608, 0.0
        %v1641 = vmax.f32 %v1609, 0.0
        %v1642 = vmax.f32 %v1610, 0.0
        %v1643 = vmax.f32 %v1611, 0.0
        %v1644 = vmax.f32 %v1612, 0.0
        %v1645 = vmax.f32 %v1613, 0.0
        %v1646 = vmax.f32 %v1614, 0.0
        %v1647 = vmax.f32 %v1615, 0.0
        %v1648 = vmax.f32 %v1616, 0.0
        %v1649 = vmax.f32 %v1617, 0.0
        %v1650 = vmax.f32 %v1618, 0.0
        %v1651 = vmax.f32 %v1619, 0.0
        %v1652 = vmax.f32 %v1620, 0.0
        %v1653 = vmax.f32 %v1621, 0.0
        %v1654 = vmax.f32 %v1622, 0.0
        %v1655 = vmax.f32 %v1623, 0.0
        %v1656 = vmax.f32 %v1624, 0.0
        %v1657 = vmax.f32 %v1625, 0.0
        %v1658 = vmax.f32 %v1626, 0.0
        %v1659 = vmax.f32 %v1627, 0.0
        %v1660 = vmax.f32 %v1628, 0.0
        %v1661 = vmax.f32 %v1629, 0.0
        %v1662 = vmax.f32 %v1630, 0.0
        %v1663 = vmax.f32 %v1631, 0.0
        %v1664 = vmax.f32 %v1632, 0.0
        %v1665 = vmax.f32 %v1633, 0.0
        %v1666 = vmax.f32 %v1634, 0.0
        %v1667 = vmax.f32 %v1635, 0.0
        %v1668 = vmax.f32 %v1636, 0.0
        %v1669 = vld [vmem:[%s8] sm:$0x3]
        %v1671 = vperm.slane %v1669, 0
        %v1672 = vperm.slane %v1669, 1
        %v1675 = vmul.f32 %v1637, %v1671
        %v1676 = vmul.f32 %v1638, %v1672
        %v1677 = vmul.f32 %v1639, %v1671
        %v1678 = vmul.f32 %v1640, %v1672
        %v1679 = vmul.f32 %v1641, %v1671
        %v1680 = vmul.f32 %v1642, %v1672
        %v1681 = vmul.f32 %v1643, %v1671
        %v1682 = vmul.f32 %v1644, %v1672
        %v1683 = vmul.f32 %v1645, %v1671
        %v1684 = vmul.f32 %v1646, %v1672
        %v1685 = vmul.f32 %v1647, %v1671
        %v1686 = vmul.f32 %v1648, %v1672
        %v1687 = vmul.f32 %v1649, %v1671
        %v1688 = vmul.f32 %v1650, %v1672
        %v1689 = vmul.f32 %v1651, %v1671
        %v1690 = vmul.f32 %v1652, %v1672
        %v1691 = vmul.f32 %v1653, %v1671
        %v1692 = vmul.f32 %v1654, %v1672
        %v1693 = vmul.f32 %v1655, %v1671
        %v1694 = vmul.f32 %v1656, %v1672
        %v1695 = vmul.f32 %v1657, %v1671
        %v1696 = vmul.f32 %v1658, %v1672
        %v1697 = vmul.f32 %v1659, %v1671
        %v1698 = vmul.f32 %v1660, %v1672
        %v1699 = vmul.f32 %v1661, %v1671
        %v1700 = vmul.f32 %v1662, %v1672
        %v1701 = vmul.f32 %v1663, %v1671
        %v1702 = vmul.f32 %v1664, %v1672
        %v1703 = vmul.f32 %v1665, %v1671
        %v1704 = vmul.f32 %v1666, %v1672
        %v1705 = vmul.f32 %v1667, %v1671
        %v1706 = vmul.f32 %v1668, %v1672
        %v1707 = vadd.f32 %v1675, %v1676
        %1708 = vadd.xlane.f32.xlu0 %v1707
        %v1709 = vpop.xlane.xlu0 %1708
        %v1710 = vadd.f32 %v1677, %v1678
        %1711 = vadd.xlane.f32.xlu0 %v1710
        %v1712 = vpop.xlane.xlu0 %1711
        %v1713 = vadd.f32 %v1679, %v1680
        %1714 = vadd.xlane.f32.xlu0 %v1713
        %v1715 = vpop.xlane.xlu0 %1714
        %v1716 = vadd.f32 %v1681, %v1682
        %1717 = vadd.xlane.f32.xlu0 %v1716
        %v1718 = vpop.xlane.xlu0 %1717
        %v1719 = vadd.f32 %v1683, %v1684
        %1720 = vadd.xlane.f32.xlu0 %v1719
        %v1721 = vpop.xlane.xlu0 %1720
        %v1722 = vadd.f32 %v1685, %v1686
        %1723 = vadd.xlane.f32.xlu0 %v1722
        %v1724 = vpop.xlane.xlu0 %1723
        %v1725 = vadd.f32 %v1687, %v1688
        %1726 = vadd.xlane.f32.xlu0 %v1725
        %v1727 = vpop.xlane.xlu0 %1726
        %v1728 = vadd.f32 %v1689, %v1690
        %1729 = vadd.xlane.f32.xlu0 %v1728
        %v1730 = vpop.xlane.xlu0 %1729
        %v1731 = vadd.f32 %v1691, %v1692
        %1732 = vadd.xlane.f32.xlu0 %v1731
        %v1733 = vpop.xlane.xlu0 %1732
        %v1734 = vadd.f32 %v1693, %v1694
        %1735 = vadd.xlane.f32.xlu0 %v1734
        %v1736 = vpop.xlane.xlu0 %1735
        %v1737 = vadd.f32 %v1695, %v1696
        %1738 = vadd.xlane.f32.xlu0 %v1737
        %v1739 = vpop.xlane.xlu0 %1738
        %v1740 = vadd.f32 %v1697, %v1698
        %1741 = vadd.xlane.f32.xlu0 %v1740
        %v1742 = vpop.xlane.xlu0 %1741
        %v1743 = vadd.f32 %v1699, %v1700
        %1744 = vadd.xlane.f32.xlu0 %v1743
        %v1745 = vpop.xlane.xlu0 %1744
        %v1746 = vadd.f32 %v1701, %v1702
        %1747 = vadd.xlane.f32.xlu0 %v1746
        %v1748 = vpop.xlane.xlu0 %1747
        %v1749 = vadd.f32 %v1703, %v1704
        %1750 = vadd.xlane.f32.xlu0 %v1749
        %v1751 = vpop.xlane.xlu0 %1750
        %v1752 = vadd.f32 %v1705, %v1706
        %1753 = vadd.xlane.f32.xlu0 %v1752
        %v1754 = vpop.xlane.xlu0 %1753
        %v1755 = vld [vmem:[#allocation6] sm:$0x1]
        %v1757 = vperm.slane %v1755, 0
        %1758 = vset.pattern.permute.xlu0 0
        %1759 = vperm.xlu0 %1758, %v1757
        %v1760 = vpop.permute.xlu0 %1759
        %v1762 = vadd.f32 %v1709, %v1760
        %v1763 = vadd.f32 %v1712, %v1760
        %v1764 = vadd.f32 %v1715, %v1760
        %v1765 = vadd.f32 %v1718, %v1760
        %v1766 = vadd.f32 %v1721, %v1760
        %v1767 = vadd.f32 %v1724, %v1760
        %v1768 = vadd.f32 %v1727, %v1760
        %v1769 = vadd.f32 %v1730, %v1760
        %v1770 = vadd.f32 %v1733, %v1760
        %v1771 = vadd.f32 %v1736, %v1760
        %v1772 = vadd.f32 %v1739, %v1760
        %v1773 = vadd.f32 %v1742, %v1760
        %v1774 = vadd.f32 %v1745, %v1760
        %v1775 = vadd.f32 %v1748, %v1760
        %v1776 = vadd.f32 %v1751, %v1760
        %v1777 = vadd.f32 %v1754, %v1760
        %v1794 = vlaneseq
        %v1795 = vand.u32 %v1794, 127
        %v1796 = vperm.slane %v1762, %v1795
        %v1797 = vadd.s32 %v1795, 4294967288
        %v1798 = vperm.slane %v1763, %v1797
        %vm1799 = vcmask 130112
        %v1800 = vsel %vm1799, %v1798, %v1796
        %v1801 = vperm.slane %v1764, %v1795
        %v1802 = vperm.slane %v1765, %v1797
        %v1803 = vsel %vm1799, %v1802, %v1801
        %v1804 = vperm.slane %v1766, %v1795
        %v1805 = vperm.slane %v1767, %v1797
        %v1806 = vsel %vm1799, %v1805, %v1804
        %v1807 = vperm.slane %v1768, %v1795
        %v1808 = vperm.slane %v1769, %v1797
        %v1809 = vsel %vm1799, %v1808, %v1807
        %v1810 = vperm.slane %v1770, %v1795
        %v1811 = vperm.slane %v1771, %v1797
        %v1812 = vsel %vm1799, %v1811, %v1810
        %v1813 = vperm.slane %v1772, %v1795
        %v1814 = vperm.slane %v1773, %v1797
        %v1815 = vsel %vm1799, %v1814, %v1813
        %v1816 = vperm.slane %v1774, %v1795
        %v1817 = vperm.slane %v1775, %v1797
        %v1818 = vsel %vm1799, %v1817, %v1816
        %v1819 = vperm.slane %v1776, %v1795
        %v1820 = vperm.slane %v1777, %v1797
        %v1821 = vsel %vm1799, %v1820, %v1819
        %v1822 = vsel %vm1552, %v1803, %v1800
        %v1823 = vsel %vm1555, %v1806, %v1822
        %v1824 = vsel %vm1558, %v1809, %v1823
        %v1825 = vsel %vm1561, %v1812, %v1824
        %v1826 = vsel %vm1564, %v1815, %v1825
        %v1827 = vsel %vm1567, %v1818, %v1826
        %vm1828 = vcmask 1047559
        %v1829 = vsel %vm1828, %v1821, %v1827
        %vm1831 = vcmask 130048
        %v1832 = vsel %vm1831, %v1829, -inf
        %1833 = vmax.xlane.f32.xlu0 %v1832
        %v1834 = vpop.xlane.xlu0 %1833
        %v1836 = vperm.slane %v1834, 0
        %v1837 = vperm.slane %v1834, 1
        %v1838 = vperm.slane %v1834, 2
        %v1839 = vperm.slane %v1834, 3
        %v1840 = vperm.slane %v1834, 4
        %v1841 = vperm.slane %v1834, 5
        %v1842 = vperm.slane %v1834, 6
        %v1843 = vperm.slane %v1834, 7
        %v1852 = vsub.f32 %v1762, %v1836
        %v1853 = vsub.f32 %v1763, %v1836
        %v1854 = vsub.f32 %v1764, %v1837
        %v1855 = vsub.f32 %v1765, %v1837
        %v1856 = vsub.f32 %v1766, %v1838
        %v1857 = vsub.f32 %v1767, %v1838
        %v1858 = vsub.f32 %v1768, %v1839
        %v1859 = vsub.f32 %v1769, %v1839
        %v1860 = vsub.f32 %v1770, %v1840
        %v1861 = vsub.f32 %v1771, %v1840
        %v1862 = vsub.f32 %v1772, %v1841
        %v1863 = vsub.f32 %v1773, %v1841
        %v1864 = vsub.f32 %v1774, %v1842
        %v1865 = vsub.f32 %v1775, %v1842
        %v1866 = vsub.f32 %v1776, %v1843
        %v1867 = vsub.f32 %v1777, %v1843
        %v1868 = vmul.f32 %v1852, 1.442695
        %v1869 = vpow.pop %v1868
        %v1870 = vmul.f32 %v1853, 1.442695
        %v1871 = vpow.pop %v1870
        %v1872 = vmul.f32 %v1854, 1.442695
        %v1873 = vpow.pop %v1872
        %v1874 = vmul.f32 %v1855, 1.442695
        %v1875 = vpow.pop %v1874
        %v1876 = vmul.f32 %v1856, 1.442695
        %v1877 = vpow.pop %v1876
        %v1878 = vmul.f32 %v1857, 1.442695
        %v1879 = vpow.pop %v1878
        %v1880 = vmul.f32 %v1858, 1.442695
        %v1881 = vpow.pop %v1880
        %v1882 = vmul.f32 %v1859, 1.442695
        %v1883 = vpow.pop %v1882
        %v1884 = vmul.f32 %v1860, 1.442695
        %v1885 = vpow.pop %v1884
        %v1886 = vmul.f32 %v1861, 1.442695
        %v1887 = vpow.pop %v1886
        %v1888 = vmul.f32 %v1862, 1.442695
        %v1889 = vpow.pop %v1888
        %v1890 = vmul.f32 %v1863, 1.442695
        %v1891 = vpow.pop %v1890
        %v1892 = vmul.f32 %v1864, 1.442695
        %v1893 = vpow.pop %v1892
        %v1894 = vmul.f32 %v1865, 1.442695
        %v1895 = vpow.pop %v1894
        %v1896 = vmul.f32 %v1866, 1.442695
        %v1897 = vpow.pop %v1896
        %v1898 = vmul.f32 %v1867, 1.442695
        %v1899 = vpow.pop %v1898
        %1916 = vset.pattern.permute.xlu0 0
        %1917 = vperm.xlu0 %1916, %v1869
        %v1918 = vpop.permute.xlu0 %1917
        %1919 = vset.pattern.permute.xlu0 0
        %1920 = vperm.xlu0 %1919, %v1871
        %v1921 = vpop.permute.xlu0 %1920
        %1922 = vset.pattern.permute.xlu0 0
        %1923 = vperm.xlu0 %1922, %v1873
        %v1924 = vpop.permute.xlu0 %1923
        %1925 = vset.pattern.permute.xlu0 0
        %1926 = vperm.xlu0 %1925, %v1875
        %v1927 = vpop.permute.xlu0 %1926
        %1928 = vset.pattern.permute.xlu0 0
        %1929 = vperm.xlu0 %1928, %v1877
        %v1930 = vpop.permute.xlu0 %1929
        %1931 = vset.pattern.permute.xlu0 0
        %1932 = vperm.xlu0 %1931, %v1879
        %v1933 = vpop.permute.xlu0 %1932
        %1934 = vset.pattern.permute.xlu0 0
        %1935 = vperm.xlu0 %1934, %v1881
        %v1936 = vpop.permute.xlu0 %1935
        %1937 = vset.pattern.permute.xlu0 0
        %1938 = vperm.xlu0 %1937, %v1883
        %v1939 = vpop.permute.xlu0 %1938
        %1940 = vset.pattern.permute.xlu0 0
        %1941 = vperm.xlu0 %1940, %v1885
        %v1942 = vpop.permute.xlu0 %1941
        %1943 = vset.pattern.permute.xlu0 0
        %1944 = vperm.xlu0 %1943, %v1887
        %v1945 = vpop.permute.xlu0 %1944
        %1946 = vset.pattern.permute.xlu0 0
        %1947 = vperm.xlu0 %1946, %v1889
        %v1948 = vpop.permute.xlu0 %1947
        %1949 = vset.pattern.permute.xlu0 0
        %1950 = vperm.xlu0 %1949, %v1891
        %v1951 = vpop.permute.xlu0 %1950
        %1952 = vset.pattern.permute.xlu0 0
        %1953 = vperm.xlu0 %1952, %v1893
        %v1954 = vpop.permute.xlu0 %1953
        %1955 = vset.pattern.permute.xlu0 0
        %1956 = vperm.xlu0 %1955, %v1895
        %v1957 = vpop.permute.xlu0 %1956
        %1958 = vset.pattern.permute.xlu0 0
        %1959 = vperm.xlu0 %1958, %v1897
        %v1960 = vpop.permute.xlu0 %1959
        %1961 = vset.pattern.permute.xlu0 0
        %1962 = vperm.xlu0 %1961, %v1899
        %v1963 = vpop.permute.xlu0 %1962
        %v1964 = vperm.slane %v1918, %v1795
        %v1965 = vperm.slane %v1921, %v1797
        %v1966 = vsel %vm1799, %v1965, %v1964
        %v1967 = vperm.slane %v1924, %v1795
        %v1968 = vperm.slane %v1927, %v1797
        %v1969 = vsel %vm1799, %v1968, %v1967
        %v1970 = vperm.slane %v1930, %v1795
        %v1971 = vperm.slane %v1933, %v1797
        %v1972 = vsel %vm1799, %v1971, %v1970
        %v1973 = vperm.slane %v1936, %v1795
        %v1974 = vperm.slane %v1939, %v1797
        %v1975 = vsel %vm1799, %v1974, %v1973
        %v1976 = vperm.slane %v1942, %v1795
        %v1977 = vperm.slane %v1945, %v1797
        %v1978 = vsel %vm1799, %v1977, %v1976
        %v1979 = vperm.slane %v1948, %v1795
        %v1980 = vperm.slane %v1951, %v1797
        %v1981 = vsel %vm1799, %v1980, %v1979
        %v1982 = vperm.slane %v1954, %v1795
        %v1983 = vperm.slane %v1957, %v1797
        %v1984 = vsel %vm1799, %v1983, %v1982
        %v1985 = vperm.slane %v1960, %v1795
        %v1986 = vperm.slane %v1963, %v1797
        %v1987 = vsel %vm1799, %v1986, %v1985
        %v1988 = vsel %vm1552, %v1969, %v1966
        %v1989 = vsel %vm1555, %v1972, %v1988
        %v1990 = vsel %vm1558, %v1975, %v1989
        %v1991 = vsel %vm1561, %v1978, %v1990
        %v1992 = vsel %vm1564, %v1981, %v1991
        %v1993 = vsel %vm1567, %v1984, %v1992
        %v1994 = vsel %vm1828, %v1987, %v1993
        %v1996 = vsel %vm1831, %v1994, 0.0
        %1997 = vadd.xlane.f32.xlu0 %v1996
        %v1998 = vpop.xlane.xlu0 %1997
        %v1999 = vrcp.pop %v1998
        %v2001 = vperm.slane %v1999, 0
        %v2002 = vperm.slane %v1999, 1
        %v2003 = vperm.slane %v1999, 2
        %v2004 = vperm.slane %v1999, 3
        %v2005 = vperm.slane %v1999, 4
        %v2006 = vperm.slane %v1999, 5
        %v2007 = vperm.slane %v1999, 6
        %v2008 = vperm.slane %v1999, 7
        %v2017 = vmul.f32 %v1869, %v2001
        %v2018 = vmul.f32 %v1871, %v2001
        %v2019 = vmul.f32 %v1873, %v2002
        %v2020 = vmul.f32 %v1875, %v2002
        %v2021 = vmul.f32 %v1877, %v2003
        %v2022 = vmul.f32 %v1879, %v2003
        %v2023 = vmul.f32 %v1881, %v2004
        %v2024 = vmul.f32 %v1883, %v2004
        %v2025 = vmul.f32 %v1885, %v2005
        %v2026 = vmul.f32 %v1887, %v2005
        %v2027 = vmul.f32 %v1889, %v2006
        %v2028 = vmul.f32 %v1891, %v2006
        %v2029 = vmul.f32 %v1893, %v2007
        %v2030 = vmul.f32 %v1895, %v2007
        %v2031 = vmul.f32 %v1897, %v2008
        %v2032 = vmul.f32 %v1899, %v2008
        %2049 = vset.pattern.permute.xlu0 0
        %2050 = vperm.xlu0 %2049, %v2017
        %v2051 = vpop.permute.xlu0 %2050
        %2052 = vset.pattern.permute.xlu0 0
        %2053 = vperm.xlu0 %2052, %v2018
        %v2054 = vpop.permute.xlu0 %2053
        %2055 = vset.pattern.permute.xlu0 0
        %2056 = vperm.xlu0 %2055, %v2019
        %v2057 = vpop.permute.xlu0 %2056
        %2058 = vset.pattern.permute.xlu0 0
        %2059 = vperm.xlu0 %2058, %v2020
        %v2060 = vpop.permute.xlu0 %2059
        %2061 = vset.pattern.permute.xlu0 0
        %2062 = vperm.xlu0 %2061, %v2021
        %v2063 = vpop.permute.xlu0 %2062
        %2064 = vset.pattern.permute.xlu0 0
        %2065 = vperm.xlu0 %2064, %v2022
        %v2066 = vpop.permute.xlu0 %2065
        %2067 = vset.pattern.permute.xlu0 0
        %2068 = vperm.xlu0 %2067, %v2023
        %v2069 = vpop.permute.xlu0 %2068
        %2070 = vset.pattern.permute.xlu0 0
        %2071 = vperm.xlu0 %2070, %v2024
        %v2072 = vpop.permute.xlu0 %2071
        %2073 = vset.pattern.permute.xlu0 0
        %2074 = vperm.xlu0 %2073, %v2025
        %v2075 = vpop.permute.xlu0 %2074
        %2076 = vset.pattern.permute.xlu0 0
        %2077 = vperm.xlu0 %2076, %v2026
        %v2078 = vpop.permute.xlu0 %2077
        %2079 = vset.pattern.permute.xlu0 0
        %2080 = vperm.xlu0 %2079, %v2027
        %v2081 = vpop.permute.xlu0 %2080
        %2082 = vset.pattern.permute.xlu0 0
        %2083 = vperm.xlu0 %2082, %v2028
        %v2084 = vpop.permute.xlu0 %2083
        %2085 = vset.pattern.permute.xlu0 0
        %2086 = vperm.xlu0 %2085, %v2029
        %v2087 = vpop.permute.xlu0 %2086
        %2088 = vset.pattern.permute.xlu0 0
        %2089 = vperm.xlu0 %2088, %v2030
        %v2090 = vpop.permute.xlu0 %2089
        %2091 = vset.pattern.permute.xlu0 0
        %2092 = vperm.xlu0 %2091, %v2031
        %v2093 = vpop.permute.xlu0 %2092
        %2094 = vset.pattern.permute.xlu0 0
        %2095 = vperm.xlu0 %2094, %v2032
        %v2096 = vpop.permute.xlu0 %2095
        %v2097 = vperm.slane %v2051, %v1795
        %v2098 = vperm.slane %v2054, %v1797
        %v2099 = vsel %vm1799, %v2098, %v2097
        %v2100 = vperm.slane %v2057, %v1795
        %v2101 = vperm.slane %v2060, %v1797
        %v2102 = vsel %vm1799, %v2101, %v2100
        %v2103 = vperm.slane %v2063, %v1795
        %v2104 = vperm.slane %v2066, %v1797
        %v2105 = vsel %vm1799, %v2104, %v2103
        %v2106 = vperm.slane %v2069, %v1795
        %v2107 = vperm.slane %v2072, %v1797
        %v2108 = vsel %vm1799, %v2107, %v2106
        %v2109 = vperm.slane %v2075, %v1795
        %v2110 = vperm.slane %v2078, %v1797
        %v2111 = vsel %vm1799, %v2110, %v2109
        %v2112 = vperm.slane %v2081, %v1795
        %v2113 = vperm.slane %v2084, %v1797
        %v2114 = vsel %vm1799, %v2113, %v2112
        %v2115 = vperm.slane %v2087, %v1795
        %v2116 = vperm.slane %v2090, %v1797
        %v2117 = vsel %vm1799, %v2116, %v2115
        %v2118 = vperm.slane %v2093, %v1795
        %v2119 = vperm.slane %v2096, %v1797
        %v2120 = vsel %vm1799, %v2119, %v2118
        %v2121 = vsel %vm1552, %v2102, %v2099
        %v2122 = vsel %vm1555, %v2105, %v2121
        %v2123 = vsel %vm1558, %v2108, %v2122
        %v2124 = vsel %vm1561, %v2111, %v2123
        %v2125 = vsel %vm1564, %v2114, %v2124
        %v2126 = vsel %vm1567, %v2117, %v2125
        %v2127 = vsel %vm1828, %v2120, %v2126
        %2129 = vst.msk [vmem:[%s705] sm:$0xff] %vm1831, %v2127
        %v2146 = vmul.f32 %v849, %v2051
        %v2147 = vmul.f32 %v850, %v2051
        %v2148 = vmul.f32 %v851, %v2054
        %v2149 = vmul.f32 %v852, %v2054
        %v2150 = vmul.f32 %v853, %v2057
        %v2151 = vmul.f32 %v854, %v2057
        %v2152 = vmul.f32 %v855, %v2060
        %v2153 = vmul.f32 %v856, %v2060
        %v2154 = vmul.f32 %v857, %v2063
        %v2155 = vmul.f32 %v858, %v2063
        %v2156 = vmul.f32 %v859, %v2066
        %v2157 = vmul.f32 %v860, %v2066
        %v2158 = vmul.f32 %v861, %v2069
        %v2159 = vmul.f32 %v862, %v2069
        %v2160 = vmul.f32 %v863, %v2072
        %v2161 = vmul.f32 %v864, %v2072
        %v2162 = vmul.f32 %v865, %v2075
        %v2163 = vmul.f32 %v866, %v2075
        %v2164 = vmul.f32 %v867, %v2078
        %v2165 = vmul.f32 %v868, %v2078
        %v2166 = vmul.f32 %v869, %v2081
        %v2167 = vmul.f32 %v870, %v2081
        %v2168 = vmul.f32 %v871, %v2084
        %v2169 = vmul.f32 %v872, %v2084
        %v2170 = vmul.f32 %v873, %v2087
        %v2171 = vmul.f32 %v874, %v2087
        %v2172 = vmul.f32 %v875, %v2090
        %v2173 = vmul.f32 %v876, %v2090
        %v2174 = vmul.f32 %v877, %v2093
        %v2175 = vmul.f32 %v878, %v2093
        %v2176 = vmul.f32 %v879, %v2096
        %v2177 = vmul.f32 %v880, %v2096
        %v2178 = vadd.f32 %v2146, %v2148
        %v2179 = vrot.slane %v2178, 4
        %v2180 = vadd.f32 %v2178, %v2179
        %v2181 = vrot.slane %v2180, 2
        %v2182 = vadd.f32 %v2180, %v2181
        %v2183 = vrot.slane %v2182, 1
        %v2184 = vadd.f32 %v2182, %v2183
        %v2185 = vadd.f32 %v2147, %v2149
        %v2186 = vrot.slane %v2185, 4
        %v2187 = vadd.f32 %v2185, %v2186
        %v2188 = vrot.slane %v2187, 2
        %v2189 = vadd.f32 %v2187, %v2188
        %v2190 = vrot.slane %v2189, 1
        %v2191 = vadd.f32 %v2189, %v2190
        %v2192 = vadd.f32 %v2150, %v2152
        %v2193 = vrot.slane %v2192, 4
        %v2194 = vadd.f32 %v2192, %v2193
        %v2195 = vrot.slane %v2194, 2
        %v2196 = vadd.f32 %v2194, %v2195
        %v2197 = vrot.slane %v2196, 1
        %v2198 = vadd.f32 %v2196, %v2197
        %v2199 = vadd.f32 %v2151, %v2153
        %v2200 = vrot.slane %v2199, 4
        %v2201 = vadd.f32 %v2199, %v2200
        %v2202 = vrot.slane %v2201, 2
        %v2203 = vadd.f32 %v2201, %v2202
        %v2204 = vrot.slane %v2203, 1
        %v2205 = vadd.f32 %v2203, %v2204
        %v2206 = vadd.f32 %v2154, %v2156
        %v2207 = vrot.slane %v2206, 4
        %v2208 = vadd.f32 %v2206, %v2207
        %v2209 = vrot.slane %v2208, 2
        %v2210 = vadd.f32 %v2208, %v2209
        %v2211 = vrot.slane %v2210, 1
        %v2212 = vadd.f32 %v2210, %v2211
        %v2213 = vadd.f32 %v2155, %v2157
        %v2214 = vrot.slane %v2213, 4
        %v2215 = vadd.f32 %v2213, %v2214
        %v2216 = vrot.slane %v2215, 2
        %v2217 = vadd.f32 %v2215, %v2216
        %v2218 = vrot.slane %v2217, 1
        %v2219 = vadd.f32 %v2217, %v2218
        %v2220 = vadd.f32 %v2158, %v2160
        %v2221 = vrot.slane %v2220, 4
        %v2222 = vadd.f32 %v2220, %v2221
        %v2223 = vrot.slane %v2222, 2
        %v2224 = vadd.f32 %v2222, %v2223
        %v2225 = vrot.slane %v2224, 1
        %v2226 = vadd.f32 %v2224, %v2225
        %v2227 = vadd.f32 %v2159, %v2161
        %v2228 = vrot.slane %v2227, 4
        %v2229 = vadd.f32 %v2227, %v2228
        %v2230 = vrot.slane %v2229, 2
        %v2231 = vadd.f32 %v2229, %v2230
        %v2232 = vrot.slane %v2231, 1
        %v2233 = vadd.f32 %v2231, %v2232
        %v2234 = vadd.f32 %v2162, %v2164
        %v2235 = vrot.slane %v2234, 4
        %v2236 = vadd.f32 %v2234, %v2235
        %v2237 = vrot.slane %v2236, 2
        %v2238 = vadd.f32 %v2236, %v2237
        %v2239 = vrot.slane %v2238, 1
        %v2240 = vadd.f32 %v2238, %v2239
        %v2241 = vadd.f32 %v2163, %v2165
        %v2242 = vrot.slane %v2241, 4
        %v2243 = vadd.f32 %v2241, %v2242
        %v2244 = vrot.slane %v2243, 2
        %v2245 = vadd.f32 %v2243, %v2244
        %v2246 = vrot.slane %v2245, 1
        %v2247 = vadd.f32 %v2245, %v2246
        %v2248 = vadd.f32 %v2166, %v2168
        %v2249 = vrot.slane %v2248, 4
        %v2250 = vadd.f32 %v2248, %v2249
        %v2251 = vrot.slane %v2250, 2
        %v2252 = vadd.f32 %v2250, %v2251
        %v2253 = vrot.slane %v2252, 1
        %v2254 = vadd.f32 %v2252, %v2253
        %v2255 = vadd.f32 %v2167, %v2169
        %v2256 = vrot.slane %v2255, 4
        %v2257 = vadd.f32 %v2255, %v2256
        %v2258 = vrot.slane %v2257, 2
        %v2259 = vadd.f32 %v2257, %v2258
        %v2260 = vrot.slane %v2259, 1
        %v2261 = vadd.f32 %v2259, %v2260
        %v2262 = vadd.f32 %v2170, %v2172
        %v2263 = vrot.slane %v2262, 4
        %v2264 = vadd.f32 %v2262, %v2263
        %v2265 = vrot.slane %v2264, 2
        %v2266 = vadd.f32 %v2264, %v2265
        %v2267 = vrot.slane %v2266, 1
        %v2268 = vadd.f32 %v2266, %v2267
        %v2269 = vadd.f32 %v2171, %v2173
        %v2270 = vrot.slane %v2269, 4
        %v2271 = vadd.f32 %v2269, %v2270
        %v2272 = vrot.slane %v2271, 2
        %v2273 = vadd.f32 %v2271, %v2272
        %v2274 = vrot.slane %v2273, 1
        %v2275 = vadd.f32 %v2273, %v2274
        %v2276 = vadd.f32 %v2174, %v2176
        %v2277 = vrot.slane %v2276, 4
        %v2278 = vadd.f32 %v2276, %v2277
        %v2279 = vrot.slane %v2278, 2
        %v2280 = vadd.f32 %v2278, %v2279
        %v2281 = vrot.slane %v2280, 1
        %v2282 = vadd.f32 %v2280, %v2281
        %v2283 = vadd.f32 %v2175, %v2177
        %v2284 = vrot.slane %v2283, 4
        %v2285 = vadd.f32 %v2283, %v2284
        %v2286 = vrot.slane %v2285, 2
        %v2287 = vadd.f32 %v2285, %v2286
        %v2288 = vrot.slane %v2287, 1
        %v2289 = vadd.f32 %v2287, %v2288
        %v2290 = vld [vmem:[#allocation16] sm:$0xff]
        %v2291 = vld [vmem:[#allocation16 + $0x8] sm:$0xff]
        %v2292 = vld [vmem:[#allocation16 + $0x10] sm:$0xff]
        %v2293 = vld [vmem:[#allocation16 + $0x18] sm:$0xff]
        %v2294 = vld [vmem:[#allocation16 + $0x20] sm:$0xff]
        %v2295 = vld [vmem:[#allocation16 + $0x28] sm:$0xff]
        %v2296 = vld [vmem:[#allocation16 + $0x30] sm:$0xff]
        %v2297 = vld [vmem:[#allocation16 + $0x38] sm:$0xff]
        %v2298 = vld [vmem:[#allocation16 + $0x40] sm:$0xff]
        %v2299 = vld [vmem:[#allocation16 + $0x48] sm:$0xff]
        %v2300 = vld [vmem:[#allocation16 + $0x50] sm:$0xff]
        %v2301 = vld [vmem:[#allocation16 + $0x58] sm:$0xff]
        %v2302 = vld [vmem:[#allocation16 + $0x60] sm:$0xff]
        %v2303 = vld [vmem:[#allocation16 + $0x68] sm:$0xff]
        %v2304 = vld [vmem:[#allocation16 + $0x70] sm:$0xff]
        %v2305 = vld [vmem:[#allocation16 + $0x78] sm:$0xff]
        %v2306 = vld [vmem:[#allocation16 + $0x80] sm:$0xff]
        %v2307 = vld [vmem:[#allocation16 + $0x88] sm:$0xff]
        %v2308 = vld [vmem:[#allocation16 + $0x90] sm:$0xff]
        %v2309 = vld [vmem:[#allocation16 + $0x98] sm:$0xff]
        %v2310 = vld [vmem:[#allocation16 + $0xa0] sm:$0xff]
        %v2311 = vld [vmem:[#allocation16 + $0xa8] sm:$0xff]
        %v2312 = vld [vmem:[#allocation16 + $0xb0] sm:$0xff]
        %v2313 = vld [vmem:[#allocation16 + $0xb8] sm:$0xff]
        %v2314 = vld [vmem:[#allocation16 + $0xc0] sm:$0xff]
        %v2315 = vld [vmem:[#allocation16 + $0xc8] sm:$0xff]
        %v2316 = vld [vmem:[#allocation16 + $0xd0] sm:$0xff]
        %v2317 = vld [vmem:[#allocation16 + $0xd8] sm:$0xff]
        %v2318 = vld [vmem:[#allocation16 + $0xe0] sm:$0xff]
        %v2319 = vld [vmem:[#allocation16 + $0xe8] sm:$0xff]
        %v2320 = vld [vmem:[#allocation16 + $0xf0] sm:$0xff]
        %v2321 = vld [vmem:[#allocation16 + $0xf8] sm:$0xff]
        %v2322 = vld [vmem:[#allocation16 + $0x100] sm:$0xff]
        %v2323 = vld [vmem:[#allocation16 + $0x108] sm:$0xff]
        %v2324 = vld [vmem:[#allocation16 + $0x110] sm:$0xff]
        %v2325 = vld [vmem:[#allocation16 + $0x118] sm:$0xff]
        %v2326 = vld [vmem:[#allocation16 + $0x120] sm:$0xff]
        %v2327 = vld [vmem:[#allocation16 + $0x128] sm:$0xff]
        %v2328 = vld [vmem:[#allocation16 + $0x130] sm:$0xff]
        %v2329 = vld [vmem:[#allocation16 + $0x138] sm:$0xff]
        %v2330 = vld [vmem:[#allocation16 + $0x140] sm:$0xff]
        %v2331 = vld [vmem:[#allocation16 + $0x148] sm:$0xff]
        %v2332 = vld [vmem:[#allocation16 + $0x150] sm:$0xff]
        %v2333 = vld [vmem:[#allocation16 + $0x158] sm:$0xff]
        %v2334 = vld [vmem:[#allocation16 + $0x160] sm:$0xff]
        %v2335 = vld [vmem:[#allocation16 + $0x168] sm:$0xff]
        %v2336 = vld [vmem:[#allocation16 + $0x170] sm:$0xff]
        %v2337 = vld [vmem:[#allocation16 + $0x178] sm:$0xff]
        %v2338 = vld [vmem:[#allocation16 + $0x180] sm:$0xff]
        %v2339 = vld [vmem:[#allocation16 + $0x188] sm:$0xff]
        %v2340 = vld [vmem:[#allocation16 + $0x190] sm:$0xff]
        %v2341 = vld [vmem:[#allocation16 + $0x198] sm:$0xff]
        %v2342 = vld [vmem:[#allocation16 + $0x1a0] sm:$0xff]
        %v2343 = vld [vmem:[#allocation16 + $0x1a8] sm:$0xff]
        %v2344 = vld [vmem:[#allocation16 + $0x1b0] sm:$0xff]
        %v2345 = vld [vmem:[#allocation16 + $0x1b8] sm:$0xff]
        %v2346 = vld [vmem:[#allocation16 + $0x1c0] sm:$0xff]
        %v2347 = vld [vmem:[#allocation16 + $0x1c8] sm:$0xff]
        %v2348 = vld [vmem:[#allocation16 + $0x1d0] sm:$0xff]
        %v2349 = vld [vmem:[#allocation16 + $0x1d8] sm:$0xff]
        %v2350 = vld [vmem:[#allocation16 + $0x1e0] sm:$0xff]
        %v2351 = vld [vmem:[#allocation16 + $0x1e8] sm:$0xff]
        %v2352 = vld [vmem:[#allocation16 + $0x1f0] sm:$0xff]
        %v2353 = vld [vmem:[#allocation16 + $0x1f8] sm:$0xff]
        %v2354 = vld [vmem:[#allocation16 + $0x200] sm:$0xff]
        %v2355 = vld [vmem:[#allocation16 + $0x208] sm:$0xff]
        %v2356 = vld [vmem:[#allocation16 + $0x210] sm:$0xff]
        %v2357 = vld [vmem:[#allocation16 + $0x218] sm:$0xff]
        %v2358 = vld [vmem:[#allocation16 + $0x220] sm:$0xff]
        %v2359 = vld [vmem:[#allocation16 + $0x228] sm:$0xff]
        %v2360 = vld [vmem:[#allocation16 + $0x230] sm:$0xff]
        %v2361 = vld [vmem:[#allocation16 + $0x238] sm:$0xff]
        %v2362 = vld [vmem:[#allocation16 + $0x240] sm:$0xff]
        %v2363 = vld [vmem:[#allocation16 + $0x248] sm:$0xff]
        %v2364 = vld [vmem:[#allocation16 + $0x250] sm:$0xff]
        %v2365 = vld [vmem:[#allocation16 + $0x258] sm:$0xff]
        %v2366 = vld [vmem:[#allocation16 + $0x260] sm:$0xff]
        %v2367 = vld [vmem:[#allocation16 + $0x268] sm:$0xff]
        %v2368 = vld [vmem:[#allocation16 + $0x270] sm:$0xff]
        %v2369 = vld [vmem:[#allocation16 + $0x278] sm:$0xff]
        %v2370 = vld [vmem:[#allocation16 + $0x280] sm:$0xff]
        %v2371 = vld [vmem:[#allocation16 + $0x288] sm:$0xff]
        %v2372 = vld [vmem:[#allocation16 + $0x290] sm:$0xff]
        %v2373 = vld [vmem:[#allocation16 + $0x298] sm:$0xff]
        %v2374 = vld [vmem:[#allocation16 + $0x2a0] sm:$0xff]
        %v2375 = vld [vmem:[#allocation16 + $0x2a8] sm:$0xff]
        %v2376 = vld [vmem:[#allocation16 + $0x2b0] sm:$0xff]
        %v2377 = vld [vmem:[#allocation16 + $0x2b8] sm:$0xff]
        %v2378 = vld [vmem:[#allocation16 + $0x2c0] sm:$0xff]
        %v2379 = vld [vmem:[#allocation16 + $0x2c8] sm:$0xff]
        %v2380 = vld [vmem:[#allocation16 + $0x2d0] sm:$0xff]
        %v2381 = vld [vmem:[#allocation16 + $0x2d8] sm:$0xff]
        %v2382 = vld [vmem:[#allocation16 + $0x2e0] sm:$0xff]
        %v2383 = vld [vmem:[#allocation16 + $0x2e8] sm:$0xff]
        %v2384 = vld [vmem:[#allocation16 + $0x2f0] sm:$0xff]
        %v2385 = vld [vmem:[#allocation16 + $0x2f8] sm:$0xff]
        %v2386 = vld [vmem:[#allocation16 + $0x300] sm:$0xff]
        %v2387 = vld [vmem:[#allocation16 + $0x308] sm:$0xff]
        %v2388 = vld [vmem:[#allocation16 + $0x310] sm:$0xff]
        %v2389 = vld [vmem:[#allocation16 + $0x318] sm:$0xff]
        %v2390 = vld [vmem:[#allocation16 + $0x320] sm:$0xff]
        %v2391 = vld [vmem:[#allocation16 + $0x328] sm:$0xff]
        %v2392 = vld [vmem:[#allocation16 + $0x330] sm:$0xff]
        %v2393 = vld [vmem:[#allocation16 + $0x338] sm:$0xff]
        %v2394 = vld [vmem:[#allocation16 + $0x340] sm:$0xff]
        %v2395 = vld [vmem:[#allocation16 + $0x348] sm:$0xff]
        %v2396 = vld [vmem:[#allocation16 + $0x350] sm:$0xff]
        %v2397 = vld [vmem:[#allocation16 + $0x358] sm:$0xff]
        %v2398 = vld [vmem:[#allocation16 + $0x360] sm:$0xff]
        %v2399 = vld [vmem:[#allocation16 + $0x368] sm:$0xff]
        %v2400 = vld [vmem:[#allocation16 + $0x370] sm:$0xff]
        %v2401 = vld [vmem:[#allocation16 + $0x378] sm:$0xff]
        %v2402 = vld [vmem:[#allocation16 + $0x380] sm:$0xff]
        %v2403 = vld [vmem:[#allocation16 + $0x388] sm:$0xff]
        %v2404 = vld [vmem:[#allocation16 + $0x390] sm:$0xff]
        %v2405 = vld [vmem:[#allocation16 + $0x398] sm:$0xff]
        %v2406 = vld [vmem:[#allocation16 + $0x3a0] sm:$0xff]
        %v2407 = vld [vmem:[#allocation16 + $0x3a8] sm:$0xff]
        %v2408 = vld [vmem:[#allocation16 + $0x3b0] sm:$0xff]
        %v2409 = vld [vmem:[#allocation16 + $0x3b8] sm:$0xff]
        %v2410 = vld [vmem:[#allocation16 + $0x3c0] sm:$0xff]
        %v2411 = vld [vmem:[#allocation16 + $0x3c8] sm:$0xff]
        %v2412 = vld [vmem:[#allocation16 + $0x3d0] sm:$0xff]
        %v2413 = vld [vmem:[#allocation16 + $0x3d8] sm:$0xff]
        %v2414 = vld [vmem:[#allocation16 + $0x3e0] sm:$0xff]
        %v2415 = vld [vmem:[#allocation16 + $0x3e8] sm:$0xff]
        %v2416 = vld [vmem:[#allocation16 + $0x3f0] sm:$0xff]
        %v2417 = vld [vmem:[#allocation16 + $0x3f8] sm:$0xff]
        %v2418 = vld [vmem:[%s14] sm:$0xff]
        %v2420 = vperm.slane %v2418, 0
        %v2421 = vperm.slane %v2418, 1
        %v2422 = vperm.slane %v2418, 2
        %v2423 = vperm.slane %v2418, 3
        %v2424 = vperm.slane %v2418, 4
        %v2425 = vperm.slane %v2418, 5
        %v2426 = vperm.slane %v2418, 6
        %v2427 = vperm.slane %v2418, 7
        %v2564 = vunpack.c.l.b16 %v2290
        %v2565 = vunpack.c.h.b16 %v2290
        %v2566 = vunpack.c.l.b16 %v2291
        %v2567 = vunpack.c.h.b16 %v2291
        %v2568 = vunpack.c.l.b16 %v2292
        %v2569 = vunpack.c.h.b16 %v2292
        %v2570 = vunpack.c.l.b16 %v2293
        %v2571 = vunpack.c.h.b16 %v2293
        %v2572 = vunpack.c.l.b16 %v2294
        %v2573 = vunpack.c.h.b16 %v2294
        %v2574 = vunpack.c.l.b16 %v2295
        %v2575 = vunpack.c.h.b16 %v2295
        %v2576 = vunpack.c.l.b16 %v2296
        %v2577 = vunpack.c.h.b16 %v2296
        %v2578 = vunpack.c.l.b16 %v2297
        %v2579 = vunpack.c.h.b16 %v2297
        %v2580 = vunpack.c.l.b16 %v2298
        %v2581 = vunpack.c.h.b16 %v2298
        %v2582 = vunpack.c.l.b16 %v2299
        %v2583 = vunpack.c.h.b16 %v2299
        %v2584 = vunpack.c.l.b16 %v2300
        %v2585 = vunpack.c.h.b16 %v2300
        %v2586 = vunpack.c.l.b16 %v2301
        %v2587 = vunpack.c.h.b16 %v2301
        %v2588 = vunpack.c.l.b16 %v2302
        %v2589 = vunpack.c.h.b16 %v2302
        %v2590 = vunpack.c.l.b16 %v2303
        %v2591 = vunpack.c.h.b16 %v2303
        %v2592 = vunpack.c.l.b16 %v2304
        %v2593 = vunpack.c.h.b16 %v2304
        %v2594 = vunpack.c.l.b16 %v2305
        %v2595 = vunpack.c.h.b16 %v2305
        %v2596 = vunpack.c.l.b16 %v2306
        %v2597 = vunpack.c.h.b16 %v2306
        %v2598 = vunpack.c.l.b16 %v2307
        %v2599 = vunpack.c.h.b16 %v2307
        %v2600 = vunpack.c.l.b16 %v2308
        %v2601 = vunpack.c.h.b16 %v2308
        %v2602 = vunpack.c.l.b16 %v2309
        %v2603 = vunpack.c.h.b16 %v2309
        %v2604 = vunpack.c.l.b16 %v2310
        %v2605 = vunpack.c.h.b16 %v2310
        %v2606 = vunpack.c.l.b16 %v2311
        %v2607 = vunpack.c.h.b16 %v2311
        %v2608 = vunpack.c.l.b16 %v2312
        %v2609 = vunpack.c.h.b16 %v2312
        %v2610 = vunpack.c.l.b16 %v2313
        %v2611 = vunpack.c.h.b16 %v2313
        %v2612 = vunpack.c.l.b16 %v2314
        %v2613 = vunpack.c.h.b16 %v2314
        %v2614 = vunpack.c.l.b16 %v2315
        %v2615 = vunpack.c.h.b16 %v2315
        %v2616 = vunpack.c.l.b16 %v2316
        %v2617 = vunpack.c.h.b16 %v2316
        %v2618 = vunpack.c.l.b16 %v2317
        %v2619 = vunpack.c.h.b16 %v2317
        %v2620 = vunpack.c.l.b16 %v2318
        %v2621 = vunpack.c.h.b16 %v2318
        %v2622 = vunpack.c.l.b16 %v2319
        %v2623 = vunpack.c.h.b16 %v2319
        %v2624 = vunpack.c.l.b16 %v2320
        %v2625 = vunpack.c.h.b16 %v2320
        %v2626 = vunpack.c.l.b16 %v2321
        %v2627 = vunpack.c.h.b16 %v2321
        %v2628 = vunpack.c.l.b16 %v2322
        %v2629 = vunpack.c.h.b16 %v2322
        %v2630 = vunpack.c.l.b16 %v2323
        %v2631 = vunpack.c.h.b16 %v2323
        %v2632 = vunpack.c.l.b16 %v2324
        %v2633 = vunpack.c.h.b16 %v2324
        %v2634 = vunpack.c.l.b16 %v2325
        %v2635 = vunpack.c.h.b16 %v2325
        %v2636 = vunpack.c.l.b16 %v2326
        %v2637 = vunpack.c.h.b16 %v2326
        %v2638 = vunpack.c.l.b16 %v2327
        %v2639 = vunpack.c.h.b16 %v2327
        %v2640 = vunpack.c.l.b16 %v2328
        %v2641 = vunpack.c.h.b16 %v2328
        %v2642 = vunpack.c.l.b16 %v2329
        %v2643 = vunpack.c.h.b16 %v2329
        %v2644 = vunpack.c.l.b16 %v2330
        %v2645 = vunpack.c.h.b16 %v2330
        %v2646 = vunpack.c.l.b16 %v2331
        %v2647 = vunpack.c.h.b16 %v2331
        %v2648 = vunpack.c.l.b16 %v2332
        %v2649 = vunpack.c.h.b16 %v2332
        %v2650 = vunpack.c.l.b16 %v2333
        %v2651 = vunpack.c.h.b16 %v2333
        %v2652 = vunpack.c.l.b16 %v2334
        %v2653 = vunpack.c.h.b16 %v2334
        %v2654 = vunpack.c.l.b16 %v2335
        %v2655 = vunpack.c.h.b16 %v2335
        %v2656 = vunpack.c.l.b16 %v2336
        %v2657 = vunpack.c.h.b16 %v2336
        %v2658 = vunpack.c.l.b16 %v2337
        %v2659 = vunpack.c.h.b16 %v2337
        %v2660 = vunpack.c.l.b16 %v2338
        %v2661 = vunpack.c.h.b16 %v2338
        %v2662 = vunpack.c.l.b16 %v2339
        %v2663 = vunpack.c.h.b16 %v2339
        %v2664 = vunpack.c.l.b16 %v2340
        %v2665 = vunpack.c.h.b16 %v2340
        %v2666 = vunpack.c.l.b16 %v2341
        %v2667 = vunpack.c.h.b16 %v2341
        %v2668 = vunpack.c.l.b16 %v2342
        %v2669 = vunpack.c.h.b16 %v2342
        %v2670 = vunpack.c.l.b16 %v2343
        %v2671 = vunpack.c.h.b16 %v2343
        %v2672 = vunpack.c.l.b16 %v2344
        %v2673 = vunpack.c.h.b16 %v2344
        %v2674 = vunpack.c.l.b16 %v2345
        %v2675 = vunpack.c.h.b16 %v2345
        %v2676 = vunpack.c.l.b16 %v2346
        %v2677 = vunpack.c.h.b16 %v2346
        %v2678 = vunpack.c.l.b16 %v2347
        %v2679 = vunpack.c.h.b16 %v2347
        %v2680 = vunpack.c.l.b16 %v2348
        %v2681 = vunpack.c.h.b16 %v2348
        %v2682 = vunpack.c.l.b16 %v2349
        %v2683 = vunpack.c.h.b16 %v2349
        %v2684 = vunpack.c.l.b16 %v2350
        %v2685 = vunpack.c.h.b16 %v2350
        %v2686 = vunpack.c.l.b16 %v2351
        %v2687 = vunpack.c.h.b16 %v2351
        %v2688 = vunpack.c.l.b16 %v2352
        %v2689 = vunpack.c.h.b16 %v2352
        %v2690 = vunpack.c.l.b16 %v2353
        %v2691 = vunpack.c.h.b16 %v2353
        %v2692 = vunpack.c.l.b16 %v2354
        %v2693 = vunpack.c.h.b16 %v2354
        %v2694 = vunpack.c.l.b16 %v2355
        %v2695 = vunpack.c.h.b16 %v2355
        %v2696 = vunpack.c.l.b16 %v2356
        %v2697 = vunpack.c.h.b16 %v2356
        %v2698 = vunpack.c.l.b16 %v2357
        %v2699 = vunpack.c.h.b16 %v2357
        %v2700 = vunpack.c.l.b16 %v2358
        %v2701 = vunpack.c.h.b16 %v2358
        %v2702 = vunpack.c.l.b16 %v2359
        %v2703 = vunpack.c.h.b16 %v2359
        %v2704 = vunpack.c.l.b16 %v2360
        %v2705 = vunpack.c.h.b16 %v2360
        %v2706 = vunpack.c.l.b16 %v2361
        %v2707 = vunpack.c.h.b16 %v2361
        %v2708 = vunpack.c.l.b16 %v2362
        %v2709 = vunpack.c.h.b16 %v2362
        %v2710 = vunpack.c.l.b16 %v2363
        %v2711 = vunpack.c.h.b16 %v2363
        %v2712 = vunpack.c.l.b16 %v2364
        %v2713 = vunpack.c.h.b16 %v2364
        %v2714 = vunpack.c.l.b16 %v2365
        %v2715 = vunpack.c.h.b16 %v2365
        %v2716 = vunpack.c.l.b16 %v2366
        %v2717 = vunpack.c.h.b16 %v2366
        %v2718 = vunpack.c.l.b16 %v2367
        %v2719 = vunpack.c.h.b16 %v2367
        %v2720 = vunpack.c.l.b16 %v2368
        %v2721 = vunpack.c.h.b16 %v2368
        %v2722 = vunpack.c.l.b16 %v2369
        %v2723 = vunpack.c.h.b16 %v2369
        %v2724 = vunpack.c.l.b16 %v2370
        %v2725 = vunpack.c.h.b16 %v2370
        %v2726 = vunpack.c.l.b16 %v2371
        %v2727 = vunpack.c.h.b16 %v2371
        %v2728 = vunpack.c.l.b16 %v2372
        %v2729 = vunpack.c.h.b16 %v2372
        %v2730 = vunpack.c.l.b16 %v2373
        %v2731 = vunpack.c.h.b16 %v2373
        %v2732 = vunpack.c.l.b16 %v2374
        %v2733 = vunpack.c.h.b16 %v2374
        %v2734 = vunpack.c.l.b16 %v2375
        %v2735 = vunpack.c.h.b16 %v2375
        %v2736 = vunpack.c.l.b16 %v2376
        %v2737 = vunpack.c.h.b16 %v2376
        %v2738 = vunpack.c.l.b16 %v2377
        %v2739 = vunpack.c.h.b16 %v2377
        %v2740 = vunpack.c.l.b16 %v2378
        %v2741 = vunpack.c.h.b16 %v2378
        %v2742 = vunpack.c.l.b16 %v2379
        %v2743 = vunpack.c.h.b16 %v2379
        %v2744 = vunpack.c.l.b16 %v2380
        %v2745 = vunpack.c.h.b16 %v2380
        %v2746 = vunpack.c.l.b16 %v2381
        %v2747 = vunpack.c.h.b16 %v2381
        %v2748 = vunpack.c.l.b16 %v2382
        %v2749 = vunpack.c.h.b16 %v2382
        %v2750 = vunpack.c.l.b16 %v2383
        %v2751 = vunpack.c.h.b16 %v2383
        %v2752 = vunpack.c.l.b16 %v2384
        %v2753 = vunpack.c.h.b16 %v2384
        %v2754 = vunpack.c.l.b16 %v2385
        %v2755 = vunpack.c.h.b16 %v2385
        %v2756 = vunpack.c.l.b16 %v2386
        %v2757 = vunpack.c.h.b16 %v2386
        %v2758 = vunpack.c.l.b16 %v2387
        %v2759 = vunpack.c.h.b16 %v2387
        %v2760 = vunpack.c.l.b16 %v2388
        %v2761 = vunpack.c.h.b16 %v2388
        %v2762 = vunpack.c.l.b16 %v2389
        %v2763 = vunpack.c.h.b16 %v2389
        %v2764 = vunpack.c.l.b16 %v2390
        %v2765 = vunpack.c.h.b16 %v2390
        %v2766 = vunpack.c.l.b16 %v2391
        %v2767 = vunpack.c.h.b16 %v2391
        %v2768 = vunpack.c.l.b16 %v2392
        %v2769 = vunpack.c.h.b16 %v2392
        %v2770 = vunpack.c.l.b16 %v2393
        %v2771 = vunpack.c.h.b16 %v2393
        %v2772 = vunpack.c.l.b16 %v2394
        %v2773 = vunpack.c.h.b16 %v2394
        %v2774 = vunpack.c.l.b16 %v2395
        %v2775 = vunpack.c.h.b16 %v2395
        %v2776 = vunpack.c.l.b16 %v2396
        %v2777 = vunpack.c.h.b16 %v2396
        %v2778 = vunpack.c.l.b16 %v2397
        %v2779 = vunpack.c.h.b16 %v2397
        %v2780 = vunpack.c.l.b16 %v2398
        %v2781 = vunpack.c.h.b16 %v2398
        %v2782 = vunpack.c.l.b16 %v2399
        %v2783 = vunpack.c.h.b16 %v2399
        %v2784 = vunpack.c.l.b16 %v2400
        %v2785 = vunpack.c.h.b16 %v2400
        %v2786 = vunpack.c.l.b16 %v2401
        %v2787 = vunpack.c.h.b16 %v2401
        %v2788 = vunpack.c.l.b16 %v2402
        %v2789 = vunpack.c.h.b16 %v2402
        %v2790 = vunpack.c.l.b16 %v2403
        %v2791 = vunpack.c.h.b16 %v2403
        %v2792 = vunpack.c.l.b16 %v2404
        %v2793 = vunpack.c.h.b16 %v2404
        %v2794 = vunpack.c.l.b16 %v2405
        %v2795 = vunpack.c.h.b16 %v2405
        %v2796 = vunpack.c.l.b16 %v2406
        %v2797 = vunpack.c.h.b16 %v2406
        %v2798 = vunpack.c.l.b16 %v2407
        %v2799 = vunpack.c.h.b16 %v2407
        %v2800 = vunpack.c.l.b16 %v2408
        %v2801 = vunpack.c.h.b16 %v2408
        %v2802 = vunpack.c.l.b16 %v2409
        %v2803 = vunpack.c.h.b16 %v2409
        %v2804 = vunpack.c.l.b16 %v2410
        %v2805 = vunpack.c.h.b16 %v2410
        %v2806 = vunpack.c.l.b16 %v2411
        %v2807 = vunpack.c.h.b16 %v2411
        %v2808 = vunpack.c.l.b16 %v2412
        %v2809 = vunpack.c.h.b16 %v2412
        %v2810 = vunpack.c.l.b16 %v2413
        %v2811 = vunpack.c.h.b16 %v2413
        %v2812 = vunpack.c.l.b16 %v2414
        %v2813 = vunpack.c.h.b16 %v2414
        %v2814 = vunpack.c.l.b16 %v2415
        %v2815 = vunpack.c.h.b16 %v2415
        %v2816 = vunpack.c.l.b16 %v2416
        %v2817 = vunpack.c.h.b16 %v2416
        %v2818 = vunpack.c.l.b16 %v2417
        %v2819 = vunpack.c.h.b16 %v2417
        %v2820 = vpack.c.b16 %v2572, %v2564
        %v2821 = vpack.c.b16 %v2573, %v2565
        %v2822 = vpack.c.b16 %v2574, %v2566
        %v2823 = vpack.c.b16 %v2575, %v2567
        %v2824 = vpack.c.b16 %v2576, %v2568
        %v2825 = vpack.c.b16 %v2577, %v2569
        %v2826 = vpack.c.b16 %v2578, %v2570
        %v2827 = vpack.c.b16 %v2579, %v2571
        %v2828 = vpack.c.b16 %v2588, %v2580
        %v2829 = vpack.c.b16 %v2589, %v2581
        %v2830 = vpack.c.b16 %v2590, %v2582
        %v2831 = vpack.c.b16 %v2591, %v2583
        %v2832 = vpack.c.b16 %v2592, %v2584
        %v2833 = vpack.c.b16 %v2593, %v2585
        %v2834 = vpack.c.b16 %v2594, %v2586
        %v2835 = vpack.c.b16 %v2595, %v2587
        %v2836 = vpack.c.b16 %v2604, %v2596
        %v2837 = vpack.c.b16 %v2605, %v2597
        %v2838 = vpack.c.b16 %v2606, %v2598
        %v2839 = vpack.c.b16 %v2607, %v2599
        %v2840 = vpack.c.b16 %v2608, %v2600
        %v2841 = vpack.c.b16 %v2609, %v2601
        %v2842 = vpack.c.b16 %v2610, %v2602
        %v2843 = vpack.c.b16 %v2611, %v2603
        %v2844 = vpack.c.b16 %v2620, %v2612
        %v2845 = vpack.c.b16 %v2621, %v2613
        %v2846 = vpack.c.b16 %v2622, %v2614
        %v2847 = vpack.c.b16 %v2623, %v2615
        %v2848 = vpack.c.b16 %v2624, %v2616
        %v2849 = vpack.c.b16 %v2625, %v2617
        %v2850 = vpack.c.b16 %v2626, %v2618
        %v2851 = vpack.c.b16 %v2627, %v2619
        %v2852 = vpack.c.b16 %v2636, %v2628
        %v2853 = vpack.c.b16 %v2637, %v2629
        %v2854 = vpack.c.b16 %v2638, %v2630
        %v2855 = vpack.c.b16 %v2639, %v2631
        %v2856 = vpack.c.b16 %v2640, %v2632
        %v2857 = vpack.c.b16 %v2641, %v2633
        %v2858 = vpack.c.b16 %v2642, %v2634
        %v2859 = vpack.c.b16 %v2643, %v2635
        %v2860 = vpack.c.b16 %v2652, %v2644
        %v2861 = vpack.c.b16 %v2653, %v2645
        %v2862 = vpack.c.b16 %v2654, %v2646
        %v2863 = vpack.c.b16 %v2655, %v2647
        %v2864 = vpack.c.b16 %v2656, %v2648
        %v2865 = vpack.c.b16 %v2657, %v2649
        %v2866 = vpack.c.b16 %v2658, %v2650
        %v2867 = vpack.c.b16 %v2659, %v2651
        %v2868 = vpack.c.b16 %v2668, %v2660
        %v2869 = vpack.c.b16 %v2669, %v2661
        %v2870 = vpack.c.b16 %v2670, %v2662
        %v2871 = vpack.c.b16 %v2671, %v2663
        %v2872 = vpack.c.b16 %v2672, %v2664
        %v2873 = vpack.c.b16 %v2673, %v2665
        %v2874 = vpack.c.b16 %v2674, %v2666
        %v2875 = vpack.c.b16 %v2675, %v2667
        %v2876 = vpack.c.b16 %v2684, %v2676
        %v2877 = vpack.c.b16 %v2685, %v2677
        %v2878 = vpack.c.b16 %v2686, %v2678
        %v2879 = vpack.c.b16 %v2687, %v2679
        %v2880 = vpack.c.b16 %v2688, %v2680
        %v2881 = vpack.c.b16 %v2689, %v2681
        %v2882 = vpack.c.b16 %v2690, %v2682
        %v2883 = vpack.c.b16 %v2691, %v2683
        %v2884 = vpack.c.b16 %v2700, %v2692
        %v2885 = vpack.c.b16 %v2701, %v2693
        %v2886 = vpack.c.b16 %v2702, %v2694
        %v2887 = vpack.c.b16 %v2703, %v2695
        %v2888 = vpack.c.b16 %v2704, %v2696
        %v2889 = vpack.c.b16 %v2705, %v2697
        %v2890 = vpack.c.b16 %v2706, %v2698
        %v2891 = vpack.c.b16 %v2707, %v2699
        %v2892 = vpack.c.b16 %v2716, %v2708
        %v2893 = vpack.c.b16 %v2717, %v2709
        %v2894 = vpack.c.b16 %v2718, %v2710
        %v2895 = vpack.c.b16 %v2719, %v2711
        %v2896 = vpack.c.b16 %v2720, %v2712
        %v2897 = vpack.c.b16 %v2721, %v2713
        %v2898 = vpack.c.b16 %v2722, %v2714
        %v2899 = vpack.c.b16 %v2723, %v2715
        %v2900 = vpack.c.b16 %v2732, %v2724
        %v2901 = vpack.c.b16 %v2733, %v2725
        %v2902 = vpack.c.b16 %v2734, %v2726
        %v2903 = vpack.c.b16 %v2735, %v2727
        %v2904 = vpack.c.b16 %v2736, %v2728
        %v2905 = vpack.c.b16 %v2737, %v2729
        %v2906 = vpack.c.b16 %v2738, %v2730
        %v2907 = vpack.c.b16 %v2739, %v2731
        %v2908 = vpack.c.b16 %v2748, %v2740
        %v2909 = vpack.c.b16 %v2749, %v2741
        %v2910 = vpack.c.b16 %v2750, %v2742
        %v2911 = vpack.c.b16 %v2751, %v2743
        %v2912 = vpack.c.b16 %v2752, %v2744
        %v2913 = vpack.c.b16 %v2753, %v2745
        %v2914 = vpack.c.b16 %v2754, %v2746
        %v2915 = vpack.c.b16 %v2755, %v2747
        %v2916 = vpack.c.b16 %v2764, %v2756
        %v2917 = vpack.c.b16 %v2765, %v2757
        %v2918 = vpack.c.b16 %v2766, %v2758
        %v2919 = vpack.c.b16 %v2767, %v2759
        %v2920 = vpack.c.b16 %v2768, %v2760
        %v2921 = vpack.c.b16 %v2769, %v2761
        %v2922 = vpack.c.b16 %v2770, %v2762
        %v2923 = vpack.c.b16 %v2771, %v2763
        %v2924 = vpack.c.b16 %v2780, %v2772
        %v2925 = vpack.c.b16 %v2781, %v2773
        %v2926 = vpack.c.b16 %v2782, %v2774
        %v2927 = vpack.c.b16 %v2783, %v2775
        %v2928 = vpack.c.b16 %v2784, %v2776
        %v2929 = vpack.c.b16 %v2785, %v2777
        %v2930 = vpack.c.b16 %v2786, %v2778
        %v2931 = vpack.c.b16 %v2787, %v2779
        %v2932 = vpack.c.b16 %v2796, %v2788
        %v2933 = vpack.c.b16 %v2797, %v2789
        %v2934 = vpack.c.b16 %v2798, %v2790
        %v2935 = vpack.c.b16 %v2799, %v2791
        %v2936 = vpack.c.b16 %v2800, %v2792
        %v2937 = vpack.c.b16 %v2801, %v2793
        %v2938 = vpack.c.b16 %v2802, %v2794
        %v2939 = vpack.c.b16 %v2803, %v2795
        %v2940 = vpack.c.b16 %v2812, %v2804
        %v2941 = vpack.c.b16 %v2813, %v2805
        %v2942 = vpack.c.b16 %v2814, %v2806
        %v2943 = vpack.c.b16 %v2815, %v2807
        %v2944 = vpack.c.b16 %v2816, %v2808
        %v2945 = vpack.c.b16 %v2817, %v2809
        %v2946 = vpack.c.b16 %v2818, %v2810
        %v2947 = vpack.c.b16 %v2819, %v2811
        %3076 = vmatpush.bf16.msra.mxu0 %v2876
        %3077 = vmatpush.bf16.msra.mxu0 %v2868
        %3078 = vmatpush.bf16.msra.mxu0 %v2860
        %3079 = vmatpush.bf16.msra.mxu0 %v2852
        %3080 = vmatpush.bf16.msra.mxu0 %v2844
        %3081 = vmatpush.bf16.msra.mxu0 %v2836
        %3082 = vmatpush.bf16.msra.mxu0 %v2828
        %3083 = vmatpush.bf16.msra.mxu0 %v2820
        %3084 = vmatmul.bf16.gmra.mxu0 %v885
        %v3085 = vpop.f32.mrf.mxu0
        %v3086 = vadd.f32 %v2420, %v3085
        %v3087 = vpop.f32.mrf.mxu0
        %3088 = vdwg.mxu0
        %3089 = vmatpush.bf16.msra.mxu0 %v2940
        %3090 = vmatpush.bf16.msra.mxu0 %v2932
        %3091 = vmatpush.bf16.msra.mxu0 %v2924
        %3092 = vmatpush.bf16.msra.mxu0 %v2916
        %3093 = vmatpush.bf16.msra.mxu0 %v2908
        %3094 = vmatpush.bf16.msra.mxu0 %v2900
        %3095 = vmatpush.bf16.msra.mxu0 %v2892
        %3096 = vmatpush.bf16.msra.mxu0 %v2884
        %3097 = vmatmul.bf16.gmra.mxu0 %v886
        %v3098 = vpop.f32.mrf.mxu0
        %v3099 = vadd.f32 %v3086, %v3098
        %v3100 = vpop.f32.mrf.mxu0
        %3101 = vdwg.mxu0
        %3102 = vmatpush.bf16.msra.mxu0 %v2877
        %3103 = vmatpush.bf16.msra.mxu0 %v2869
        %3104 = vmatpush.bf16.msra.mxu0 %v2861
        %3105 = vmatpush.bf16.msra.mxu0 %v2853
        %3106 = vmatpush.bf16.msra.mxu0 %v2845
        %3107 = vmatpush.bf16.msra.mxu0 %v2837
        %3108 = vmatpush.bf16.msra.mxu0 %v2829
        %3109 = vmatpush.bf16.msra.mxu0 %v2821
        %3110 = vmatmul.bf16.gmra.mxu0 %v885
        %v3111 = vpop.f32.mrf.mxu0
        %v3112 = vadd.f32 %v2421, %v3111
        %v3113 = vpop.f32.mrf.mxu0
        %3114 = vdwg.mxu0
        %3115 = vmatpush.bf16.msra.mxu0 %v2941
        %3116 = vmatpush.bf16.msra.mxu0 %v2933
        %3117 = vmatpush.bf16.msra.mxu0 %v2925
        %3118 = vmatpush.bf16.msra.mxu0 %v2917
        %3119 = vmatpush.bf16.msra.mxu0 %v2909
        %3120 = vmatpush.bf16.msra.mxu0 %v2901
        %3121 = vmatpush.bf16.msra.mxu0 %v2893
        %3122 = vmatpush.bf16.msra.mxu0 %v2885
        %3123 = vmatmul.bf16.gmra.mxu0 %v886
        %v3124 = vpop.f32.mrf.mxu0
        %v3125 = vadd.f32 %v3112, %v3124
        %v3126 = vpop.f32.mrf.mxu0
        %3127 = vdwg.mxu0
        %3128 = vmatpush.bf16.msra.mxu0 %v2878
        %3129 = vmatpush.bf16.msra.mxu0 %v2870
        %3130 = vmatpush.bf16.msra.mxu0 %v2862
        %3131 = vmatpush.bf16.msra.mxu0 %v2854
        %3132 = vmatpush.bf16.msra.mxu0 %v2846
        %3133 = vmatpush.bf16.msra.mxu0 %v2838
        %3134 = vmatpush.bf16.msra.mxu0 %v2830
        %3135 = vmatpush.bf16.msra.mxu0 %v2822
        %3136 = vmatmul.bf16.gmra.mxu0 %v885
        %v3137 = vpop.f32.mrf.mxu0
        %v3138 = vadd.f32 %v2422, %v3137
        %v3139 = vpop.f32.mrf.mxu0
        %3140 = vdwg.mxu0
        %3141 = vmatpush.bf16.msra.mxu0 %v2942
        %3142 = vmatpush.bf16.msra.mxu0 %v2934
        %3143 = vmatpush.bf16.msra.mxu0 %v2926
        %3144 = vmatpush.bf16.msra.mxu0 %v2918
        %3145 = vmatpush.bf16.msra.mxu0 %v2910
        %3146 = vmatpush.bf16.msra.mxu0 %v2902
        %3147 = vmatpush.bf16.msra.mxu0 %v2894
        %3148 = vmatpush.bf16.msra.mxu0 %v2886
        %3149 = vmatmul.bf16.gmra.mxu0 %v886
        %v3150 = vpop.f32.mrf.mxu0
        %v3151 = vadd.f32 %v3138, %v3150
        %v3152 = vpop.f32.mrf.mxu0
        %3153 = vdwg.mxu0
        %3154 = vmatpush.bf16.msra.mxu0 %v2879
        %3155 = vmatpush.bf16.msra.mxu0 %v2871
        %3156 = vmatpush.bf16.msra.mxu0 %v2863
        %3157 = vmatpush.bf16.msra.mxu0 %v2855
        %3158 = vmatpush.bf16.msra.mxu0 %v2847
        %3159 = vmatpush.bf16.msra.mxu0 %v2839
        %3160 = vmatpush.bf16.msra.mxu0 %v2831
        %3161 = vmatpush.bf16.msra.mxu0 %v2823
        %3162 = vmatmul.bf16.gmra.mxu0 %v885
        %v3163 = vpop.f32.mrf.mxu0
        %v3164 = vadd.f32 %v2423, %v3163
        %v3165 = vpop.f32.mrf.mxu0
        %3166 = vdwg.mxu0
        %3167 = vmatpush.bf16.msra.mxu0 %v2943
        %3168 = vmatpush.bf16.msra.mxu0 %v2935
        %3169 = vmatpush.bf16.msra.mxu0 %v2927
        %3170 = vmatpush.bf16.msra.mxu0 %v2919
        %3171 = vmatpush.bf16.msra.mxu0 %v2911
        %3172 = vmatpush.bf16.msra.mxu0 %v2903
        %3173 = vmatpush.bf16.msra.mxu0 %v2895
        %3174 = vmatpush.bf16.msra.mxu0 %v2887
        %3175 = vmatmul.bf16.gmra.mxu0 %v886
        %v3176 = vpop.f32.mrf.mxu0
        %v3177 = vadd.f32 %v3164, %v3176
        %v3178 = vpop.f32.mrf.mxu0
        %3179 = vdwg.mxu0
        %3180 = vmatpush.bf16.msra.mxu0 %v2880
        %3181 = vmatpush.bf16.msra.mxu0 %v2872
        %3182 = vmatpush.bf16.msra.mxu0 %v2864
        %3183 = vmatpush.bf16.msra.mxu0 %v2856
        %3184 = vmatpush.bf16.msra.mxu0 %v2848
        %3185 = vmatpush.bf16.msra.mxu0 %v2840
        %3186 = vmatpush.bf16.msra.mxu0 %v2832
        %3187 = vmatpush.bf16.msra.mxu0 %v2824
        %3188 = vmatmul.bf16.gmra.mxu0 %v885
        %v3189 = vpop.f32.mrf.mxu0
        %v3190 = vadd.f32 %v2424, %v3189
        %v3191 = vpop.f32.mrf.mxu0
        %3192 = vdwg.mxu0
        %3193 = vmatpush.bf16.msra.mxu0 %v2944
        %3194 = vmatpush.bf16.msra.mxu0 %v2936
        %3195 = vmatpush.bf16.msra.mxu0 %v2928
        %3196 = vmatpush.bf16.msra.mxu0 %v2920
        %3197 = vmatpush.bf16.msra.mxu0 %v2912
        %3198 = vmatpush.bf16.msra.mxu0 %v2904
        %3199 = vmatpush.bf16.msra.mxu0 %v2896
        %3200 = vmatpush.bf16.msra.mxu0 %v2888
        %3201 = vmatmul.bf16.gmra.mxu0 %v886
        %v3202 = vpop.f32.mrf.mxu0
        %v3203 = vadd.f32 %v3190, %v3202
        %v3204 = vpop.f32.mrf.mxu0
        %3205 = vdwg.mxu0
        %3206 = vmatpush.bf16.msra.mxu0 %v2881
        %3207 = vmatpush.bf16.msra.mxu0 %v2873
        %3208 = vmatpush.bf16.msra.mxu0 %v2865
        %3209 = vmatpush.bf16.msra.mxu0 %v2857
        %3210 = vmatpush.bf16.msra.mxu0 %v2849
        %3211 = vmatpush.bf16.msra.mxu0 %v2841
        %3212 = vmatpush.bf16.msra.mxu0 %v2833
        %3213 = vmatpush.bf16.msra.mxu0 %v2825
        %3214 = vmatmul.bf16.gmra.mxu0 %v885
        %v3215 = vpop.f32.mrf.mxu0
        %v3216 = vadd.f32 %v2425, %v3215
        %v3217 = vpop.f32.mrf.mxu0
        %3218 = vdwg.mxu0
        %3219 = vmatpush.bf16.msra.mxu0 %v2945
        %3220 = vmatpush.bf16.msra.mxu0 %v2937
        %3221 = vmatpush.bf16.msra.mxu0 %v2929
        %3222 = vmatpush.bf16.msra.mxu0 %v2921
        %3223 = vmatpush.bf16.msra.mxu0 %v2913
        %3224 = vmatpush.bf16.msra.mxu0 %v2905
        %3225 = vmatpush.bf16.msra.mxu0 %v2897
        %3226 = vmatpush.bf16.msra.mxu0 %v2889
        %3227 = vmatmul.bf16.gmra.mxu0 %v886
        %v3228 = vpop.f32.mrf.mxu0
        %v3229 = vadd.f32 %v3216, %v3228
        %v3230 = vpop.f32.mrf.mxu0
        %3231 = vdwg.mxu0
        %3232 = vmatpush.bf16.msra.mxu0 %v2882
        %3233 = vmatpush.bf16.msra.mxu0 %v2874
        %3234 = vmatpush.bf16.msra.mxu0 %v2866
        %3235 = vmatpush.bf16.msra.mxu0 %v2858
        %3236 = vmatpush.bf16.msra.mxu0 %v2850
        %3237 = vmatpush.bf16.msra.mxu0 %v2842
        %3238 = vmatpush.bf16.msra.mxu0 %v2834
        %3239 = vmatpush.bf16.msra.mxu0 %v2826
        %3240 = vmatmul.bf16.gmra.mxu0 %v885
        %v3241 = vpop.f32.mrf.mxu0
        %v3242 = vadd.f32 %v2426, %v3241
        %v3243 = vpop.f32.mrf.mxu0
        %3244 = vdwg.mxu0
        %3245 = vmatpush.bf16.msra.mxu0 %v2946
        %3246 = vmatpush.bf16.msra.mxu0 %v2938
        %3247 = vmatpush.bf16.msra.mxu0 %v2930
        %3248 = vmatpush.bf16.msra.mxu0 %v2922
        %3249 = vmatpush.bf16.msra.mxu0 %v2914
        %3250 = vmatpush.bf16.msra.mxu0 %v2906
        %3251 = vmatpush.bf16.msra.mxu0 %v2898
        %3252 = vmatpush.bf16.msra.mxu0 %v2890
        %3253 = vmatmul.bf16.gmra.mxu0 %v886
        %v3254 = vpop.f32.mrf.mxu0
        %v3255 = vadd.f32 %v3242, %v3254
        %v3256 = vpop.f32.mrf.mxu0
        %3257 = vdwg.mxu0
        %3258 = vmatpush.bf16.msra.mxu0 %v2883
        %3259 = vmatpush.bf16.msra.mxu0 %v2875
        %3260 = vmatpush.bf16.msra.mxu0 %v2867
        %3261 = vmatpush.bf16.msra.mxu0 %v2859
        %3262 = vmatpush.bf16.msra.mxu0 %v2851
        %3263 = vmatpush.bf16.msra.mxu0 %v2843
        %3264 = vmatpush.bf16.msra.mxu0 %v2835
        %3265 = vmatpush.bf16.msra.mxu0 %v2827
        %3266 = vmatmul.bf16.gmra.mxu0 %v885
        %v3267 = vpop.f32.mrf.mxu0
        %v3268 = vadd.f32 %v2427, %v3267
        %v3269 = vpop.f32.mrf.mxu0
        %3270 = vdwg.mxu0
        %3271 = vmatpush.bf16.msra.mxu0 %v2947
        %3272 = vmatpush.bf16.msra.mxu0 %v2939
        %3273 = vmatpush.bf16.msra.mxu0 %v2931
        %3274 = vmatpush.bf16.msra.mxu0 %v2923
        %3275 = vmatpush.bf16.msra.mxu0 %v2915
        %3276 = vmatpush.bf16.msra.mxu0 %v2907
        %3277 = vmatpush.bf16.msra.mxu0 %v2899
        %3278 = vmatpush.bf16.msra.mxu0 %v2891
        %3279 = vmatmul.bf16.gmra.mxu0 %v886
        %v3280 = vpop.f32.mrf.mxu0
        %v3281 = vadd.f32 %v3268, %v3280
        %v3282 = vpop.f32.mrf.mxu0
        %3283 = vdwg.mxu0
        %v3284 = vpack.c.bf16 %v2184, %v2184
        %v3285 = vpack.c.bf16 %v2191, %v2191
        %v3286 = vpack.c.bf16 %v2198, %v2198
        %v3287 = vpack.c.bf16 %v2205, %v2205
        %v3288 = vpack.c.bf16 %v2212, %v2212
        %v3289 = vpack.c.bf16 %v2219, %v2219
        %v3290 = vpack.c.bf16 %v2226, %v2226
        %v3291 = vpack.c.bf16 %v2233, %v2233
        %v3292 = vpack.c.bf16 %v2240, %v2240
        %v3293 = vpack.c.bf16 %v2247, %v2247
        %v3294 = vpack.c.bf16 %v2254, %v2254
        %v3295 = vpack.c.bf16 %v2261, %v2261
        %v3296 = vpack.c.bf16 %v2268, %v2268
        %v3297 = vpack.c.bf16 %v2275, %v2275
        %v3298 = vpack.c.bf16 %v2282, %v2282
        %v3299 = vpack.c.bf16 %v2289, %v2289
        %v3300 = vld [vmem:[#allocation18] sm:$0xff]
        %v3301 = vld [vmem:[#allocation18 + $0x8] sm:$0xff]
        %v3302 = vld [vmem:[#allocation18 + $0x10] sm:$0xff]
        %v3303 = vld [vmem:[#allocation18 + $0x18] sm:$0xff]
        %v3304 = vld [vmem:[#allocation18 + $0x20] sm:$0xff]
        %v3305 = vld [vmem:[#allocation18 + $0x28] sm:$0xff]
        %v3306 = vld [vmem:[#allocation18 + $0x30] sm:$0xff]
        %v3307 = vld [vmem:[#allocation18 + $0x38] sm:$0xff]
        %v3308 = vld [vmem:[#allocation18 + $0x40] sm:$0xff]
        %v3309 = vld [vmem:[#allocation18 + $0x48] sm:$0xff]
        %v3310 = vld [vmem:[#allocation18 + $0x50] sm:$0xff]
        %v3311 = vld [vmem:[#allocation18 + $0x58] sm:$0xff]
        %v3312 = vld [vmem:[#allocation18 + $0x60] sm:$0xff]
        %v3313 = vld [vmem:[#allocation18 + $0x68] sm:$0xff]
        %v3314 = vld [vmem:[#allocation18 + $0x70] sm:$0xff]
        %v3315 = vld [vmem:[#allocation18 + $0x78] sm:$0xff]
        %v3316 = vld [vmem:[#allocation18 + $0x80] sm:$0xff]
        %v3317 = vld [vmem:[#allocation18 + $0x88] sm:$0xff]
        %v3318 = vld [vmem:[#allocation18 + $0x90] sm:$0xff]
        %v3319 = vld [vmem:[#allocation18 + $0x98] sm:$0xff]
        %v3320 = vld [vmem:[#allocation18 + $0xa0] sm:$0xff]
        %v3321 = vld [vmem:[#allocation18 + $0xa8] sm:$0xff]
        %v3322 = vld [vmem:[#allocation18 + $0xb0] sm:$0xff]
        %v3323 = vld [vmem:[#allocation18 + $0xb8] sm:$0xff]
        %v3324 = vld [vmem:[#allocation18 + $0xc0] sm:$0xff]
        %v3325 = vld [vmem:[#allocation18 + $0xc8] sm:$0xff]
        %v3326 = vld [vmem:[#allocation18 + $0xd0] sm:$0xff]
        %v3327 = vld [vmem:[#allocation18 + $0xd8] sm:$0xff]
        %v3328 = vld [vmem:[#allocation18 + $0xe0] sm:$0xff]
        %v3329 = vld [vmem:[#allocation18 + $0xe8] sm:$0xff]
        %v3330 = vld [vmem:[#allocation18 + $0xf0] sm:$0xff]
        %v3331 = vld [vmem:[#allocation18 + $0xf8] sm:$0xff]
        %v3332 = vld [vmem:[#allocation18 + $0x100] sm:$0xff]
        %v3333 = vld [vmem:[#allocation18 + $0x108] sm:$0xff]
        %v3334 = vld [vmem:[#allocation18 + $0x110] sm:$0xff]
        %v3335 = vld [vmem:[#allocation18 + $0x118] sm:$0xff]
        %v3336 = vld [vmem:[#allocation18 + $0x120] sm:$0xff]
        %v3337 = vld [vmem:[#allocation18 + $0x128] sm:$0xff]
        %v3338 = vld [vmem:[#allocation18 + $0x130] sm:$0xff]
        %v3339 = vld [vmem:[#allocation18 + $0x138] sm:$0xff]
        %v3340 = vld [vmem:[#allocation18 + $0x140] sm:$0xff]
        %v3341 = vld [vmem:[#allocation18 + $0x148] sm:$0xff]
        %v3342 = vld [vmem:[#allocation18 + $0x150] sm:$0xff]
        %v3343 = vld [vmem:[#allocation18 + $0x158] sm:$0xff]
        %v3344 = vld [vmem:[#allocation18 + $0x160] sm:$0xff]
        %v3345 = vld [vmem:[#allocation18 + $0x168] sm:$0xff]
        %v3346 = vld [vmem:[#allocation18 + $0x170] sm:$0xff]
        %v3347 = vld [vmem:[#allocation18 + $0x178] sm:$0xff]
        %v3348 = vld [vmem:[#allocation18 + $0x180] sm:$0xff]
        %v3349 = vld [vmem:[#allocation18 + $0x188] sm:$0xff]
        %v3350 = vld [vmem:[#allocation18 + $0x190] sm:$0xff]
        %v3351 = vld [vmem:[#allocation18 + $0x198] sm:$0xff]
        %v3352 = vld [vmem:[#allocation18 + $0x1a0] sm:$0xff]
        %v3353 = vld [vmem:[#allocation18 + $0x1a8] sm:$0xff]
        %v3354 = vld [vmem:[#allocation18 + $0x1b0] sm:$0xff]
        %v3355 = vld [vmem:[#allocation18 + $0x1b8] sm:$0xff]
        %v3356 = vld [vmem:[#allocation18 + $0x1c0] sm:$0xff]
        %v3357 = vld [vmem:[#allocation18 + $0x1c8] sm:$0xff]
        %v3358 = vld [vmem:[#allocation18 + $0x1d0] sm:$0xff]
        %v3359 = vld [vmem:[#allocation18 + $0x1d8] sm:$0xff]
        %v3360 = vld [vmem:[#allocation18 + $0x1e0] sm:$0xff]
        %v3361 = vld [vmem:[#allocation18 + $0x1e8] sm:$0xff]
        %v3362 = vld [vmem:[#allocation18 + $0x1f0] sm:$0xff]
        %v3363 = vld [vmem:[#allocation18 + $0x1f8] sm:$0xff]
        %v3364 = vld [vmem:[#allocation18 + $0x200] sm:$0xff]
        %v3365 = vld [vmem:[#allocation18 + $0x208] sm:$0xff]
        %v3366 = vld [vmem:[#allocation18 + $0x210] sm:$0xff]
        %v3367 = vld [vmem:[#allocation18 + $0x218] sm:$0xff]
        %v3368 = vld [vmem:[#allocation18 + $0x220] sm:$0xff]
        %v3369 = vld [vmem:[#allocation18 + $0x228] sm:$0xff]
        %v3370 = vld [vmem:[#allocation18 + $0x230] sm:$0xff]
        %v3371 = vld [vmem:[#allocation18 + $0x238] sm:$0xff]
        %v3372 = vld [vmem:[#allocation18 + $0x240] sm:$0xff]
        %v3373 = vld [vmem:[#allocation18 + $0x248] sm:$0xff]
        %v3374 = vld [vmem:[#allocation18 + $0x250] sm:$0xff]
        %v3375 = vld [vmem:[#allocation18 + $0x258] sm:$0xff]
        %v3376 = vld [vmem:[#allocation18 + $0x260] sm:$0xff]
        %v3377 = vld [vmem:[#allocation18 + $0x268] sm:$0xff]
        %v3378 = vld [vmem:[#allocation18 + $0x270] sm:$0xff]
        %v3379 = vld [vmem:[#allocation18 + $0x278] sm:$0xff]
        %v3380 = vld [vmem:[#allocation18 + $0x280] sm:$0xff]
        %v3381 = vld [vmem:[#allocation18 + $0x288] sm:$0xff]
        %v3382 = vld [vmem:[#allocation18 + $0x290] sm:$0xff]
        %v3383 = vld [vmem:[#allocation18 + $0x298] sm:$0xff]
        %v3384 = vld [vmem:[#allocation18 + $0x2a0] sm:$0xff]
        %v3385 = vld [vmem:[#allocation18 + $0x2a8] sm:$0xff]
        %v3386 = vld [vmem:[#allocation18 + $0x2b0] sm:$0xff]
        %v3387 = vld [vmem:[#allocation18 + $0x2b8] sm:$0xff]
        %v3388 = vld [vmem:[#allocation18 + $0x2c0] sm:$0xff]
        %v3389 = vld [vmem:[#allocation18 + $0x2c8] sm:$0xff]
        %v3390 = vld [vmem:[#allocation18 + $0x2d0] sm:$0xff]
        %v3391 = vld [vmem:[#allocation18 + $0x2d8] sm:$0xff]
        %v3392 = vld [vmem:[#allocation18 + $0x2e0] sm:$0xff]
        %v3393 = vld [vmem:[#allocation18 + $0x2e8] sm:$0xff]
        %v3394 = vld [vmem:[#allocation18 + $0x2f0] sm:$0xff]
        %v3395 = vld [vmem:[#allocation18 + $0x2f8] sm:$0xff]
        %v3396 = vld [vmem:[#allocation18 + $0x300] sm:$0xff]
        %v3397 = vld [vmem:[#allocation18 + $0x308] sm:$0xff]
        %v3398 = vld [vmem:[#allocation18 + $0x310] sm:$0xff]
        %v3399 = vld [vmem:[#allocation18 + $0x318] sm:$0xff]
        %v3400 = vld [vmem:[#allocation18 + $0x320] sm:$0xff]
        %v3401 = vld [vmem:[#allocation18 + $0x328] sm:$0xff]
        %v3402 = vld [vmem:[#allocation18 + $0x330] sm:$0xff]
        %v3403 = vld [vmem:[#allocation18 + $0x338] sm:$0xff]
        %v3404 = vld [vmem:[#allocation18 + $0x340] sm:$0xff]
        %v3405 = vld [vmem:[#allocation18 + $0x348] sm:$0xff]
        %v3406 = vld [vmem:[#allocation18 + $0x350] sm:$0xff]
        %v3407 = vld [vmem:[#allocation18 + $0x358] sm:$0xff]
        %v3408 = vld [vmem:[#allocation18 + $0x360] sm:$0xff]
        %v3409 = vld [vmem:[#allocation18 + $0x368] sm:$0xff]
        %v3410 = vld [vmem:[#allocation18 + $0x370] sm:$0xff]
        %v3411 = vld [vmem:[#allocation18 + $0x378] sm:$0xff]
        %v3412 = vld [vmem:[#allocation18 + $0x380] sm:$0xff]
        %v3413 = vld [vmem:[#allocation18 + $0x388] sm:$0xff]
        %v3414 = vld [vmem:[#allocation18 + $0x390] sm:$0xff]
        %v3415 = vld [vmem:[#allocation18 + $0x398] sm:$0xff]
        %v3416 = vld [vmem:[#allocation18 + $0x3a0] sm:$0xff]
        %v3417 = vld [vmem:[#allocation18 + $0x3a8] sm:$0xff]
        %v3418 = vld [vmem:[#allocation18 + $0x3b0] sm:$0xff]
        %v3419 = vld [vmem:[#allocation18 + $0x3b8] sm:$0xff]
        %v3420 = vld [vmem:[#allocation18 + $0x3c0] sm:$0xff]
        %v3421 = vld [vmem:[#allocation18 + $0x3c8] sm:$0xff]
        %v3422 = vld [vmem:[#allocation18 + $0x3d0] sm:$0xff]
        %v3423 = vld [vmem:[#allocation18 + $0x3d8] sm:$0xff]
        %v3424 = vld [vmem:[#allocation18 + $0x3e0] sm:$0xff]
        %v3425 = vld [vmem:[#allocation18 + $0x3e8] sm:$0xff]
        %v3426 = vld [vmem:[#allocation18 + $0x3f0] sm:$0xff]
        %v3427 = vld [vmem:[#allocation18 + $0x3f8] sm:$0xff]
        %v3444 = vunpack.c.l.b16 %v3284
        %v3445 = vunpack.c.l.b16 %v3285
        %v3446 = vunpack.c.l.b16 %v3286
        %v3447 = vunpack.c.l.b16 %v3287
        %v3448 = vunpack.c.l.b16 %v3288
        %v3449 = vunpack.c.l.b16 %v3289
        %v3450 = vunpack.c.l.b16 %v3290
        %v3451 = vunpack.c.l.b16 %v3291
        %v3452 = vunpack.c.l.b16 %v3292
        %v3453 = vunpack.c.l.b16 %v3293
        %v3454 = vunpack.c.l.b16 %v3294
        %v3455 = vunpack.c.l.b16 %v3295
        %v3456 = vunpack.c.l.b16 %v3296
        %v3457 = vunpack.c.l.b16 %v3297
        %v3458 = vunpack.c.l.b16 %v3298
        %v3459 = vunpack.c.l.b16 %v3299
        %v3460 = vsel %vm1552, %v3446, %v3444
        %v3461 = vsel %vm1555, %v3448, %v3460
        %v3462 = vsel %vm1558, %v3450, %v3461
        %v3463 = vsel %vm1561, %v3452, %v3462
        %v3464 = vsel %vm1564, %v3454, %v3463
        %v3465 = vsel %vm1567, %v3456, %v3464
        %v3466 = vsel %vm1828, %v3458, %v3465
        %v3467 = vsel %vm1552, %v3447, %v3445
        %v3468 = vsel %vm1555, %v3449, %v3467
        %v3469 = vsel %vm1558, %v3451, %v3468
        %v3470 = vsel %vm1561, %v3453, %v3469
        %v3471 = vsel %vm1564, %v3455, %v3470
        %v3472 = vsel %vm1567, %v3457, %v3471
        %v3473 = vsel %vm1828, %v3459, %v3472
        %v3474 = vpack.c.b16 %v3466, %v3466
        %v3475 = vpack.c.b16 %v3473, %v3473
        %v3606 = vunpack.c.l.b16 %v3300
        %v3607 = vunpack.c.h.b16 %v3300
        %v3608 = vunpack.c.l.b16 %v3301
        %v3609 = vunpack.c.h.b16 %v3301
        %v3610 = vunpack.c.l.b16 %v3302
        %v3611 = vunpack.c.h.b16 %v3302
        %v3612 = vunpack.c.l.b16 %v3303
        %v3613 = vunpack.c.h.b16 %v3303
        %v3614 = vunpack.c.l.b16 %v3304
        %v3615 = vunpack.c.h.b16 %v3304
        %v3616 = vunpack.c.l.b16 %v3305
        %v3617 = vunpack.c.h.b16 %v3305
        %v3618 = vunpack.c.l.b16 %v3306
        %v3619 = vunpack.c.h.b16 %v3306
        %v3620 = vunpack.c.l.b16 %v3307
        %v3621 = vunpack.c.h.b16 %v3307
        %v3622 = vunpack.c.l.b16 %v3308
        %v3623 = vunpack.c.h.b16 %v3308
        %v3624 = vunpack.c.l.b16 %v3309
        %v3625 = vunpack.c.h.b16 %v3309
        %v3626 = vunpack.c.l.b16 %v3310
        %v3627 = vunpack.c.h.b16 %v3310
        %v3628 = vunpack.c.l.b16 %v3311
        %v3629 = vunpack.c.h.b16 %v3311
        %v3630 = vunpack.c.l.b16 %v3312
        %v3631 = vunpack.c.h.b16 %v3312
        %v3632 = vunpack.c.l.b16 %v3313
        %v3633 = vunpack.c.h.b16 %v3313
        %v3634 = vunpack.c.l.b16 %v3314
        %v3635 = vunpack.c.h.b16 %v3314
        %v3636 = vunpack.c.l.b16 %v3315
        %v3637 = vunpack.c.h.b16 %v3315
        %v3638 = vunpack.c.l.b16 %v3316
        %v3639 = vunpack.c.h.b16 %v3316
        %v3640 = vunpack.c.l.b16 %v3317
        %v3641 = vunpack.c.h.b16 %v3317
        %v3642 = vunpack.c.l.b16 %v3318
        %v3643 = vunpack.c.h.b16 %v3318
        %v3644 = vunpack.c.l.b16 %v3319
        %v3645 = vunpack.c.h.b16 %v3319
        %v3646 = vunpack.c.l.b16 %v3320
        %v3647 = vunpack.c.h.b16 %v3320
        %v3648 = vunpack.c.l.b16 %v3321
        %v3649 = vunpack.c.h.b16 %v3321
        %v3650 = vunpack.c.l.b16 %v3322
        %v3651 = vunpack.c.h.b16 %v3322
        %v3652 = vunpack.c.l.b16 %v3323
        %v3653 = vunpack.c.h.b16 %v3323
        %v3654 = vunpack.c.l.b16 %v3324
        %v3655 = vunpack.c.h.b16 %v3324
        %v3656 = vunpack.c.l.b16 %v3325
        %v3657 = vunpack.c.h.b16 %v3325
        %v3658 = vunpack.c.l.b16 %v3326
        %v3659 = vunpack.c.h.b16 %v3326
        %v3660 = vunpack.c.l.b16 %v3327
        %v3661 = vunpack.c.h.b16 %v3327
        %v3662 = vunpack.c.l.b16 %v3328
        %v3663 = vunpack.c.h.b16 %v3328
        %v3664 = vunpack.c.l.b16 %v3329
        %v3665 = vunpack.c.h.b16 %v3329
        %v3666 = vunpack.c.l.b16 %v3330
        %v3667 = vunpack.c.h.b16 %v3330
        %v3668 = vunpack.c.l.b16 %v3331
        %v3669 = vunpack.c.h.b16 %v3331
        %v3670 = vunpack.c.l.b16 %v3332
        %v3671 = vunpack.c.h.b16 %v3332
        %v3672 = vunpack.c.l.b16 %v3333
        %v3673 = vunpack.c.h.b16 %v3333
        %v3674 = vunpack.c.l.b16 %v3334
        %v3675 = vunpack.c.h.b16 %v3334
        %v3676 = vunpack.c.l.b16 %v3335
        %v3677 = vunpack.c.h.b16 %v3335
        %v3678 = vunpack.c.l.b16 %v3336
        %v3679 = vunpack.c.h.b16 %v3336
        %v3680 = vunpack.c.l.b16 %v3337
        %v3681 = vunpack.c.h.b16 %v3337
        %v3682 = vunpack.c.l.b16 %v3338
        %v3683 = vunpack.c.h.b16 %v3338
        %v3684 = vunpack.c.l.b16 %v3339
        %v3685 = vunpack.c.h.b16 %v3339
        %v3686 = vunpack.c.l.b16 %v3340
        %v3687 = vunpack.c.h.b16 %v3340
        %v3688 = vunpack.c.l.b16 %v3341
        %v3689 = vunpack.c.h.b16 %v3341
        %v3690 = vunpack.c.l.b16 %v3342
        %v3691 = vunpack.c.h.b16 %v3342
        %v3692 = vunpack.c.l.b16 %v3343
        %v3693 = vunpack.c.h.b16 %v3343
        %v3694 = vunpack.c.l.b16 %v3344
        %v3695 = vunpack.c.h.b16 %v3344
        %v3696 = vunpack.c.l.b16 %v3345
        %v3697 = vunpack.c.h.b16 %v3345
        %v3698 = vunpack.c.l.b16 %v3346
        %v3699 = vunpack.c.h.b16 %v3346
        %v3700 = vunpack.c.l.b16 %v3347
        %v3701 = vunpack.c.h.b16 %v3347
        %v3702 = vunpack.c.l.b16 %v3348
        %v3703 = vunpack.c.h.b16 %v3348
        %v3704 = vunpack.c.l.b16 %v3349
        %v3705 = vunpack.c.h.b16 %v3349
        %v3706 = vunpack.c.l.b16 %v3350
        %v3707 = vunpack.c.h.b16 %v3350
        %v3708 = vunpack.c.l.b16 %v3351
        %v3709 = vunpack.c.h.b16 %v3351
        %v3710 = vunpack.c.l.b16 %v3352
        %v3711 = vunpack.c.h.b16 %v3352
        %v3712 = vunpack.c.l.b16 %v3353
        %v3713 = vunpack.c.h.b16 %v3353
        %v3714 = vunpack.c.l.b16 %v3354
        %v3715 = vunpack.c.h.b16 %v3354
        %v3716 = vunpack.c.l.b16 %v3355
        %v3717 = vunpack.c.h.b16 %v3355
        %v3718 = vunpack.c.l.b16 %v3356
        %v3719 = vunpack.c.h.b16 %v3356
        %v3720 = vunpack.c.l.b16 %v3357
        %v3721 = vunpack.c.h.b16 %v3357
        %v3722 = vunpack.c.l.b16 %v3358
        %v3723 = vunpack.c.h.b16 %v3358
        %v3724 = vunpack.c.l.b16 %v3359
        %v3725 = vunpack.c.h.b16 %v3359
        %v3726 = vunpack.c.l.b16 %v3360
        %v3727 = vunpack.c.h.b16 %v3360
        %v3728 = vunpack.c.l.b16 %v3361
        %v3729 = vunpack.c.h.b16 %v3361
        %v3730 = vunpack.c.l.b16 %v3362
        %v3731 = vunpack.c.h.b16 %v3362
        %v3732 = vunpack.c.l.b16 %v3363
        %v3733 = vunpack.c.h.b16 %v3363
        %v3734 = vunpack.c.l.b16 %v3364
        %v3735 = vunpack.c.h.b16 %v3364
        %v3736 = vunpack.c.l.b16 %v3365
        %v3737 = vunpack.c.h.b16 %v3365
        %v3738 = vunpack.c.l.b16 %v3366
        %v3739 = vunpack.c.h.b16 %v3366
        %v3740 = vunpack.c.l.b16 %v3367
        %v3741 = vunpack.c.h.b16 %v3367
        %v3742 = vunpack.c.l.b16 %v3368
        %v3743 = vunpack.c.h.b16 %v3368
        %v3744 = vunpack.c.l.b16 %v3369
        %v3745 = vunpack.c.h.b16 %v3369
        %v3746 = vunpack.c.l.b16 %v3370
        %v3747 = vunpack.c.h.b16 %v3370
        %v3748 = vunpack.c.l.b16 %v3371
        %v3749 = vunpack.c.h.b16 %v3371
        %v3750 = vunpack.c.l.b16 %v3372
        %v3751 = vunpack.c.h.b16 %v3372
        %v3752 = vunpack.c.l.b16 %v3373
        %v3753 = vunpack.c.h.b16 %v3373
        %v3754 = vunpack.c.l.b16 %v3374
        %v3755 = vunpack.c.h.b16 %v3374
        %v3756 = vunpack.c.l.b16 %v3375
        %v3757 = vunpack.c.h.b16 %v3375
        %v3758 = vunpack.c.l.b16 %v3376
        %v3759 = vunpack.c.h.b16 %v3376
        %v3760 = vunpack.c.l.b16 %v3377
        %v3761 = vunpack.c.h.b16 %v3377
        %v3762 = vunpack.c.l.b16 %v3378
        %v3763 = vunpack.c.h.b16 %v3378
        %v3764 = vunpack.c.l.b16 %v3379
        %v3765 = vunpack.c.h.b16 %v3379
        %v3766 = vunpack.c.l.b16 %v3380
        %v3767 = vunpack.c.h.b16 %v3380
        %v3768 = vunpack.c.l.b16 %v3381
        %v3769 = vunpack.c.h.b16 %v3381
        %v3770 = vunpack.c.l.b16 %v3382
        %v3771 = vunpack.c.h.b16 %v3382
        %v3772 = vunpack.c.l.b16 %v3383
        %v3773 = vunpack.c.h.b16 %v3383
        %v3774 = vunpack.c.l.b16 %v3384
        %v3775 = vunpack.c.h.b16 %v3384
        %v3776 = vunpack.c.l.b16 %v3385
        %v3777 = vunpack.c.h.b16 %v3385
        %v3778 = vunpack.c.l.b16 %v3386
        %v3779 = vunpack.c.h.b16 %v3386
        %v3780 = vunpack.c.l.b16 %v3387
        %v3781 = vunpack.c.h.b16 %v3387
        %v3782 = vunpack.c.l.b16 %v3388
        %v3783 = vunpack.c.h.b16 %v3388
        %v3784 = vunpack.c.l.b16 %v3389
        %v3785 = vunpack.c.h.b16 %v3389
        %v3786 = vunpack.c.l.b16 %v3390
        %v3787 = vunpack.c.h.b16 %v3390
        %v3788 = vunpack.c.l.b16 %v3391
        %v3789 = vunpack.c.h.b16 %v3391
        %v3790 = vunpack.c.l.b16 %v3392
        %v3791 = vunpack.c.h.b16 %v3392
        %v3792 = vunpack.c.l.b16 %v3393
        %v3793 = vunpack.c.h.b16 %v3393
        %v3794 = vunpack.c.l.b16 %v3394
        %v3795 = vunpack.c.h.b16 %v3394
        %v3796 = vunpack.c.l.b16 %v3395
        %v3797 = vunpack.c.h.b16 %v3395
        %v3798 = vunpack.c.l.b16 %v3396
        %v3799 = vunpack.c.h.b16 %v3396
        %v3800 = vunpack.c.l.b16 %v3397
        %v3801 = vunpack.c.h.b16 %v3397
        %v3802 = vunpack.c.l.b16 %v3398
        %v3803 = vunpack.c.h.b16 %v3398
        %v3804 = vunpack.c.l.b16 %v3399
        %v3805 = vunpack.c.h.b16 %v3399
        %v3806 = vunpack.c.l.b16 %v3400
        %v3807 = vunpack.c.h.b16 %v3400
        %v3808 = vunpack.c.l.b16 %v3401
        %v3809 = vunpack.c.h.b16 %v3401
        %v3810 = vunpack.c.l.b16 %v3402
        %v3811 = vunpack.c.h.b16 %v3402
        %v3812 = vunpack.c.l.b16 %v3403
        %v3813 = vunpack.c.h.b16 %v3403
        %v3814 = vunpack.c.l.b16 %v3404
        %v3815 = vunpack.c.h.b16 %v3404
        %v3816 = vunpack.c.l.b16 %v3405
        %v3817 = vunpack.c.h.b16 %v3405
        %v3818 = vunpack.c.l.b16 %v3406
        %v3819 = vunpack.c.h.b16 %v3406
        %v3820 = vunpack.c.l.b16 %v3407
        %v3821 = vunpack.c.h.b16 %v3407
        %v3822 = vunpack.c.l.b16 %v3408
        %v3823 = vunpack.c.h.b16 %v3408
        %v3824 = vunpack.c.l.b16 %v3409
        %v3825 = vunpack.c.h.b16 %v3409
        %v3826 = vunpack.c.l.b16 %v3410
        %v3827 = vunpack.c.h.b16 %v3410
        %v3828 = vunpack.c.l.b16 %v3411
        %v3829 = vunpack.c.h.b16 %v3411
        %v3830 = vunpack.c.l.b16 %v3412
        %v3831 = vunpack.c.h.b16 %v3412
        %v3832 = vunpack.c.l.b16 %v3413
        %v3833 = vunpack.c.h.b16 %v3413
        %v3834 = vunpack.c.l.b16 %v3414
        %v3835 = vunpack.c.h.b16 %v3414
        %v3836 = vunpack.c.l.b16 %v3415
        %v3837 = vunpack.c.h.b16 %v3415
        %v3838 = vunpack.c.l.b16 %v3416
        %v3839 = vunpack.c.h.b16 %v3416
        %v3840 = vunpack.c.l.b16 %v3417
        %v3841 = vunpack.c.h.b16 %v3417
        %v3842 = vunpack.c.l.b16 %v3418
        %v3843 = vunpack.c.h.b16 %v3418
        %v3844 = vunpack.c.l.b16 %v3419
        %v3845 = vunpack.c.h.b16 %v3419
        %v3846 = vunpack.c.l.b16 %v3420
        %v3847 = vunpack.c.h.b16 %v3420
        %v3848 = vunpack.c.l.b16 %v3421
        %v3849 = vunpack.c.h.b16 %v3421
        %v3850 = vunpack.c.l.b16 %v3422
        %v3851 = vunpack.c.h.b16 %v3422
        %v3852 = vunpack.c.l.b16 %v3423
        %v3853 = vunpack.c.h.b16 %v3423
        %v3854 = vunpack.c.l.b16 %v3424
        %v3855 = vunpack.c.h.b16 %v3424
        %v3856 = vunpack.c.l.b16 %v3425
        %v3857 = vunpack.c.h.b16 %v3425
        %v3858 = vunpack.c.l.b16 %v3426
        %v3859 = vunpack.c.h.b16 %v3426
        %v3860 = vunpack.c.l.b16 %v3427
        %v3861 = vunpack.c.h.b16 %v3427
        %v3862 = vpack.c.b16 %v3614, %v3606
        %v3863 = vpack.c.b16 %v3615, %v3607
        %v3864 = vpack.c.b16 %v3616, %v3608
        %v3865 = vpack.c.b16 %v3617, %v3609
        %v3866 = vpack.c.b16 %v3618, %v3610
        %v3867 = vpack.c.b16 %v3619, %v3611
        %v3868 = vpack.c.b16 %v3620, %v3612
        %v3869 = vpack.c.b16 %v3621, %v3613
        %v3870 = vpack.c.b16 %v3630, %v3622
        %v3871 = vpack.c.b16 %v3631, %v3623
        %v3872 = vpack.c.b16 %v3632, %v3624
        %v3873 = vpack.c.b16 %v3633, %v3625
        %v3874 = vpack.c.b16 %v3634, %v3626
        %v3875 = vpack.c.b16 %v3635, %v3627
        %v3876 = vpack.c.b16 %v3636, %v3628
        %v3877 = vpack.c.b16 %v3637, %v3629
        %v3878 = vpack.c.b16 %v3646, %v3638
        %v3879 = vpack.c.b16 %v3647, %v3639
        %v3880 = vpack.c.b16 %v3648, %v3640
        %v3881 = vpack.c.b16 %v3649, %v3641
        %v3882 = vpack.c.b16 %v3650, %v3642
        %v3883 = vpack.c.b16 %v3651, %v3643
        %v3884 = vpack.c.b16 %v3652, %v3644
        %v3885 = vpack.c.b16 %v3653, %v3645
        %v3886 = vpack.c.b16 %v3662, %v3654
        %v3887 = vpack.c.b16 %v3663, %v3655
        %v3888 = vpack.c.b16 %v3664, %v3656
        %v3889 = vpack.c.b16 %v3665, %v3657
        %v3890 = vpack.c.b16 %v3666, %v3658
        %v3891 = vpack.c.b16 %v3667, %v3659
        %v3892 = vpack.c.b16 %v3668, %v3660
        %v3893 = vpack.c.b16 %v3669, %v3661
        %v3894 = vpack.c.b16 %v3678, %v3670
        %v3895 = vpack.c.b16 %v3679, %v3671
        %v3896 = vpack.c.b16 %v3680, %v3672
        %v3897 = vpack.c.b16 %v3681, %v3673
        %v3898 = vpack.c.b16 %v3682, %v3674
        %v3899 = vpack.c.b16 %v3683, %v3675
        %v3900 = vpack.c.b16 %v3684, %v3676
        %v3901 = vpack.c.b16 %v3685, %v3677
        %v3902 = vpack.c.b16 %v3694, %v3686
        %v3903 = vpack.c.b16 %v3695, %v3687
        %v3904 = vpack.c.b16 %v3696, %v3688
        %v3905 = vpack.c.b16 %v3697, %v3689
        %v3906 = vpack.c.b16 %v3698, %v3690
        %v3907 = vpack.c.b16 %v3699, %v3691
        %v3908 = vpack.c.b16 %v3700, %v3692
        %v3909 = vpack.c.b16 %v3701, %v3693
        %v3910 = vpack.c.b16 %v3710, %v3702
        %v3911 = vpack.c.b16 %v3711, %v3703
        %v3912 = vpack.c.b16 %v3712, %v3704
        %v3913 = vpack.c.b16 %v3713, %v3705
        %v3914 = vpack.c.b16 %v3714, %v3706
        %v3915 = vpack.c.b16 %v3715, %v3707
        %v3916 = vpack.c.b16 %v3716, %v3708
        %v3917 = vpack.c.b16 %v3717, %v3709
        %v3918 = vpack.c.b16 %v3726, %v3718
        %v3919 = vpack.c.b16 %v3727, %v3719
        %v3920 = vpack.c.b16 %v3728, %v3720
        %v3921 = vpack.c.b16 %v3729, %v3721
        %v3922 = vpack.c.b16 %v3730, %v3722
        %v3923 = vpack.c.b16 %v3731, %v3723
        %v3924 = vpack.c.b16 %v3732, %v3724
        %v3925 = vpack.c.b16 %v3733, %v3725
        %v3926 = vpack.c.b16 %v3742, %v3734
        %v3927 = vpack.c.b16 %v3743, %v3735
        %v3928 = vpack.c.b16 %v3744, %v3736
        %v3929 = vpack.c.b16 %v3745, %v3737
        %v3930 = vpack.c.b16 %v3746, %v3738
        %v3931 = vpack.c.b16 %v3747, %v3739
        %v3932 = vpack.c.b16 %v3748, %v3740
        %v3933 = vpack.c.b16 %v3749, %v3741
        %v3934 = vpack.c.b16 %v3758, %v3750
        %v3935 = vpack.c.b16 %v3759, %v3751
        %v3936 = vpack.c.b16 %v3760, %v3752
        %v3937 = vpack.c.b16 %v3761, %v3753
        %v3938 = vpack.c.b16 %v3762, %v3754
        %v3939 = vpack.c.b16 %v3763, %v3755
        %v3940 = vpack.c.b16 %v3764, %v3756
        %v3941 = vpack.c.b16 %v3765, %v3757
        %v3942 = vpack.c.b16 %v3774, %v3766
        %v3943 = vpack.c.b16 %v3775, %v3767
        %v3944 = vpack.c.b16 %v3776, %v3768
        %v3945 = vpack.c.b16 %v3777, %v3769
        %v3946 = vpack.c.b16 %v3778, %v3770
        %v3947 = vpack.c.b16 %v3779, %v3771
        %v3948 = vpack.c.b16 %v3780, %v3772
        %v3949 = vpack.c.b16 %v3781, %v3773
        %v3950 = vpack.c.b16 %v3790, %v3782
        %v3951 = vpack.c.b16 %v3791, %v3783
        %v3952 = vpack.c.b16 %v3792, %v3784
        %v3953 = vpack.c.b16 %v3793, %v3785
        %v3954 = vpack.c.b16 %v3794, %v3786
        %v3955 = vpack.c.b16 %v3795, %v3787
        %v3956 = vpack.c.b16 %v3796, %v3788
        %v3957 = vpack.c.b16 %v3797, %v3789
        %v3958 = vpack.c.b16 %v3806, %v3798
        %v3959 = vpack.c.b16 %v3807, %v3799
        %v3960 = vpack.c.b16 %v3808, %v3800
        %v3961 = vpack.c.b16 %v3809, %v3801
        %v3962 = vpack.c.b16 %v3810, %v3802
        %v3963 = vpack.c.b16 %v3811, %v3803
        %v3964 = vpack.c.b16 %v3812, %v3804
        %v3965 = vpack.c.b16 %v3813, %v3805
        %v3966 = vpack.c.b16 %v3822, %v3814
        %v3967 = vpack.c.b16 %v3823, %v3815
        %v3968 = vpack.c.b16 %v3824, %v3816
        %v3969 = vpack.c.b16 %v3825, %v3817
        %v3970 = vpack.c.b16 %v3826, %v3818
        %v3971 = vpack.c.b16 %v3827, %v3819
        %v3972 = vpack.c.b16 %v3828, %v3820
        %v3973 = vpack.c.b16 %v3829, %v3821
        %v3974 = vpack.c.b16 %v3838, %v3830
        %v3975 = vpack.c.b16 %v3839, %v3831
        %v3976 = vpack.c.b16 %v3840, %v3832
        %v3977 = vpack.c.b16 %v3841, %v3833
        %v3978 = vpack.c.b16 %v3842, %v3834
        %v3979 = vpack.c.b16 %v3843, %v3835
        %v3980 = vpack.c.b16 %v3844, %v3836
        %v3981 = vpack.c.b16 %v3845, %v3837
        %v3982 = vpack.c.b16 %v3854, %v3846
        %v3983 = vpack.c.b16 %v3855, %v3847
        %v3984 = vpack.c.b16 %v3856, %v3848
        %v3985 = vpack.c.b16 %v3857, %v3849
        %v3986 = vpack.c.b16 %v3858, %v3850
        %v3987 = vpack.c.b16 %v3859, %v3851
        %v3988 = vpack.c.b16 %v3860, %v3852
        %v3989 = vpack.c.b16 %v3861, %v3853
        %4118 = vmatpush.bf16.msra.mxu0 %v3918
        %4119 = vmatpush.bf16.msra.mxu0 %v3910
        %4120 = vmatpush.bf16.msra.mxu0 %v3902
        %4121 = vmatpush.bf16.msra.mxu0 %v3894
        %4122 = vmatpush.bf16.msra.mxu0 %v3886
        %4123 = vmatpush.bf16.msra.mxu0 %v3878
        %4124 = vmatpush.bf16.msra.mxu0 %v3870
        %4125 = vmatpush.bf16.msra.mxu0 %v3862
        %4126 = vmatmul.bf16.gmra.mxu0 %v3474
        %v4127 = vpop.f32.mrf.mxu0
        %v4128 = vadd.f32 0.0, %v4127
        %v4129 = vpop.f32.mrf.mxu0
        %4130 = vdwg.mxu0
        %4131 = vmatpush.bf16.msra.mxu0 %v3982
        %4132 = vmatpush.bf16.msra.mxu0 %v3974
        %4133 = vmatpush.bf16.msra.mxu0 %v3966
        %4134 = vmatpush.bf16.msra.mxu0 %v3958
        %4135 = vmatpush.bf16.msra.mxu0 %v3950
        %4136 = vmatpush.bf16.msra.mxu0 %v3942
        %4137 = vmatpush.bf16.msra.mxu0 %v3934
        %4138 = vmatpush.bf16.msra.mxu0 %v3926
        %4139 = vmatmul.bf16.gmra.mxu0 %v3475
        %v4140 = vpop.f32.mrf.mxu0
        %v4141 = vadd.f32 %v4128, %v4140
        %v4142 = vpop.f32.mrf.mxu0
        %4143 = vdwg.mxu0
        %4144 = vmatpush.bf16.msra.mxu0 %v3919
        %4145 = vmatpush.bf16.msra.mxu0 %v3911
        %4146 = vmatpush.bf16.msra.mxu0 %v3903
        %4147 = vmatpush.bf16.msra.mxu0 %v3895
        %4148 = vmatpush.bf16.msra.mxu0 %v3887
        %4149 = vmatpush.bf16.msra.mxu0 %v3879
        %4150 = vmatpush.bf16.msra.mxu0 %v3871
        %4151 = vmatpush.bf16.msra.mxu0 %v3863
        %4152 = vmatmul.bf16.gmra.mxu0 %v3474
        %v4153 = vpop.f32.mrf.mxu0
        %v4154 = vadd.f32 0.0, %v4153
        %v4155 = vpop.f32.mrf.mxu0
        %4156 = vdwg.mxu0
        %4157 = vmatpush.bf16.msra.mxu0 %v3983
        %4158 = vmatpush.bf16.msra.mxu0 %v3975
        %4159 = vmatpush.bf16.msra.mxu0 %v3967
        %4160 = vmatpush.bf16.msra.mxu0 %v3959
        %4161 = vmatpush.bf16.msra.mxu0 %v3951
        %4162 = vmatpush.bf16.msra.mxu0 %v3943
        %4163 = vmatpush.bf16.msra.mxu0 %v3935
        %4164 = vmatpush.bf16.msra.mxu0 %v3927
        %4165 = vmatmul.bf16.gmra.mxu0 %v3475
        %v4166 = vpop.f32.mrf.mxu0
        %v4167 = vadd.f32 %v4154, %v4166
        %v4168 = vpop.f32.mrf.mxu0
        %4169 = vdwg.mxu0
        %4170 = vmatpush.bf16.msra.mxu0 %v3920
        %4171 = vmatpush.bf16.msra.mxu0 %v3912
        %4172 = vmatpush.bf16.msra.mxu0 %v3904
        %4173 = vmatpush.bf16.msra.mxu0 %v3896
        %4174 = vmatpush.bf16.msra.mxu0 %v3888
        %4175 = vmatpush.bf16.msra.mxu0 %v3880
        %4176 = vmatpush.bf16.msra.mxu0 %v3872
        %4177 = vmatpush.bf16.msra.mxu0 %v3864
        %4178 = vmatmul.bf16.gmra.mxu0 %v3474
        %v4179 = vpop.f32.mrf.mxu0
        %v4180 = vadd.f32 0.0, %v4179
        %v4181 = vpop.f32.mrf.mxu0
        %4182 = vdwg.mxu0
        %4183 = vmatpush.bf16.msra.mxu0 %v3984
        %4184 = vmatpush.bf16.msra.mxu0 %v3976
        %4185 = vmatpush.bf16.msra.mxu0 %v3968
        %4186 = vmatpush.bf16.msra.mxu0 %v3960
        %4187 = vmatpush.bf16.msra.mxu0 %v3952
        %4188 = vmatpush.bf16.msra.mxu0 %v3944
        %4189 = vmatpush.bf16.msra.mxu0 %v3936
        %4190 = vmatpush.bf16.msra.mxu0 %v3928
        %4191 = vmatmul.bf16.gmra.mxu0 %v3475
        %v4192 = vpop.f32.mrf.mxu0
        %v4193 = vadd.f32 %v4180, %v4192
        %v4194 = vpop.f32.mrf.mxu0
        %4195 = vdwg.mxu0
        %4196 = vmatpush.bf16.msra.mxu0 %v3921
        %4197 = vmatpush.bf16.msra.mxu0 %v3913
        %4198 = vmatpush.bf16.msra.mxu0 %v3905
        %4199 = vmatpush.bf16.msra.mxu0 %v3897
        %4200 = vmatpush.bf16.msra.mxu0 %v3889
        %4201 = vmatpush.bf16.msra.mxu0 %v3881
        %4202 = vmatpush.bf16.msra.mxu0 %v3873
        %4203 = vmatpush.bf16.msra.mxu0 %v3865
        %4204 = vmatmul.bf16.gmra.mxu0 %v3474
        %v4205 = vpop.f32.mrf.mxu0
        %v4206 = vadd.f32 0.0, %v4205
        %v4207 = vpop.f32.mrf.mxu0
        %4208 = vdwg.mxu0
        %4209 = vmatpush.bf16.msra.mxu0 %v3985
        %4210 = vmatpush.bf16.msra.mxu0 %v3977
        %4211 = vmatpush.bf16.msra.mxu0 %v3969
        %4212 = vmatpush.bf16.msra.mxu0 %v3961
        %4213 = vmatpush.bf16.msra.mxu0 %v3953
        %4214 = vmatpush.bf16.msra.mxu0 %v3945
        %4215 = vmatpush.bf16.msra.mxu0 %v3937
        %4216 = vmatpush.bf16.msra.mxu0 %v3929
        %4217 = vmatmul.bf16.gmra.mxu0 %v3475
        %v4218 = vpop.f32.mrf.mxu0
        %v4219 = vadd.f32 %v4206, %v4218
        %v4220 = vpop.f32.mrf.mxu0
        %4221 = vdwg.mxu0
        %4222 = vmatpush.bf16.msra.mxu0 %v3922
        %4223 = vmatpush.bf16.msra.mxu0 %v3914
        %4224 = vmatpush.bf16.msra.mxu0 %v3906
        %4225 = vmatpush.bf16.msra.mxu0 %v3898
        %4226 = vmatpush.bf16.msra.mxu0 %v3890
        %4227 = vmatpush.bf16.msra.mxu0 %v3882
        %4228 = vmatpush.bf16.msra.mxu0 %v3874
        %4229 = vmatpush.bf16.msra.mxu0 %v3866
        %4230 = vmatmul.bf16.gmra.mxu0 %v3474
        %v4231 = vpop.f32.mrf.mxu0
        %v4232 = vadd.f32 0.0, %v4231
        %v4233 = vpop.f32.mrf.mxu0
        %4234 = vdwg.mxu0
        %4235 = vmatpush.bf16.msra.mxu0 %v3986
        %4236 = vmatpush.bf16.msra.mxu0 %v3978
        %4237 = vmatpush.bf16.msra.mxu0 %v3970
        %4238 = vmatpush.bf16.msra.mxu0 %v3962
        %4239 = vmatpush.bf16.msra.mxu0 %v3954
        %4240 = vmatpush.bf16.msra.mxu0 %v3946
        %4241 = vmatpush.bf16.msra.mxu0 %v3938
        %4242 = vmatpush.bf16.msra.mxu0 %v3930
        %4243 = vmatmul.bf16.gmra.mxu0 %v3475
        %v4244 = vpop.f32.mrf.mxu0
        %v4245 = vadd.f32 %v4232, %v4244
        %v4246 = vpop.f32.mrf.mxu0
        %4247 = vdwg.mxu0
        %4248 = vmatpush.bf16.msra.mxu0 %v3923
        %4249 = vmatpush.bf16.msra.mxu0 %v3915
        %4250 = vmatpush.bf16.msra.mxu0 %v3907
        %4251 = vmatpush.bf16.msra.mxu0 %v3899
        %4252 = vmatpush.bf16.msra.mxu0 %v3891
        %4253 = vmatpush.bf16.msra.mxu0 %v3883
        %4254 = vmatpush.bf16.msra.mxu0 %v3875
        %4255 = vmatpush.bf16.msra.mxu0 %v3867
        %4256 = vmatmul.bf16.gmra.mxu0 %v3474
        %v4257 = vpop.f32.mrf.mxu0
        %v4258 = vadd.f32 0.0, %v4257
        %v4259 = vpop.f32.mrf.mxu0
        %4260 = vdwg.mxu0
        %4261 = vmatpush.bf16.msra.mxu0 %v3987
        %4262 = vmatpush.bf16.msra.mxu0 %v3979
        %4263 = vmatpush.bf16.msra.mxu0 %v3971
        %4264 = vmatpush.bf16.msra.mxu0 %v3963
        %4265 = vmatpush.bf16.msra.mxu0 %v3955
        %4266 = vmatpush.bf16.msra.mxu0 %v3947
        %4267 = vmatpush.bf16.msra.mxu0 %v3939
        %4268 = vmatpush.bf16.msra.mxu0 %v3931
        %4269 = vmatmul.bf16.gmra.mxu0 %v3475
        %v4270 = vpop.f32.mrf.mxu0
        %v4271 = vadd.f32 %v4258, %v4270
        %v4272 = vpop.f32.mrf.mxu0
        %4273 = vdwg.mxu0
        %4274 = vmatpush.bf16.msra.mxu0 %v3924
        %4275 = vmatpush.bf16.msra.mxu0 %v3916
        %4276 = vmatpush.bf16.msra.mxu0 %v3908
        %4277 = vmatpush.bf16.msra.mxu0 %v3900
        %4278 = vmatpush.bf16.msra.mxu0 %v3892
        %4279 = vmatpush.bf16.msra.mxu0 %v3884
        %4280 = vmatpush.bf16.msra.mxu0 %v3876
        %4281 = vmatpush.bf16.msra.mxu0 %v3868
        %4282 = vmatmul.bf16.gmra.mxu0 %v3474
        %v4283 = vpop.f32.mrf.mxu0
        %v4284 = vadd.f32 0.0, %v4283
        %v4285 = vpop.f32.mrf.mxu0
        %4286 = vdwg.mxu0
        %4287 = vmatpush.bf16.msra.mxu0 %v3988
        %4288 = vmatpush.bf16.msra.mxu0 %v3980
        %4289 = vmatpush.bf16.msra.mxu0 %v3972
        %4290 = vmatpush.bf16.msra.mxu0 %v3964
        %4291 = vmatpush.bf16.msra.mxu0 %v3956
        %4292 = vmatpush.bf16.msra.mxu0 %v3948
        %4293 = vmatpush.bf16.msra.mxu0 %v3940
        %4294 = vmatpush.bf16.msra.mxu0 %v3932
        %4295 = vmatmul.bf16.gmra.mxu0 %v3475
        %v4296 = vpop.f32.mrf.mxu0
        %v4297 = vadd.f32 %v4284, %v4296
        %v4298 = vpop.f32.mrf.mxu0
        %4299 = vdwg.mxu0
        %4300 = vmatpush.bf16.msra.mxu0 %v3925
        %4301 = vmatpush.bf16.msra.mxu0 %v3917
        %4302 = vmatpush.bf16.msra.mxu0 %v3909
        %4303 = vmatpush.bf16.msra.mxu0 %v3901
        %4304 = vmatpush.bf16.msra.mxu0 %v3893
        %4305 = vmatpush.bf16.msra.mxu0 %v3885
        %4306 = vmatpush.bf16.msra.mxu0 %v3877
        %4307 = vmatpush.bf16.msra.mxu0 %v3869
        %4308 = vmatmul.bf16.gmra.mxu0 %v3474
        %v4309 = vpop.f32.mrf.mxu0
        %v4310 = vadd.f32 0.0, %v4309
        %v4311 = vpop.f32.mrf.mxu0
        %4312 = vdwg.mxu0
        %4313 = vmatpush.bf16.msra.mxu0 %v3989
        %4314 = vmatpush.bf16.msra.mxu0 %v3981
        %4315 = vmatpush.bf16.msra.mxu0 %v3973
        %4316 = vmatpush.bf16.msra.mxu0 %v3965
        %4317 = vmatpush.bf16.msra.mxu0 %v3957
        %4318 = vmatpush.bf16.msra.mxu0 %v3949
        %4319 = vmatpush.bf16.msra.mxu0 %v3941
        %4320 = vmatpush.bf16.msra.mxu0 %v3933
        %4321 = vmatmul.bf16.gmra.mxu0 %v3475
        %v4322 = vpop.f32.mrf.mxu0
        %v4323 = vadd.f32 %v4310, %v4322
        %v4324 = vpop.f32.mrf.mxu0
        %4325 = vdwg.mxu0
        %v4326 = vadd.f32 %v3099, %v4141
        %v4327 = vadd.f32 %v3125, %v4167
        %v4328 = vadd.f32 %v3151, %v4193
        %v4329 = vadd.f32 %v3177, %v4219
        %v4330 = vadd.f32 %v3203, %v4245
        %v4331 = vadd.f32 %v3229, %v4271
        %v4332 = vadd.f32 %v3255, %v4297
        %v4333 = vadd.f32 %v3281, %v4323
        %s4334 = sld [smem:[#allocation5 + %s707]]
        %4336 = dma.done [#allocation3], 16
        %s4337 = sld [smem:[#allocation5 + %s723]]
        %4339 = dma.done %s727, 16
        %s4340 = sld [smem:[#allocation5 + %s741]]
        %4342 = dma.done %s745, 16
        %s4343 = sld [smem:[#allocation5 + %s759]]
        %4345 = dma.done %s763, 16
        %s4346 = sld [smem:[#allocation5 + %s777]]
        %4348 = dma.done %s781, 16
        %s4349 = sld [smem:[#allocation5 + %s795]]
        %4351 = dma.done %s799, 16
        %s4352 = sld [smem:[#allocation5 + %s813]]
        %4354 = dma.done %s817, 16
        %s4355 = sld [smem:[#allocation5 + %s831]]
        %4357 = dma.done %s835, 16
        %v4358 = vld [vmem:[#allocation2] sm:$0xff]
        %v4359 = vpack.c.bf16 %v4358, %v4358
        %v4360 = vld [vmem:[#allocation19] sm:$0xff]
        %v4361 = vld [vmem:[#allocation19 + $0x8] sm:$0xff]
        %v4362 = vld [vmem:[#allocation19 + $0x10] sm:$0xff]
        %v4363 = vld [vmem:[#allocation19 + $0x18] sm:$0xff]
        %v4364 = vld [vmem:[#allocation19 + $0x20] sm:$0xff]
        %v4365 = vld [vmem:[#allocation19 + $0x28] sm:$0xff]
        %v4366 = vld [vmem:[#allocation19 + $0x30] sm:$0xff]
        %v4367 = vld [vmem:[#allocation19 + $0x38] sm:$0xff]
        %v4368 = vld [vmem:[#allocation19 + $0x40] sm:$0xff]
        %v4369 = vld [vmem:[#allocation19 + $0x48] sm:$0xff]
        %v4370 = vld [vmem:[#allocation19 + $0x50] sm:$0xff]
        %v4371 = vld [vmem:[#allocation19 + $0x58] sm:$0xff]
        %v4372 = vld [vmem:[#allocation19 + $0x60] sm:$0xff]
        %v4373 = vld [vmem:[#allocation19 + $0x68] sm:$0xff]
        %v4374 = vld [vmem:[#allocation19 + $0x70] sm:$0xff]
        %v4375 = vld [vmem:[#allocation19 + $0x78] sm:$0xff]
        %v4376 = vld [vmem:[#allocation19 + $0x80] sm:$0xff]
        %v4377 = vld [vmem:[#allocation19 + $0x88] sm:$0xff]
        %v4378 = vld [vmem:[#allocation19 + $0x90] sm:$0xff]
        %v4379 = vld [vmem:[#allocation19 + $0x98] sm:$0xff]
        %v4380 = vld [vmem:[#allocation19 + $0xa0] sm:$0xff]
        %v4381 = vld [vmem:[#allocation19 + $0xa8] sm:$0xff]
        %v4382 = vld [vmem:[#allocation19 + $0xb0] sm:$0xff]
        %v4383 = vld [vmem:[#allocation19 + $0xb8] sm:$0xff]
        %v4384 = vld [vmem:[#allocation19 + $0xc0] sm:$0xff]
        %v4385 = vld [vmem:[#allocation19 + $0xc8] sm:$0xff]
        %v4386 = vld [vmem:[#allocation19 + $0xd0] sm:$0xff]
        %v4387 = vld [vmem:[#allocation19 + $0xd8] sm:$0xff]
        %v4388 = vld [vmem:[#allocation19 + $0xe0] sm:$0xff]
        %v4389 = vld [vmem:[#allocation19 + $0xe8] sm:$0xff]
        %v4390 = vld [vmem:[#allocation19 + $0xf0] sm:$0xff]
        %v4391 = vld [vmem:[#allocation19 + $0xf8] sm:$0xff]
        %v4392 = vld [vmem:[#allocation19 + $0x100] sm:$0xff]
        %v4393 = vld [vmem:[#allocation19 + $0x108] sm:$0xff]
        %v4394 = vld [vmem:[#allocation19 + $0x110] sm:$0xff]
        %v4395 = vld [vmem:[#allocation19 + $0x118] sm:$0xff]
        %v4396 = vld [vmem:[#allocation19 + $0x120] sm:$0xff]
        %v4397 = vld [vmem:[#allocation19 + $0x128] sm:$0xff]
        %v4398 = vld [vmem:[#allocation19 + $0x130] sm:$0xff]
        %v4399 = vld [vmem:[#allocation19 + $0x138] sm:$0xff]
        %v4400 = vld [vmem:[#allocation19 + $0x140] sm:$0xff]
        %v4401 = vld [vmem:[#allocation19 + $0x148] sm:$0xff]
        %v4402 = vld [vmem:[#allocation19 + $0x150] sm:$0xff]
        %v4403 = vld [vmem:[#allocation19 + $0x158] sm:$0xff]
        %v4404 = vld [vmem:[#allocation19 + $0x160] sm:$0xff]
        %v4405 = vld [vmem:[#allocation19 + $0x168] sm:$0xff]
        %v4406 = vld [vmem:[#allocation19 + $0x170] sm:$0xff]
        %v4407 = vld [vmem:[#allocation19 + $0x178] sm:$0xff]
        %v4408 = vld [vmem:[#allocation19 + $0x180] sm:$0xff]
        %v4409 = vld [vmem:[#allocation19 + $0x188] sm:$0xff]
        %v4410 = vld [vmem:[#allocation19 + $0x190] sm:$0xff]
        %v4411 = vld [vmem:[#allocation19 + $0x198] sm:$0xff]
        %v4412 = vld [vmem:[#allocation19 + $0x1a0] sm:$0xff]
        %v4413 = vld [vmem:[#allocation19 + $0x1a8] sm:$0xff]
        %v4414 = vld [vmem:[#allocation19 + $0x1b0] sm:$0xff]
        %v4415 = vld [vmem:[#allocation19 + $0x1b8] sm:$0xff]
        %v4416 = vld [vmem:[#allocation19 + $0x1c0] sm:$0xff]
        %v4417 = vld [vmem:[#allocation19 + $0x1c8] sm:$0xff]
        %v4418 = vld [vmem:[#allocation19 + $0x1d0] sm:$0xff]
        %v4419 = vld [vmem:[#allocation19 + $0x1d8] sm:$0xff]
        %v4420 = vld [vmem:[#allocation19 + $0x1e0] sm:$0xff]
        %v4421 = vld [vmem:[#allocation19 + $0x1e8] sm:$0xff]
        %v4422 = vld [vmem:[#allocation19 + $0x1f0] sm:$0xff]
        %v4423 = vld [vmem:[#allocation19 + $0x1f8] sm:$0xff]
        %v4488 = vunpack.c.l.b16 %v4360
        %v4489 = vunpack.c.h.b16 %v4360
        %v4490 = vunpack.c.l.b16 %v4361
        %v4491 = vunpack.c.h.b16 %v4361
        %v4492 = vunpack.c.l.b16 %v4362
        %v4493 = vunpack.c.h.b16 %v4362
        %v4494 = vunpack.c.l.b16 %v4363
        %v4495 = vunpack.c.h.b16 %v4363
        %v4496 = vunpack.c.l.b16 %v4364
        %v4497 = vunpack.c.h.b16 %v4364
        %v4498 = vunpack.c.l.b16 %v4365
        %v4499 = vunpack.c.h.b16 %v4365
        %v4500 = vunpack.c.l.b16 %v4366
        %v4501 = vunpack.c.h.b16 %v4366
        %v4502 = vunpack.c.l.b16 %v4367
        %v4503 = vunpack.c.h.b16 %v4367
        %v4504 = vunpack.c.l.b16 %v4368
        %v4505 = vunpack.c.h.b16 %v4368
        %v4506 = vunpack.c.l.b16 %v4369
        %v4507 = vunpack.c.h.b16 %v4369
        %v4508 = vunpack.c.l.b16 %v4370
        %v4509 = vunpack.c.h.b16 %v4370
        %v4510 = vunpack.c.l.b16 %v4371
        %v4511 = vunpack.c.h.b16 %v4371
        %v4512 = vunpack.c.l.b16 %v4372
        %v4513 = vunpack.c.h.b16 %v4372
        %v4514 = vunpack.c.l.b16 %v4373
        %v4515 = vunpack.c.h.b16 %v4373
        %v4516 = vunpack.c.l.b16 %v4374
        %v4517 = vunpack.c.h.b16 %v4374
        %v4518 = vunpack.c.l.b16 %v4375
        %v4519 = vunpack.c.h.b16 %v4375
        %v4520 = vunpack.c.l.b16 %v4376
        %v4521 = vunpack.c.h.b16 %v4376
        %v4522 = vunpack.c.l.b16 %v4377
        %v4523 = vunpack.c.h.b16 %v4377
        %v4524 = vunpack.c.l.b16 %v4378
        %v4525 = vunpack.c.h.b16 %v4378
        %v4526 = vunpack.c.l.b16 %v4379
        %v4527 = vunpack.c.h.b16 %v4379
        %v4528 = vunpack.c.l.b16 %v4380
        %v4529 = vunpack.c.h.b16 %v4380
        %v4530 = vunpack.c.l.b16 %v4381
        %v4531 = vunpack.c.h.b16 %v4381
        %v4532 = vunpack.c.l.b16 %v4382
        %v4533 = vunpack.c.h.b16 %v4382
        %v4534 = vunpack.c.l.b16 %v4383
        %v4535 = vunpack.c.h.b16 %v4383
        %v4536 = vunpack.c.l.b16 %v4384
        %v4537 = vunpack.c.h.b16 %v4384
        %v4538 = vunpack.c.l.b16 %v4385
        %v4539 = vunpack.c.h.b16 %v4385
        %v4540 = vunpack.c.l.b16 %v4386
        %v4541 = vunpack.c.h.b16 %v4386
        %v4542 = vunpack.c.l.b16 %v4387
        %v4543 = vunpack.c.h.b16 %v4387
        %v4544 = vunpack.c.l.b16 %v4388
        %v4545 = vunpack.c.h.b16 %v4388
        %v4546 = vunpack.c.l.b16 %v4389
        %v4547 = vunpack.c.h.b16 %v4389
        %v4548 = vunpack.c.l.b16 %v4390
        %v4549 = vunpack.c.h.b16 %v4390
        %v4550 = vunpack.c.l.b16 %v4391
        %v4551 = vunpack.c.h.b16 %v4391
        %v4552 = vunpack.c.l.b16 %v4392
        %v4553 = vunpack.c.h.b16 %v4392
        %v4554 = vunpack.c.l.b16 %v4393
        %v4555 = vunpack.c.h.b16 %v4393
        %v4556 = vunpack.c.l.b16 %v4394
        %v4557 = vunpack.c.h.b16 %v4394
        %v4558 = vunpack.c.l.b16 %v4395
        %v4559 = vunpack.c.h.b16 %v4395
        %v4560 = vunpack.c.l.b16 %v4396
        %v4561 = vunpack.c.h.b16 %v4396
        %v4562 = vunpack.c.l.b16 %v4397
        %v4563 = vunpack.c.h.b16 %v4397
        %v4564 = vunpack.c.l.b16 %v4398
        %v4565 = vunpack.c.h.b16 %v4398
        %v4566 = vunpack.c.l.b16 %v4399
        %v4567 = vunpack.c.h.b16 %v4399
        %v4568 = vunpack.c.l.b16 %v4400
        %v4569 = vunpack.c.h.b16 %v4400
        %v4570 = vunpack.c.l.b16 %v4401
        %v4571 = vunpack.c.h.b16 %v4401
        %v4572 = vunpack.c.l.b16 %v4402
        %v4573 = vunpack.c.h.b16 %v4402
        %v4574 = vunpack.c.l.b16 %v4403
        %v4575 = vunpack.c.h.b16 %v4403
        %v4576 = vunpack.c.l.b16 %v4404
        %v4577 = vunpack.c.h.b16 %v4404
        %v4578 = vunpack.c.l.b16 %v4405
        %v4579 = vunpack.c.h.b16 %v4405
        %v4580 = vunpack.c.l.b16 %v4406
        %v4581 = vunpack.c.h.b16 %v4406
        %v4582 = vunpack.c.l.b16 %v4407
        %v4583 = vunpack.c.h.b16 %v4407
        %v4584 = vunpack.c.l.b16 %v4408
        %v4585 = vunpack.c.h.b16 %v4408
        %v4586 = vunpack.c.l.b16 %v4409
        %v4587 = vunpack.c.h.b16 %v4409
        %v4588 = vunpack.c.l.b16 %v4410
        %v4589 = vunpack.c.h.b16 %v4410
        %v4590 = vunpack.c.l.b16 %v4411
        %v4591 = vunpack.c.h.b16 %v4411
        %v4592 = vunpack.c.l.b16 %v4412
        %v4593 = vunpack.c.h.b16 %v4412
        %v4594 = vunpack.c.l.b16 %v4413
        %v4595 = vunpack.c.h.b16 %v4413
        %v4596 = vunpack.c.l.b16 %v4414
        %v4597 = vunpack.c.h.b16 %v4414
        %v4598 = vunpack.c.l.b16 %v4415
        %v4599 = vunpack.c.h.b16 %v4415
        %v4600 = vunpack.c.l.b16 %v4416
        %v4601 = vunpack.c.h.b16 %v4416
        %v4602 = vunpack.c.l.b16 %v4417
        %v4603 = vunpack.c.h.b16 %v4417
        %v4604 = vunpack.c.l.b16 %v4418
        %v4605 = vunpack.c.h.b16 %v4418
        %v4606 = vunpack.c.l.b16 %v4419
        %v4607 = vunpack.c.h.b16 %v4419
        %v4608 = vunpack.c.l.b16 %v4420
        %v4609 = vunpack.c.h.b16 %v4420
        %v4610 = vunpack.c.l.b16 %v4421
        %v4611 = vunpack.c.h.b16 %v4421
        %v4612 = vunpack.c.l.b16 %v4422
        %v4613 = vunpack.c.h.b16 %v4422
        %v4614 = vunpack.c.l.b16 %v4423
        %v4615 = vunpack.c.h.b16 %v4423
        %v4616 = vpack.c.b16 %v4496, %v4488
        %v4617 = vpack.c.b16 %v4497, %v4489
        %v4618 = vpack.c.b16 %v4498, %v4490
        %v4619 = vpack.c.b16 %v4499, %v4491
        %v4620 = vpack.c.b16 %v4500, %v4492
        %v4621 = vpack.c.b16 %v4501, %v4493
        %v4622 = vpack.c.b16 %v4502, %v4494
        %v4623 = vpack.c.b16 %v4503, %v4495
        %v4624 = vpack.c.b16 %v4512, %v4504
        %v4625 = vpack.c.b16 %v4513, %v4505
        %v4626 = vpack.c.b16 %v4514, %v4506
        %v4627 = vpack.c.b16 %v4515, %v4507
        %v4628 = vpack.c.b16 %v4516, %v4508
        %v4629 = vpack.c.b16 %v4517, %v4509
        %v4630 = vpack.c.b16 %v4518, %v4510
        %v4631 = vpack.c.b16 %v4519, %v4511
        %v4632 = vpack.c.b16 %v4528, %v4520
        %v4633 = vpack.c.b16 %v4529, %v4521
        %v4634 = vpack.c.b16 %v4530, %v4522
        %v4635 = vpack.c.b16 %v4531, %v4523
        %v4636 = vpack.c.b16 %v4532, %v4524
        %v4637 = vpack.c.b16 %v4533, %v4525
        %v4638 = vpack.c.b16 %v4534, %v4526
        %v4639 = vpack.c.b16 %v4535, %v4527
        %v4640 = vpack.c.b16 %v4544, %v4536
        %v4641 = vpack.c.b16 %v4545, %v4537
        %v4642 = vpack.c.b16 %v4546, %v4538
        %v4643 = vpack.c.b16 %v4547, %v4539
        %v4644 = vpack.c.b16 %v4548, %v4540
        %v4645 = vpack.c.b16 %v4549, %v4541
        %v4646 = vpack.c.b16 %v4550, %v4542
        %v4647 = vpack.c.b16 %v4551, %v4543
        %v4648 = vpack.c.b16 %v4560, %v4552
        %v4649 = vpack.c.b16 %v4561, %v4553
        %v4650 = vpack.c.b16 %v4562, %v4554
        %v4651 = vpack.c.b16 %v4563, %v4555
        %v4652 = vpack.c.b16 %v4564, %v4556
        %v4653 = vpack.c.b16 %v4565, %v4557
        %v4654 = vpack.c.b16 %v4566, %v4558
        %v4655 = vpack.c.b16 %v4567, %v4559
        %v4656 = vpack.c.b16 %v4576, %v4568
        %v4657 = vpack.c.b16 %v4577, %v4569
        %v4658 = vpack.c.b16 %v4578, %v4570
        %v4659 = vpack.c.b16 %v4579, %v4571
        %v4660 = vpack.c.b16 %v4580, %v4572
        %v4661 = vpack.c.b16 %v4581, %v4573
        %v4662 = vpack.c.b16 %v4582, %v4574
        %v4663 = vpack.c.b16 %v4583, %v4575
        %v4664 = vpack.c.b16 %v4592, %v4584
        %v4665 = vpack.c.b16 %v4593, %v4585
        %v4666 = vpack.c.b16 %v4594, %v4586
        %v4667 = vpack.c.b16 %v4595, %v4587
        %v4668 = vpack.c.b16 %v4596, %v4588
        %v4669 = vpack.c.b16 %v4597, %v4589
        %v4670 = vpack.c.b16 %v4598, %v4590
        %v4671 = vpack.c.b16 %v4599, %v4591
        %v4672 = vpack.c.b16 %v4608, %v4600
        %v4673 = vpack.c.b16 %v4609, %v4601
        %v4674 = vpack.c.b16 %v4610, %v4602
        %v4675 = vpack.c.b16 %v4611, %v4603
        %v4676 = vpack.c.b16 %v4612, %v4604
        %v4677 = vpack.c.b16 %v4613, %v4605
        %v4678 = vpack.c.b16 %v4614, %v4606
        %v4679 = vpack.c.b16 %v4615, %v4607
        %4744 = vmatpush.bf16.msra.mxu0 %v4672
        %4745 = vmatpush.bf16.msra.mxu0 %v4664
        %4746 = vmatpush.bf16.msra.mxu0 %v4656
        %4747 = vmatpush.bf16.msra.mxu0 %v4648
        %4748 = vmatpush.bf16.msra.mxu0 %v4640
        %4749 = vmatpush.bf16.msra.mxu0 %v4632
        %4750 = vmatpush.bf16.msra.mxu0 %v4624
        %4751 = vmatpush.bf16.msra.mxu0 %v4616
        %4752 = vmatmul.bf16.gmra.mxu0 %v4359
        %v4753 = vpop.f32.mrf.mxu0
        %v4754 = vadd.f32 0.0, %v4753
        %v4755 = vpop.f32.mrf.mxu0
        %4756 = vdwg.mxu0
        %4757 = vmatpush.bf16.msra.mxu0 %v4673
        %4758 = vmatpush.bf16.msra.mxu0 %v4665
        %4759 = vmatpush.bf16.msra.mxu0 %v4657
        %4760 = vmatpush.bf16.msra.mxu0 %v4649
        %4761 = vmatpush.bf16.msra.mxu0 %v4641
        %4762 = vmatpush.bf16.msra.mxu0 %v4633
        %4763 = vmatpush.bf16.msra.mxu0 %v4625
        %4764 = vmatpush.bf16.msra.mxu0 %v4617
        %4765 = vmatmul.bf16.gmra.mxu0 %v4359
        %v4766 = vpop.f32.mrf.mxu0
        %v4767 = vadd.f32 0.0, %v4766
        %v4768 = vpop.f32.mrf.mxu0
        %4769 = vdwg.mxu0
        %4770 = vmatpush.bf16.msra.mxu0 %v4674
        %4771 = vmatpush.bf16.msra.mxu0 %v4666
        %4772 = vmatpush.bf16.msra.mxu0 %v4658
        %4773 = vmatpush.bf16.msra.mxu0 %v4650
        %4774 = vmatpush.bf16.msra.mxu0 %v4642
        %4775 = vmatpush.bf16.msra.mxu0 %v4634
        %4776 = vmatpush.bf16.msra.mxu0 %v4626
        %4777 = vmatpush.bf16.msra.mxu0 %v4618
        %4778 = vmatmul.bf16.gmra.mxu0 %v4359
        %v4779 = vpop.f32.mrf.mxu0
        %v4780 = vadd.f32 0.0, %v4779
        %v4781 = vpop.f32.mrf.mxu0
        %4782 = vdwg.mxu0
        %4783 = vmatpush.bf16.msra.mxu0 %v4675
        %4784 = vmatpush.bf16.msra.mxu0 %v4667
        %4785 = vmatpush.bf16.msra.mxu0 %v4659
        %4786 = vmatpush.bf16.msra.mxu0 %v4651
        %4787 = vmatpush.bf16.msra.mxu0 %v4643
        %4788 = vmatpush.bf16.msra.mxu0 %v4635
        %4789 = vmatpush.bf16.msra.mxu0 %v4627
        %4790 = vmatpush.bf16.msra.mxu0 %v4619
        %4791 = vmatmul.bf16.gmra.mxu0 %v4359
        %v4792 = vpop.f32.mrf.mxu0
        %v4793 = vadd.f32 0.0, %v4792
        %v4794 = vpop.f32.mrf.mxu0
        %4795 = vdwg.mxu0
        %4796 = vmatpush.bf16.msra.mxu0 %v4676
        %4797 = vmatpush.bf16.msra.mxu0 %v4668
        %4798 = vmatpush.bf16.msra.mxu0 %v4660
        %4799 = vmatpush.bf16.msra.mxu0 %v4652
        %4800 = vmatpush.bf16.msra.mxu0 %v4644
        %4801 = vmatpush.bf16.msra.mxu0 %v4636
        %4802 = vmatpush.bf16.msra.mxu0 %v4628
        %4803 = vmatpush.bf16.msra.mxu0 %v4620
        %4804 = vmatmul.bf16.gmra.mxu0 %v4359
        %v4805 = vpop.f32.mrf.mxu0
        %v4806 = vadd.f32 0.0, %v4805
        %v4807 = vpop.f32.mrf.mxu0
        %4808 = vdwg.mxu0
        %4809 = vmatpush.bf16.msra.mxu0 %v4677
        %4810 = vmatpush.bf16.msra.mxu0 %v4669
        %4811 = vmatpush.bf16.msra.mxu0 %v4661
        %4812 = vmatpush.bf16.msra.mxu0 %v4653
        %4813 = vmatpush.bf16.msra.mxu0 %v4645
        %4814 = vmatpush.bf16.msra.mxu0 %v4637
        %4815 = vmatpush.bf16.msra.mxu0 %v4629
        %4816 = vmatpush.bf16.msra.mxu0 %v4621
        %4817 = vmatmul.bf16.gmra.mxu0 %v4359
        %v4818 = vpop.f32.mrf.mxu0
        %v4819 = vadd.f32 0.0, %v4818
        %v4820 = vpop.f32.mrf.mxu0
        %4821 = vdwg.mxu0
        %4822 = vmatpush.bf16.msra.mxu0 %v4678
        %4823 = vmatpush.bf16.msra.mxu0 %v4670
        %4824 = vmatpush.bf16.msra.mxu0 %v4662
        %4825 = vmatpush.bf16.msra.mxu0 %v4654
        %4826 = vmatpush.bf16.msra.mxu0 %v4646
        %4827 = vmatpush.bf16.msra.mxu0 %v4638
        %4828 = vmatpush.bf16.msra.mxu0 %v4630
        %4829 = vmatpush.bf16.msra.mxu0 %v4622
        %4830 = vmatmul.bf16.gmra.mxu0 %v4359
        %v4831 = vpop.f32.mrf.mxu0
        %v4832 = vadd.f32 0.0, %v4831
        %v4833 = vpop.f32.mrf.mxu0
        %4834 = vdwg.mxu0
        %4835 = vmatpush.bf16.msra.mxu0 %v4679
        %4836 = vmatpush.bf16.msra.mxu0 %v4671
        %4837 = vmatpush.bf16.msra.mxu0 %v4663
        %4838 = vmatpush.bf16.msra.mxu0 %v4655
        %4839 = vmatpush.bf16.msra.mxu0 %v4647
        %4840 = vmatpush.bf16.msra.mxu0 %v4639
        %4841 = vmatpush.bf16.msra.mxu0 %v4631
        %4842 = vmatpush.bf16.msra.mxu0 %v4623
        %4843 = vmatmul.bf16.gmra.mxu0 %v4359
        %v4844 = vpop.f32.mrf.mxu0
        %v4845 = vadd.f32 0.0, %v4844
        %v4846 = vpop.f32.mrf.mxu0
        %4847 = vdwg.mxu0
        %v4848 = vadd.f32 %v4326, %v4754
        %v4849 = vadd.f32 %v4327, %v4767
        %v4850 = vadd.f32 %v4328, %v4780
        %v4851 = vadd.f32 %v4329, %v4793
        %v4852 = vadd.f32 %v4330, %v4806
        %v4853 = vadd.f32 %v4331, %v4819
        %v4854 = vadd.f32 %v4332, %v4832
        %v4855 = vadd.f32 %v4333, %v4845
        %v4856 = vxor.u32 %v4848, 2147483648
        %v4857 = vxor.u32 %v4849, 2147483648
        %v4858 = vmul.f32 %v4856, 1.442695
        %v4859 = vpow.pop %v4858
        %v4860 = vmul.f32 %v4857, 1.442695
        %v4861 = vpow.pop %v4860
        %v4862 = vadd.f32 %v4859, 1.0
        %v4863 = vadd.f32 %v4861, 1.0
        %v4864 = vrcp.pop %v4862
        %v4865 = vmul.f32 %v4862, %v4864
        %v4866 = vsub.f32 1.0, %v4865
        %v4867 = vmul.f32 %v4864, %v4866
        %v4868 = vadd.f32 %v4864, %v4867
        %vm4869 = vweird.f32 %v4862
        %vm4870 = vweird.f32 %v4864
        %vm4871 = vmor %vm4869, %vm4870
        %v4872 = vsel %vm4871, %v4864, %v4868
        %v4873 = vand.u32 2147483647, %v4862
        %vm4874 = vcmp.eq.f32.partialorder %v4873, 8.507059e+37
        %v4875 = vand.u32 %v4862, 2147483648
        %v4876 = vor.u32 1.1754944e-38, %v4875
        %v4877 = vsel %vm4874, %v4876, %v4872
        %v4878 = vmul.f32 1.0, %v4877
        %v4879 = vrcp.pop %v4863
        %v4880 = vmul.f32 %v4863, %v4879
        %v4881 = vsub.f32 1.0, %v4880
        %v4882 = vmul.f32 %v4879, %v4881
        %v4883 = vadd.f32 %v4879, %v4882
        %vm4884 = vweird.f32 %v4863
        %vm4885 = vweird.f32 %v4879
        %vm4886 = vmor %vm4884, %vm4885
        %v4887 = vsel %vm4886, %v4879, %v4883
        %v4888 = vand.u32 2147483647, %v4863
        %vm4889 = vcmp.eq.f32.partialorder %v4888, 8.507059e+37
        %v4890 = vand.u32 %v4863, 2147483648
        %v4891 = vor.u32 1.1754944e-38, %v4890
        %v4892 = vsel %vm4889, %v4891, %v4887
        %v4893 = vmul.f32 1.0, %v4892
        %v4894 = vxor.u32 %v4850, 2147483648
        %v4895 = vxor.u32 %v4851, 2147483648
        %v4896 = vmul.f32 %v4894, 1.442695
        %v4897 = vpow.pop %v4896
        %v4898 = vmul.f32 %v4895, 1.442695
        %v4899 = vpow.pop %v4898
        %v4900 = vadd.f32 %v4897, 1.0
        %v4901 = vadd.f32 %v4899, 1.0
        %v4902 = vrcp.pop %v4900
        %v4903 = vmul.f32 %v4900, %v4902
        %v4904 = vsub.f32 1.0, %v4903
        %v4905 = vmul.f32 %v4902, %v4904
        %v4906 = vadd.f32 %v4902, %v4905
        %vm4907 = vweird.f32 %v4900
        %vm4908 = vweird.f32 %v4902
        %vm4909 = vmor %vm4907, %vm4908
        %v4910 = vsel %vm4909, %v4902, %v4906
        %v4911 = vand.u32 2147483647, %v4900
        %vm4912 = vcmp.eq.f32.partialorder %v4911, 8.507059e+37
        %v4913 = vand.u32 %v4900, 2147483648
        %v4914 = vor.u32 1.1754944e-38, %v4913
        %v4915 = vsel %vm4912, %v4914, %v4910
        %v4916 = vmul.f32 1.0, %v4915
        %v4917 = vrcp.pop %v4901
        %v4918 = vmul.f32 %v4901, %v4917
        %v4919 = vsub.f32 1.0, %v4918
        %v4920 = vmul.f32 %v4917, %v4919
        %v4921 = vadd.f32 %v4917, %v4920
        %vm4922 = vweird.f32 %v4901
        %vm4923 = vweird.f32 %v4917
        %vm4924 = vmor %vm4922, %vm4923
        %v4925 = vsel %vm4924, %v4917, %v4921
        %v4926 = vand.u32 2147483647, %v4901
        %vm4927 = vcmp.eq.f32.partialorder %v4926, 8.507059e+37
        %v4928 = vand.u32 %v4901, 2147483648
        %v4929 = vor.u32 1.1754944e-38, %v4928
        %v4930 = vsel %vm4927, %v4929, %v4925
        %v4931 = vmul.f32 1.0, %v4930
        %v4932 = vtanh.pop %v4852
        %v4933 = vtanh.pop %v4853
        %v4934 = vxor.u32 %v4854, 2147483648
        %v4935 = vxor.u32 %v4855, 2147483648
        %v4936 = vmul.f32 %v4934, 1.442695
        %v4937 = vpow.pop %v4936
        %v4938 = vmul.f32 %v4935, 1.442695
        %v4939 = vpow.pop %v4938
        %v4940 = vadd.f32 %v4937, 1.0
        %v4941 = vadd.f32 %v4939, 1.0
        %v4942 = vrcp.pop %v4940
        %v4943 = vmul.f32 %v4940, %v4942
        %v4944 = vsub.f32 1.0, %v4943
        %v4945 = vmul.f32 %v4942, %v4944
        %v4946 = vadd.f32 %v4942, %v4945
        %vm4947 = vweird.f32 %v4940
        %vm4948 = vweird.f32 %v4942
        %vm4949 = vmor %vm4947, %vm4948
        %v4950 = vsel %vm4949, %v4942, %v4946
        %v4951 = vand.u32 2147483647, %v4940
        %vm4952 = vcmp.eq.f32.partialorder %v4951, 8.507059e+37
        %v4953 = vand.u32 %v4940, 2147483648
        %v4954 = vor.u32 1.1754944e-38, %v4953
        %v4955 = vsel %vm4952, %v4954, %v4950
        %v4956 = vmul.f32 1.0, %v4955
        %v4957 = vrcp.pop %v4941
        %v4958 = vmul.f32 %v4941, %v4957
        %v4959 = vsub.f32 1.0, %v4958
        %v4960 = vmul.f32 %v4957, %v4959
        %v4961 = vadd.f32 %v4957, %v4960
        %vm4962 = vweird.f32 %v4941
        %vm4963 = vweird.f32 %v4957
        %vm4964 = vmor %vm4962, %vm4963
        %v4965 = vsel %vm4964, %v4957, %v4961
        %v4966 = vand.u32 2147483647, %v4941
        %vm4967 = vcmp.eq.f32.partialorder %v4966, 8.507059e+37
        %v4968 = vand.u32 %v4941, 2147483648
        %v4969 = vor.u32 1.1754944e-38, %v4968
        %v4970 = vsel %vm4967, %v4969, %v4965
        %v4971 = vmul.f32 1.0, %v4970
        %v4972 = vmul.f32 %v4916, %v883
        %v4973 = vmul.f32 %v4931, %v884
        %v4974 = vmul.f32 %v4878, %v4932
        %v4975 = vmul.f32 %v4893, %v4933
        %v4976 = vadd.f32 %v4972, %v4974
        %v4977 = vadd.f32 %v4973, %v4975
        %v4978 = vtanh.pop %v4976
        %v4979 = vtanh.pop %v4977
        %v4980 = vmul.f32 %v4956, %v4978
        %v4981 = vmul.f32 %v4971, %v4979
        %4982 = vst [vmem:[%s691] sm:$0xff] %v4980
        %4983 = vst [vmem:[%s691 + $0x8] sm:$0xff] %v4981
        %4984 = vst [vmem:[%s698] sm:$0xff] %v4976
        %4985 = vst [vmem:[%s698 + $0x8] sm:$0xff] %v4977
        %s4986 = sand.u32 %s350, 1
        %s4987 = scalar_lea.sflag [#allocation9], %s4986
        %s4988 = sand.u32 %s350, 1
        %s4989 = smul.addr %s4988, 16
        %s4990 = scalar_lea.vmem [#allocation21], %s4989
        %s4991 = sand.u32 %s54, 1
        %s4992 = scalar_lea.sflag [#allocation23], %s4991
        %s4993 = sand.u32 %s376, 1
        %s4994 = smul.addr %s4993, 16
        %s4995 = scalar_lea.vmem [#allocation22], %s4994
        %s4996 = sand.u32 %s54, 1
        %s4997 = scalar_lea.sflag [#allocation23], %s4996
        %s4998 = sand.u32 %s402, 1
        %s4999 = smul.addr %s4998, 8
        %s5000 = scalar_lea.vmem [#allocation24], %s4999
        // Predicated region
        $region137: #{tpu_custom_call.1} parent=71 // pred_check
          %p5001 = pneg %p360
        $region138: #{tpu_custom_call.1} parent=71 // pred_check_branch
          %5003 = sbr.rel (%p5001) target = $region140
        $region139: #{tpu_custom_call.1} parent=71 // pred_region
          %5005 = vsyncadd %s4987, 0
          %s5006 = smul.addr %s54, 2
          %s5007 = smul.addr %s5006, 8
          %s5008 = scalar_lea.hbm %s15, %s5007
          %s5010 = sshll.u32 %s4990, 4
          %s5011 = int_to_ptr.vmem [resolvable:$true] %s5010
          %s5012 = sshll.u32 %s5008, 4
          %s5013 = int_to_ptr.hbm [resolvable:$true] %s5012
          %5015 = dma.vmem_to_hbm [thread:$0]  %s5011, 256, %s5013, %s4987
        $region140: #{tpu_custom_call.1} parent=71 // pred_fallthru
          _
        // Predicated region
        $region141: #{tpu_custom_call.1} parent=71 // pred_check
          %p5016 = pneg %p386
        $region142: #{tpu_custom_call.1} parent=71 // pred_check_branch
          %5018 = sbr.rel (%p5016) target = $region144
        $region143: #{tpu_custom_call.1} parent=71 // pred_region
          %5020 = vsyncadd %s4992, 0
          %s5021 = smul.addr %s54, 2
          %s5022 = smul.addr %s5021, 8
          %s5023 = scalar_lea.hbm %s16, %s5022
          %s5025 = sshll.u32 %s4995, 4
          %s5026 = int_to_ptr.vmem [resolvable:$true] %s5025
          %s5027 = sshll.u32 %s5023, 4
          %s5028 = int_to_ptr.hbm [resolvable:$true] %s5027
          %5030 = dma.vmem_to_hbm [thread:$0]  %s5026, 256, %s5028, %s4992
        $region144: #{tpu_custom_call.1} parent=71 // pred_fallthru
          _
        // Predicated region
        $region145: #{tpu_custom_call.1} parent=71 // pred_check
          %p5031 = pneg %p412
        $region146: #{tpu_custom_call.1} parent=71 // pred_check_branch
          %5033 = sbr.rel (%p5031) target = $region148
        $region147: #{tpu_custom_call.1} parent=71 // pred_region
          %5035 = vsyncadd %s4997, 0
          %s5036 = smul.addr %s54, 8
          %s5037 = scalar_lea.hbm %s17, %s5036
          %s5039 = sshll.u32 %s5000, 4
          %s5040 = int_to_ptr.vmem [resolvable:$true] %s5039
          %s5041 = sshll.u32 %s5037, 4
          %s5042 = int_to_ptr.hbm [resolvable:$true] %s5041
          %5044 = dma.vmem_to_hbm [thread:$0]  %s5040, 128, %s5042, %s4997
        $region148: #{tpu_custom_call.1} parent=71 // pred_fallthru
          _
      $region72: #{tpu_custom_call.1} parent=5 // pred_fallthru
        _
      %p5045 = scmp.le.s32.totalorder 2, %s49
      // Predicated region
      $region149: #{tpu_custom_call.1} parent=5 // pred_check
        %p5046 = pneg %p5045
      $region150: #{tpu_custom_call.1} parent=5 // pred_check_branch
        %5048 = sbr.rel (%p5046) target = $region152
      $region151: #{tpu_custom_call.1} parent=5 // pred_region
        %s5049 = ssub.s32 %s49, 2
        // Predicated region
        $region153: #{tpu_custom_call.1} parent=151 // pred_check
          %p5050 = pneg %p366
        $region154: #{tpu_custom_call.1} parent=151 // pred_check_branch
          %5052 = sbr.rel (%p5050) target = $region156
        $region155: #{tpu_custom_call.1} parent=151 // pred_region
          %s5053 = sand.u32 %s351, 1
          %s5054 = scalar_lea.sflag [#allocation9], %s5053
          %s5055 = sand.u32 %s351, 1
          %s5056 = smul.addr %s5055, 16
          %s5057 = scalar_lea.vmem [#allocation21], %s5056
          %5059 = dma.done %s5054, 256
        $region156: #{tpu_custom_call.1} parent=151 // pred_fallthru
          _
        // Predicated region
        $region157: #{tpu_custom_call.1} parent=151 // pred_check
          %p5060 = pneg %p392
        $region158: #{tpu_custom_call.1} parent=151 // pred_check_branch
          %5062 = sbr.rel (%p5060) target = $region160
        $region159: #{tpu_custom_call.1} parent=151 // pred_region
          %s5063 = sand.u32 %s55, 1
          %s5064 = scalar_lea.sflag [#allocation23], %s5063
          %s5065 = sand.u32 %s377, 1
          %s5066 = smul.addr %s5065, 16
          %s5067 = scalar_lea.vmem [#allocation22], %s5066
          %5069 = dma.done %s5064, 256
        $region160: #{tpu_custom_call.1} parent=151 // pred_fallthru
          _
        // Predicated region
        $region161: #{tpu_custom_call.1} parent=151 // pred_check
          %p5070 = pneg %p418
        $region162: #{tpu_custom_call.1} parent=151 // pred_check_branch
          %5072 = sbr.rel (%p5070) target = $region164
        $region163: #{tpu_custom_call.1} parent=151 // pred_region
          %s5073 = sand.u32 %s55, 1
          %s5074 = scalar_lea.sflag [#allocation23], %s5073
          %s5075 = sand.u32 %s403, 1
          %s5076 = smul.addr %s5075, 8
          %s5077 = scalar_lea.vmem [#allocation24], %s5076
          %5079 = dma.done %s5074, 128
        $region164: #{tpu_custom_call.1} parent=151 // pred_fallthru
          _
      $region152: #{tpu_custom_call.1} parent=5 // pred_fallthru
        _
    $region6: #{tpu_custom_call.1} parent=1 // loop_footer
      %s53 = sadd.s32 1, %s49
    $region7: #{tpu_custom_call.1} parent=1 // loop_footer_branch
      %48 = sbr.rel target = $region3
    $region8: #{tpu_custom_call.1} parent=1 // loop_exit
      _
    %5080 = vsyncpa [#allocation8], 1
    %s5081 = scalar_lea.sflag [#allocation8], 1
    %5082 = vsyncpa %s5081, 1
    %5083 = vsyncpa [#allocation11], 1
    %s5084 = scalar_lea.sflag [#allocation11], 1
    %5085 = vsyncpa %s5084, 1
    %5086 = vsyncpa [#allocation14], 1
    %5087 = vsyncpa [#allocation17], 1
    %5088 = vsyncpa [#allocation20], 1
    %5089 = vsyncpa [#allocation9], 1
    %s5090 = scalar_lea.sflag [#allocation9], 1
    %5091 = vsyncpa %s5090, 1
    %5092 = vsyncpa [#allocation23], 1
    %s5093 = scalar_lea.sflag [#allocation23], 1
    %5094 = vsyncpa %s5093, 1
  %5095 = vsyncmov [#allocation3]
  %s5096 = vpop.sfrf %5095
  %p5097 = scmp.eq.s32.totalorder %s5096, 0
  %p5098 = pneg %p5097
  %5100 = shalt.err (%p5098)
  %s5101 = scalar_lea.sflag [#allocation3], 1
  %5102 = vsyncmov %s5101
  %s5103 = vpop.sfrf %5102
  %p5104 = scmp.eq.s32.totalorder %s5103, 0
  %p5105 = pneg %p5104
  %5107 = shalt.err (%p5105)
  %s5108 = scalar_lea.sflag [#allocation3], 2
  %5109 = vsyncmov %s5108
  %s5110 = vpop.sfrf %5109
  %p5111 = scmp.eq.s32.totalorder %s5110, 0
  %p5112 = pneg %p5111
  %5114 = shalt.err (%p5112)
  %s5115 = scalar_lea.sflag [#allocation3], 3
  %5116 = vsyncmov %s5115
  %s5117 = vpop.sfrf %5116
  %p5118 = scmp.eq.s32.totalorder %s5117, 0
  %p5119 = pneg %p5118
  %5121 = shalt.err (%p5119)
  %s5122 = scalar_lea.sflag [#allocation3], 4
  %5123 = vsyncmov %s5122
  %s5124 = vpop.sfrf %5123
  %p5125 = scmp.eq.s32.totalorder %s5124, 0
  %p5126 = pneg %p5125
  %5128 = shalt.err (%p5126)
  %s5129 = scalar_lea.sflag [#allocation3], 5
  %5130 = vsyncmov %s5129
  %s5131 = vpop.sfrf %5130
  %p5132 = scmp.eq.s32.totalorder %s5131, 0
  %p5133 = pneg %p5132
  %5135 = shalt.err (%p5133)
  %s5136 = scalar_lea.sflag [#allocation3], 6
  %5137 = vsyncmov %s5136
  %s5138 = vpop.sfrf %5137
  %p5139 = scmp.eq.s32.totalorder %s5138, 0
  %p5140 = pneg %p5139
  %5142 = shalt.err (%p5140)
  %s5143 = scalar_lea.sflag [#allocation3], 7
  %5144 = vsyncmov %s5143
  %s5145 = vpop.sfrf %5144
  %p5146 = scmp.eq.s32.totalorder %s5145, 0
  %p5147 = pneg %p5146
  %5149 = shalt.err (%p5147)

</llo_original>
